<compile_context>
chip_gen: v5e
topology: v5e:2x2
jax: 0.10.0
libtpu: 0.0.40
codegen_flags: <defaults>
</compile_context>

<pallas_src>
import functools
import math

import jax
import jax.numpy as jnp
from jax import lax
from jax.experimental import pallas as pl
from jax.experimental.pallas import tpu as pltpu

# ----------------------------------------------------------------------------
# Model constants (fixed by the PyTorch module).
# ----------------------------------------------------------------------------
DM = 16            # d_model
N_LAYERS = 2       # n_layers
L_SEQ = N_LAYERS   # sequence length after .view(-1, n_layers, d_model)
DI = 32            # d_inner
DS = 16            # d_state
DTR = 1            # dt_rank
KCONV = 4          # mamba depthwise conv kernel size
DN = DI * DS       # flattened scan state width (512)

CIN = 40           # network input channels
C1 = 20            # conv1 / conv2 / deconv1 channels
COUT = 40          # network output channels
CK = 3             # (1,3) conv kernel width
WIN = 104          # input width: 104 -> 52 -> 26 -> 13 (matches Linear(260, .))
WP = 13            # width after maxpool
WOUT = 101         # final output width
OWPAD = 384        # 8 * COUT = 320 output lanes, padded to 3 * 128


def _round_up(n, m):
    return (n + m - 1) // m * m


# ----------------------------------------------------------------------------
# Deterministic parameters in the original torch layouts.
# ----------------------------------------------------------------------------
def init_params(key):
    ks = jax.random.split(key, 32)
    ki = iter(ks)

    def uni(shape, bound):
        return jax.random.uniform(next(ki), shape, jnp.float32, -bound, bound)

    p = {}
    b = 1.0 / math.sqrt(CIN * CK)
    p['c1_w'] = uni((C1, CIN, 1, CK), b); p['c1_b'] = uni((C1,), b)
    b = 1.0 / math.sqrt(C1 * CK)
    p['c2_w'] = uni((C1, C1, 1, CK), b); p['c2_b'] = uni((C1,), b)
    b = 1.0 / math.sqrt(260)
    p['fc_in_w'] = uni((2 * DM, 260), b); p['fc_in_b'] = uni((2 * DM,), b)

    layers = []
    for _ in range(N_LAYERS):
        lp = {}
        lp['rms_w'] = jnp.ones((DM,), jnp.float32)
        lp['in_proj_w'] = uni((2 * DI, DM), 1.0 / math.sqrt(DM))
        lp['conv_w'] = uni((DI, 1, KCONV), 1.0 / math.sqrt(KCONV))
        lp['conv_b'] = uni((DI,), 1.0 / math.sqrt(KCONV))
        lp['x_proj_w'] = uni((DTR + 2 * DS, DI), 1.0 / math.sqrt(DI))
        lp['dt_proj_w'] = uni((DI, DTR), DTR ** -0.5)
        u = jax.random.uniform(next(ki), (DI,), jnp.float32)
        dt = jnp.exp(u * (math.log(0.1) - math.log(0.001)) + math.log(0.001))
        dt = jnp.maximum(dt, 1e-4)
        lp['dt_proj_b'] = dt + jnp.log(-jnp.expm1(-dt))            # inv-softplus init
        lp['A_log'] = jnp.log(jnp.tile(jnp.arange(1, DS + 1, dtype=jnp.float32), (DI, 1)))
        lp['D'] = jnp.ones((DI,), jnp.float32)
        lp['out_proj_w'] = uni((DM, DI), 1.0 / math.sqrt(DI))
        layers.append(lp)
    p['layers'] = layers

    b = 1.0 / math.sqrt(2 * DM)
    p['fc_out_w'] = uni((260, 2 * DM), b); p['fc_out_b'] = uni((260,), b)
    b = 1.0 / math.sqrt(C1 * CK)
    p['d1_w'] = uni((C1, C1, 1, CK), b); p['d1_b'] = uni((C1,), b)
    p['d2_w'] = uni((C1, COUT, 1, CK), b); p['d2_b'] = uni((COUT,), b)
    return p


# ----------------------------------------------------------------------------
# Parameter slab packing: everything lands in two lane-padded slabs
# (one 128-lane, one 512-lane) -> 3 kernel input DMAs total.
# ----------------------------------------------------------------------------
class _Slab:
    def __init__(self, width):
        self.width = width
        self.parts = []
        self.offs = {}
        self.n = 0

    def add(self, name, arr):
        arr = jnp.asarray(arr, jnp.float32)
        assert arr.ndim == 2 and arr.shape[1] <= self.width, (name, arr.shape)
        self.offs[name] = (self.n, int(arr.shape[0]), int(arr.shape[1]))
        if arr.shape[1] < self.width:
            arr = jnp.pad(arr, ((0, 0), (0, self.width - arr.shape[1])))
        self.parts.append(arr)
        self.n += int(arr.shape[0])

    def build(self):
        mat = jnp.concatenate(self.parts, axis=0)
        pad = (-mat.shape[0]) % 8
        if pad:
            mat = jnp.pad(mat, ((0, pad), (0, 0)))
        return mat, self.offs


def pack_params(p, Bp):
    """Torch-layout params -> kernel-layout slabs (Bp = per-program batch)."""
    Rp = WP * Bp
    RPAD = _round_up(Rp, 8)
    s128 = _Slab(128)
    s512 = _Slab(512)
    eye20 = jnp.eye(C1, dtype=jnp.float32)

    # ---- ConvInputModel ----
    w1 = jnp.transpose(p['c1_w'][:, :, 0, :], (2, 1, 0)).reshape(CK * CIN, C1)   # rows k*40+cin
    s128.add('w1', jnp.pad(w1, ((0, 128 - CK * CIN), (0, 0))))                   # pad K 120->128
    s128.add('b1', p['c1_b'].reshape(1, C1))
    w2 = jnp.transpose(p['c2_w'][:, :, 0, :], (2, 1, 0)).reshape(CK * C1, C1)    # rows k*20+cin
    for k in range(CK):
        s128.add(f'w2k{k}', w2[k * C1:(k + 1) * C1, :])
    s128.add('b2', p['c2_b'].reshape(1, C1))
    # fc_in: reorder the 260 input features from torch (c*13+m) to ours (m*20+c)
    s128.add('fc_in_w',
             jnp.transpose(p['fc_in_w'].reshape(2 * DM, C1, WP), (2, 1, 0)).reshape(WP * C1, 2 * DM))
    s128.add('fc_in_b', p['fc_in_b'].reshape(1, 2 * DM))

    # ---- Mamba layers (pre-split; dt_rank==1 folded into one (32,32) W_delta) ----
    for l, lp in enumerate(p['layers']):
        s128.add(f'rms_w_{l}', lp['rms_w'].reshape(1, DM))
        wi = lp['in_proj_w']
        s128.add(f'w_x_{l}', wi[:DI, :].T)
        s128.add(f'w_z_{l}', wi[DI:, :].T)
        s128.add(f'conv_w_{l}', lp['conv_w'][:, 0, :].T)               # (K, DI)
        s128.add(f'conv_b_{l}', lp['conv_b'].reshape(1, DI))
        wxp = lp['x_proj_w']
        s128.add(f'w_delta_{l}', jnp.dot(wxp[0:1, :].T, lp['dt_proj_w'][:, 0:1].T))
        s128.add(f'dt_b_{l}', lp['dt_proj_b'].reshape(1, DI))
        s128.add(f'D_{l}', lp['D'].reshape(1, DI))
        s128.add(f'w_B_{l}', wxp[1:1 + DS, :].T)
        s128.add(f'w_C_{l}', wxp[1 + DS:1 + 2 * DS, :].T)
        s128.add(f'w_out_{l}', lp['out_proj_w'].T)
        s512.add(f'A_{l}', (-jnp.exp(lp['A_log'])).reshape(1, DN))

    # expansion constants for the lane-dense (Bp, DI*DS) scan state
    s512.add('E', jnp.repeat(jnp.eye(DI, dtype=jnp.float32), DS, axis=1))   # (32, 512)
    s512.add('T', jnp.tile(jnp.eye(DS, dtype=jnp.float32), (1, DI)))        # (16, 512)
    s128.add('ET', jnp.repeat(jnp.eye(DI, dtype=jnp.float32), DS, axis=0))  # (512, 32)

    # ---- OutputReshapeModel ----
    s512.add('fc_out_w',
             jnp.transpose(p['fc_out_w'].reshape(C1, WP, 2 * DM), (2, 1, 0)).reshape(2 * DM, WP * C1))
    s512.add('fc_out_b', p['fc_out_b'].reshape(C1, WP).T.reshape(1, WP * C1))

    d1w = p['d1_w'][:, :, 0, :]                                  # (cin, cout, k)
    s128.add('wd1a', jnp.concatenate([d1w[:, :, 1], d1w[:, :, 2]], axis=1))      # (20, 40)
    s128.add('wd1b', jnp.concatenate([jnp.zeros((C1, C1), jnp.float32), d1w[:, :, 0]], axis=1))
    s128.add('bd1', jnp.tile(p['d1_b'].reshape(1, C1), (1, 2)))                  # (1, 40)

    d2w = p['d2_w'][:, :, 0, :]                                  # (cin, cout, k)
    w2a = jnp.zeros((2 * C1, OWPAD), jnp.float32)
    w2b = jnp.zeros((2 * C1, OWPAD), jnp.float32)
    w2a = w2a.at[0:C1, 0 * COUT:1 * COUT].set(d2w[:, :, 1])          # band 0: z_ev   @ W2k1
    w2a = w2a.at[0:C1, 1 * COUT:2 * COUT].set(d2w[:, :, 2])          # band 1: z_ev   @ W2k2
    w2a = w2a.at[C1:2 * C1, 3 * COUT:4 * COUT].set(d2w[:, :, 0])     # band 3: z_od   @ W2k0
    w2a = w2a.at[C1:2 * C1, 4 * COUT:5 * COUT].set(d2w[:, :, 1])     # band 4: z_od   @ W2k1
    w2a = w2a.at[C1:2 * C1, 5 * COUT:6 * COUT].set(d2w[:, :, 2])     # band 5: z_od   @ W2k2
    w2b = w2b.at[0:C1, 7 * COUT:8 * COUT].set(d2w[:, :, 0])          # band 7: z_ev[m+1] @ W2k0
    s512.add('wd2a', w2a)
    s512.add('wd2b', w2b)
    bd2 = jnp.zeros((1, OWPAD), jnp.float32).at[0, :8 * COUT].set(jnp.tile(p['d2_b'], 8))
    s512.add('bd2', bd2)

    # ---- Bp-dependent layout constants (rows within a program = m*Bp + b) ----
    rows = jnp.arange(RPAD)
    valid = rows < Rp
    row_m = rows // Bp
    row_b = rows % Bp
    lane_m = jnp.arange(WP * C1) // C1
    f32m = lambda a: a.astype(jnp.float32)
    sh_prev = f32m((rows[:, None] == rows[None, :] + Bp) & valid[:, None] & valid[None, :])
    sh_next = f32m((rows[None, :] == rows[:, None] + Bp) & valid[:, None] & valid[None, :])
    msk = f32m((row_m[:, None] == lane_m[None, :]) & valid[:, None])
    rep = f32m((row_b[:, None] == jnp.arange(Bp)[None, :]) & valid[:, None])
    s128.add('sh_prev', sh_prev)                    # (RPAD, RPAD)
    s128.add('sh_next', sh_next)
    s128.add('rep', rep)                            # (RPAD, Bp)
    s128.add('rep_t', rep.T)                        # (Bp, RPAD)
    s128.add('collapse', jnp.tile(eye20, (WP, 1)))  # (260, 20)
    s512.add('msk', msk)                            # (RPAD, 260)
    s512.add('expand', jnp.tile(eye20, (1, WP)))    # (20, 260)

    slab128, o128 = s128.build()
    slab512, o512 = s512.build()
    return slab128, o128, slab512, o512


# ----------------------------------------------------------------------------
# Wrapper-side im2col for conv1.  Rows per program block: p*RPAD + (m*Bp + b),
# lanes: k*CIN + cin (120 valid + 8 zero pad).
# ----------------------------------------------------------------------------
def _build_patches(x_nchw, Bp, nprog, Rp, RPAD):
    xw = x_nchw[:, :, 0, :]                                   # (B, CIN, 104)
    xp = jnp.pad(xw, ((0, 0), (0, 0), (1, 1)))                # (B, CIN, 106)
    j = jnp.arange(WP); ph = jnp.arange(4); k = jnp.arange(CK)
    idx = 8 * j[None, :, None] + 2 * ph[:, None, None] + k[None, None, :]   # (4, 13, 3)
    g = xp[:, :, idx]                                         # (B, CIN, 4, 13, 3)
    g = jnp.transpose(g, (2, 3, 0, 4, 1))                     # (4, 13, B, 3, CIN)
    g = g.reshape(4, WP, nprog, Bp, CK * CIN)
    g = jnp.transpose(g, (2, 0, 1, 3, 4)).reshape(nprog, 4, Rp, CK * CIN)
    g = jnp.pad(g, ((0, 0), (0, 0), (0, RPAD - Rp), (0, 128 - CK * CIN)))
    return g.reshape(nprog * 4 * RPAD, 128).astype(jnp.float32)


# ----------------------------------------------------------------------------
# The single fused Pallas kernel (runs once per batch shard).
# ----------------------------------------------------------------------------
def _fused_kernel(patches_ref, s128_ref, s512_ref, out_ref, *, Bp, o128, o512):
    f32 = jnp.float32
    Rp = WP * Bp
    RPAD = _round_up(Rp, 8)

    def dot(a, b):
        return jnp.dot(a, b, preferred_element_type=f32)

    def ld(ref, offs, name):
        o, r, c = offs[name]
        v = ref[pl.ds(o, r), :]
        return v if c == v.shape[1] else v[:, :c]

    ld128 = functools.partial(ld, s128_ref, o128)
    ld512 = functools.partial(ld, s512_ref, o512)

    def sigmoid(v):
        return 0.5 * (jnp.tanh(0.5 * v) + 1.0)        # one EUP tanh, exact sigmoid

    def silu(v):
        return v * sigmoid(v)

    def softplus(v):
        # dt pre-activations here are O(1), so log(1+exp) is accurate; matches
        # torch's threshold-20 softplus.
        return jnp.where(v > 20.0, v, jnp.log(1.0 + jnp.exp(jnp.minimum(v, 20.0))))

    def relu(v):
        return jnp.maximum(v, 0.0)

    # ---------------- ConvInputModel ----------------
    w1 = ld128('w1')                                   # (128, 20)
    b1 = ld128('b1')
    y1 = [relu(dot(patches_ref[pl.ds(p * RPAD, RPAD), :], w1) + b1) for p in range(4)]

    sh_prev = ld128('sh_prev')
    b2 = ld128('b2')
    y1_3p = dot(sh_prev, y1[3])                        # conv1 output at position 4m-1
    y2e = relu(dot(y1_3p, ld128('w2k0')) + dot(y1[0], ld128('w2k1'))
               + dot(y1[1], ld128('w2k2')) + b2)
    y2o = relu(dot(y1[1], ld128('w2k0')) + dot(y1[2], ld128('w2k1'))
               + dot(y1[3], ld128('w2k2')) + b2)
    pooled = jnp.maximum(y2e, y2o)                     # MaxPool2d((1,2)) -> (RPAD, 20)

    # fc_in: (RPAD,20) -> (Bp,260) relayout done with matmuls, then one K=260 push
    msk = ld512('msk')                                 # (RPAD, 260)
    pooled_wide = dot(ld128('rep_t'), msk * dot(pooled, ld512('expand')))     # (Bp, 260)
    feat = dot(pooled_wide, ld128('fc_in_w')) + ld128('fc_in_b')              # (Bp, 32)

    toks = [feat[:, 0:DM], feat[:, DM:2 * DM]]         # L_SEQ tokens of (Bp, 16)

    # ---------------- Mamba residual layers ----------------
    for l in range(N_LAYERS):
        rms_w = ld128(f'rms_w_{l}')
        w_x = ld128(f'w_x_{l}'); w_z = ld128(f'w_z_{l}')
        cw = ld128(f'conv_w_{l}'); cb = ld128(f'conv_b_{l}')
        w_dlt = ld128(f'w_delta_{l}'); dt_b = ld128(f'dt_b_{l}'); d_res = ld128(f'D_{l}')
        w_b = ld128(f'w_B_{l}'); w_c = ld128(f'w_C_{l}'); w_o = ld128(f'w_out_{l}')
        a_neg = ld512(f'A_{l}')                        # (1, 512) = -exp(A_log)
        e_exp = ld512('E'); t_exp = ld512('T'); e_t = ld128('ET')

        # RMSNorm + pre-split in_proj for both tokens
        xin, zg = [], []
        for t in range(L_SEQ):
            r = toks[t]
            nrm = r * lax.rsqrt(jnp.mean(r * r, axis=-1, keepdims=True) + 1e-5) * rms_w
            xin.append(dot(nrm, w_x))
            zg.append(dot(nrm, w_z))

        h = None
        new_toks = []
        for t in range(L_SEQ):
            # causal depthwise conv1d (kernel KCONV, padding KCONV-1, truncated to L)
            xc = xin[t] * cw[KCONV - 1:KCONV, :] + cb
            for j in range(1, min(t, KCONV - 1) + 1):
                xc = xc + xin[t - j] * cw[KCONV - 1 - j:KCONV - j, :]
            xc = silu(xc)

            dlt = softplus(dot(xc, w_dlt) + dt_b)      # (Bp, 32), dt_rank==1 folded
            bm = dot(xc, w_b)                          # (Bp, 16)
            cm = dot(xc, w_c)                          # (Bp, 16)

            # selective scan on the lane-dense (Bp, DI*DS) state
            bx = dot(dlt * xc, e_exp) * dot(bm, t_exp)
            if h is None:
                h = bx
            else:
                h = jnp.exp(dot(dlt, e_exp) * a_neg) * h + bx
            y = dot(h * dot(cm, t_exp), e_t)           # sum over d_state -> (Bp, 32)
            y = y + d_res * xc
            new_toks.append(toks[t] + dot(y * silu(zg[t]), w_o))   # residual
        toks = new_toks

    # ---------------- OutputReshapeModel ----------------
    wo = ld512('fc_out_w')                             # (32, 260), lanes m*20+c
    q = dot(toks[0], wo[0:DM, :]) + dot(toks[1], wo[DM:2 * DM, :]) + ld512('fc_out_b')
    # (Bp,260) -> (RPAD,20) relayout by matmul (no VMEM scratch round trip)
    d1in = dot(dot(ld128('rep'), q) * msk, ld128('collapse'))       # (RPAD, 20)

    # deconv1 (k=3, s=2, p=1, out_pad=1) -> lanes [z_ev | z_od] (RPAD, 40)
    sh_next = ld128('sh_next')
    d1n = dot(sh_next, d1in)                           # d1in at width m+1
    z_pair = relu(dot(d1in, ld128('wd1a')) + dot(d1n, ld128('wd1b')) + ld128('bd1'))
    z_next = dot(sh_next, z_pair)

    # deconv2 (k=3, s=4, p=1): 2 matmuls into the lane-dense 8-phase output tile
    out_ref[...] = relu(dot(z_pair, ld512('wd2a')) + dot(z_next, ld512('wd2b'))
                        + ld512('bd2'))


# ----------------------------------------------------------------------------
# Full forward pass (one pallas_call + pure-layout wrapper glue).
# ----------------------------------------------------------------------------
def mamba_forward(x_nchw, slab128, o128, slab512, o512, Bp):
    assert x_nchw.shape[1:] == (CIN, 1, WIN), x_nchw.shape
    B = x_nchw.shape[0]
    assert B % Bp == 0
    nprog = B // Bp
    Rp = WP * Bp
    RPAD = _round_up(Rp, 8)

    patches = _build_patches(x_nchw, Bp, nprog, Rp, RPAD)
    kernel = functools.partial(_fused_kernel, Bp=Bp, o128=o128, o512=o512)

    out = pl.pallas_call(
        kernel,
        grid=(nprog,),
        in_specs=[
            pl.BlockSpec((4 * RPAD, 128), lambda i: (i, 0)),      # per-program patches
            pl.BlockSpec(slab128.shape, lambda i: (0, 0)),        # shared weight slab
            pl.BlockSpec(slab512.shape, lambda i: (0, 0)),        # shared wide slab
        ],
        out_specs=pl.BlockSpec((RPAD, OWPAD), lambda i: (i, 0)),
        out_shape=jax.ShapeDtypeStruct((nprog * RPAD, OWPAD), jnp.float32),
        compiler_params=pltpu.CompilerParams(dimension_semantics=("parallel",)),
    )(patches, slab128, slab512)

    # out[i*RPAD + m*Bp + b, r*40 + c] holds output element (i*Bp+b, c, 0, 8*m + r)
    out = out.reshape(nprog, RPAD, OWPAD)[:, :Rp, :8 * COUT]
    out = out.reshape(nprog, WP, Bp, 8, COUT)
    out = jnp.transpose(out, (0, 2, 4, 1, 3)).reshape(B, COUT, WP * 8)
    return out[:, :, :WOUT][:, :, None, :]                         # (B, 40, 1, 101)


# ----------------------------------------------------------------------------
# Pure-JAX reference (mirrors the PyTorch module) for the semantic check.
# ----------------------------------------------------------------------------
def _conv_transpose_w(x, w, b, stride, padding, output_padding):
    Bn, _, W = x.shape
    Cout, K = w.shape[1], w.shape[2]
    Wout = (W - 1) * stride - 2 * padding + K + output_padding
    full = jnp.zeros((Bn, Cout, (W - 1) * stride + K), x.dtype)
    for k in range(K):
        contrib = jnp.einsum('biw,io->bow', x, w[:, :, k])
        full = full.at[:, :, k:k + (W - 1) * stride + 1:stride].add(contrib)
    return full[:, :, padding:padding + Wout] + b[None, :, None]


def _mamba_block_ref(x, lp):
    Bn, L, _ = x.shape
    xz = x @ lp['in_proj_w'].T
    xin, z = xz[..., :DI], xz[..., DI:]
    w = lp['conv_w'][:, 0, :]                                   # (DI, K)
    xpad = jnp.pad(xin, ((0, 0), (KCONV - 1, 0), (0, 0)))
    xc = jnp.stack([jnp.sum(xpad[:, t:t + KCONV, :] * w.T[None, :, :], axis=1)
                    for t in range(L)], axis=1) + lp['conv_b']
    xc = jax.nn.silu(xc)
    A = -jnp.exp(lp['A_log'])
    dBC = xc @ lp['x_proj_w'].T
    delta = jax.nn.softplus(dBC[..., :DTR] @ lp['dt_proj_w'].T + lp['dt_proj_b'])
    Bm = dBC[..., DTR:DTR + DS]
    Cm = dBC[..., DTR + DS:DTR + 2 * DS]
    dA = jnp.exp(delta[..., None] * A)
    BX = (delta[..., None] * Bm[:, :, None, :]) * xc[..., None]
    h = jnp.zeros((Bn, DI, DS), x.dtype)
    ys = []
    for t in range(L):
        h = dA[:, t] * h + BX[:, t]
        ys.append(jnp.einsum('bdn,bn->bd', h, Cm[:, t]))
    y = jnp.stack(ys, axis=1) + lp['D'] * xc
    return (y * jax.nn.silu(z)) @ lp['out_proj_w'].T


def reference_forward(x, p):
    relu = jax.nn.relu
    dn = ('NCHW', 'OIHW', 'NCHW')
    h = relu(lax.conv_general_dilated(x, p['c1_w'], (1, 2), ((0, 0), (1, 1)),
                                      dimension_numbers=dn) + p['c1_b'][None, :, None, None])
    h = relu(lax.conv_general_dilated(h, p['c2_w'], (1, 2), ((0, 0), (1, 1)),
                                      dimension_numbers=dn) + p['c2_b'][None, :, None, None])
    Bn = x.shape[0]
    h = h.reshape(Bn, C1, 1, WP, 2).max(axis=-1)
    feat = h.reshape(Bn, -1) @ p['fc_in_w'].T + p['fc_in_b']
    seq = feat.reshape(Bn, N_LAYERS, DM)
    for lp in p['layers']:
        nrm = seq * lax.rsqrt(jnp.mean(seq * seq, axis=-1, keepdims=True) + 1e-5) * lp['rms_w']
        seq = seq + _mamba_block_ref(nrm, lp)
    y = seq.reshape(Bn, N_LAYERS * DM) @ p['fc_out_w'].T + p['fc_out_b']
    y = y.reshape(Bn, C1, WP)
    y = relu(_conv_transpose_w(y, p['d1_w'][:, :, 0, :], p['d1_b'], 2, 1, 1))
    y = relu(_conv_transpose_w(y, p['d2_w'][:, :, 0, :], p['d2_b'], 4, 1, 0))
    return y[:, :, None, :]


if __name__ == "__main__":
    key = jax.random.PRNGKey(0)
    kp, kx = jax.random.split(key)
    params = init_params(kp)

    B = 2
    # Per-sample grid programs so a 2-TC chip (v7x) can run both in parallel;
    # on 1-TC chips (v5e/v6e) this is just a short sequential grid loop.
    nprog = 2 if B % 2 == 0 else 1
    Bp = B // nprog
    slab128, o128, slab512, o512 = pack_params(params, Bp)

    # W=104 is the smallest width consistent with the hard-coded Linear(260, .)
    x = jax.random.normal(kx, (B, CIN, 1, WIN), jnp.float32)

    fwd = jax.jit(functools.partial(mamba_forward, slab128=slab128, o128=o128,
                                    slab512=slab512, o512=o512, Bp=Bp))
    out = jax.block_until_ready(fwd(x))
    assert out.shape == (B, COUT, 1, WOUT), out.shape
    assert bool(jnp.all(jnp.isfinite(out)))

    # semantic check against the pure-JAX reference (accurate matmuls)
    with jax.default_matmul_precision("float32"):
        ref = reference_forward(x, params)
    nrmse = float(jnp.sqrt(jnp.mean((out - ref) ** 2) / (jnp.mean(ref * ref) + 1e-12)))
    assert nrmse < 3e-2, f"kernel/reference mismatch: nrmse={nrmse}"
    print("KERNEL_OK")
</pallas_src>

<mosaic_0001>
module attributes {stable_mosaic.version = 11 : i64} {
  func.func @_fused_kernel(%arg0: i32, %arg1: memref<64x128xf32, #tpu.memory_space<vmem>>, %arg2: memref<1656x128xf32, #tpu.memory_space<vmem>>, %arg3: memref<200x512xf32, #tpu.memory_space<vmem>>, %arg4: memref<16x384xf32, #tpu.memory_space<vmem>>) attributes {dimension_semantics = [#tpu.dimension_semantics<parallel>], iteration_bounds = array<i64: 2>, scalar_prefetch = 0 : i64, scratch_operands = 0 : i64, tpu.core_type = #tpu.core_type<tc>, window_params = [{transform_indices = @transform_0, window_bounds = array<i64: 64, 128>}, {pipeline_mode = #tpu.pipeline_mode<synchronous>, transform_indices = @transform_1, window_bounds = array<i64: 1656, 128>}, {pipeline_mode = #tpu.pipeline_mode<synchronous>, transform_indices = @transform_2, window_bounds = array<i64: 200, 512>}, {transform_indices = @transform_3, window_bounds = array<i64: 16, 384>}]} {
    %c0 = arith.constant 0 : index
    %c0_0 = arith.constant 0 : index
    %0 = vector.load %arg2[%c0, %c0_0] : memref<1656x128xf32, #tpu.memory_space<vmem>>, vector<128x128xf32>
    %1 = vector.extract_strided_slice %0 {offsets = [0, 0], sizes = [128, 20], strides = [1, 1]} : vector<128x128xf32> to vector<128x20xf32>
    %c128 = arith.constant 128 : index
    %c0_1 = arith.constant 0 : index
    %2 = vector.load %arg2[%c128, %c0_1] : memref<1656x128xf32, #tpu.memory_space<vmem>>, vector<1x128xf32>
    %3 = vector.extract_strided_slice %2 {offsets = [0, 0], sizes = [1, 20], strides = [1, 1]} : vector<1x128xf32> to vector<1x20xf32>
    %c0_2 = arith.constant 0 : index
    %c0_3 = arith.constant 0 : index
    %4 = vector.load %arg1[%c0_2, %c0_3] : memref<64x128xf32, #tpu.memory_space<vmem>>, vector<16x128xf32>
    %cst = arith.constant dense<0.000000e+00> : vector<16x20xf32>
    %5 = tpu.matmul %4, %1, %cst {dimension_numbers = #tpu.dot_dimension_numbers<[1], [0], [0], [1], [0, 0, 1, 1], [], []>} : vector<16x128xf32>, vector<128x20xf32>, vector<16x20xf32> -> vector<16x20xf32>
    %6 = vector.broadcast %3 : vector<1x20xf32> to vector<16x20xf32>
    %7 = arith.addf %5, %6 : vector<16x20xf32>
    %cst_4 = arith.constant 0.000000e+00 : f32
    %8 = vector.broadcast %cst_4 : f32 to vector<16x20xf32>
    %9 = arith.maximumf %7, %8 : vector<16x20xf32>
    %c16 = arith.constant 16 : index
    %c0_5 = arith.constant 0 : index
    %10 = vector.load %arg1[%c16, %c0_5] : memref<64x128xf32, #tpu.memory_space<vmem>>, vector<16x128xf32>
    %cst_6 = arith.constant dense<0.000000e+00> : vector<16x20xf32>
    %11 = tpu.matmul %10, %1, %cst_6 {dimension_numbers = #tpu.dot_dimension_numbers<[1], [0], [0], [1], [0, 0, 1, 1], [], []>} : vector<16x128xf32>, vector<128x20xf32>, vector<16x20xf32> -> vector<16x20xf32>
    %12 = vector.broadcast %3 : vector<1x20xf32> to vector<16x20xf32>
    %13 = arith.addf %11, %12 : vector<16x20xf32>
    %cst_7 = arith.constant 0.000000e+00 : f32
    %14 = vector.broadcast %cst_7 : f32 to vector<16x20xf32>
    %15 = arith.maximumf %13, %14 : vector<16x20xf32>
    %c32 = arith.constant 32 : index
    %c0_8 = arith.constant 0 : index
    %16 = vector.load %arg1[%c32, %c0_8] : memref<64x128xf32, #tpu.memory_space<vmem>>, vector<16x128xf32>
    %cst_9 = arith.constant dense<0.000000e+00> : vector<16x20xf32>
    %17 = tpu.matmul %16, %1, %cst_9 {dimension_numbers = #tpu.dot_dimension_numbers<[1], [0], [0], [1], [0, 0, 1, 1], [], []>} : vector<16x128xf32>, vector<128x20xf32>, vector<16x20xf32> -> vector<16x20xf32>
    %18 = vector.broadcast %3 : vector<1x20xf32> to vector<16x20xf32>
    %19 = arith.addf %17, %18 : vector<16x20xf32>
    %cst_10 = arith.constant 0.000000e+00 : f32
    %20 = vector.broadcast %cst_10 : f32 to vector<16x20xf32>
    %21 = arith.maximumf %19, %20 : vector<16x20xf32>
    %c48 = arith.constant 48 : index
    %c0_11 = arith.constant 0 : index
    %22 = vector.load %arg1[%c48, %c0_11] : memref<64x128xf32, #tpu.memory_space<vmem>>, vector<16x128xf32>
    %cst_12 = arith.constant dense<0.000000e+00> : vector<16x20xf32>
    %23 = tpu.matmul %22, %1, %cst_12 {dimension_numbers = #tpu.dot_dimension_numbers<[1], [0], [0], [1], [0, 0, 1, 1], [], []>} : vector<16x128xf32>, vector<128x20xf32>, vector<16x20xf32> -> vector<16x20xf32>
    %24 = vector.broadcast %3 : vector<1x20xf32> to vector<16x20xf32>
    %25 = arith.addf %23, %24 : vector<16x20xf32>
    %cst_13 = arith.constant 0.000000e+00 : f32
    %26 = vector.broadcast %cst_13 : f32 to vector<16x20xf32>
    %27 = arith.maximumf %25, %26 : vector<16x20xf32>
    %c1340 = arith.constant 1340 : index
    %c0_14 = arith.constant 0 : index
    %28 = vector.load %arg2[%c1340, %c0_14] : memref<1656x128xf32, #tpu.memory_space<vmem>>, vector<16x128xf32>
    %29 = vector.extract_strided_slice %28 {offsets = [0, 0], sizes = [16, 16], strides = [1, 1]} : vector<16x128xf32> to vector<16x16xf32>
    %c189 = arith.constant 189 : index
    %c0_15 = arith.constant 0 : index
    %30 = vector.load %arg2[%c189, %c0_15] : memref<1656x128xf32, #tpu.memory_space<vmem>>, vector<1x128xf32>
    %31 = vector.extract_strided_slice %30 {offsets = [0, 0], sizes = [1, 20], strides = [1, 1]} : vector<1x128xf32> to vector<1x20xf32>
    %cst_16 = arith.constant dense<0.000000e+00> : vector<16x20xf32>
    %32 = tpu.matmul %29, %27, %cst_16 {dimension_numbers = #tpu.dot_dimension_numbers<[1], [0], [0], [1], [0, 0, 1, 1], [], []>} : vector<16x16xf32>, vector<16x20xf32>, vector<16x20xf32> -> vector<16x20xf32>
    %c129 = arith.constant 129 : index
    %c0_17 = arith.constant 0 : index
    %33 = vector.load %arg2[%c129, %c0_17] : memref<1656x128xf32, #tpu.memory_space<vmem>>, vector<20x128xf32>
    %34 = vector.extract_strided_slice %33 {offsets = [0, 0], sizes = [20, 20], strides = [1, 1]} : vector<20x128xf32> to vector<20x20xf32>
    %cst_18 = arith.constant dense<0.000000e+00> : vector<16x20xf32>
    %35 = tpu.matmul %32, %34, %cst_18 {dimension_numbers = #tpu.dot_dimension_numbers<[1], [0], [0], [1], [0, 0, 1, 1], [], []>} : vector<16x20xf32>, vector<20x20xf32>, vector<16x20xf32> -> vector<16x20xf32>
    %c149 = arith.constant 149 : index
    %c0_19 = arith.constant 0 : index
    %36 = vector.load %arg2[%c149, %c0_19] : memref<1656x128xf32, #tpu.memory_space<vmem>>, vector<20x128xf32>
    %37 = vector.extract_strided_slice %36 {offsets = [0, 0], sizes = [20, 20], strides = [1, 1]} : vector<20x128xf32> to vector<20x20xf32>
    %cst_20 = arith.constant dense<0.000000e+00> : vector<16x20xf32>
    %38 = tpu.matmul %9, %37, %cst_20 {dimension_numbers = #tpu.dot_dimension_numbers<[1], [0], [0], [1], [0, 0, 1, 1], [], []>} : vector<16x20xf32>, vector<20x20xf32>, vector<16x20xf32> -> vector<16x20xf32>
    %39 = arith.addf %35, %38 : vector<16x20xf32>
    %c169 = arith.constant 169 : index
    %c0_21 = arith.constant 0 : index
    %40 = vector.load %arg2[%c169, %c0_21] : memref<1656x128xf32, #tpu.memory_space<vmem>>, vector<20x128xf32>
    %41 = vector.extract_strided_slice %40 {offsets = [0, 0], sizes = [20, 20], strides = [1, 1]} : vector<20x128xf32> to vector<20x20xf32>
    %cst_22 = arith.constant dense<0.000000e+00> : vector<16x20xf32>
    %42 = tpu.matmul %15, %41, %cst_22 {dimension_numbers = #tpu.dot_dimension_numbers<[1], [0], [0], [1], [0, 0, 1, 1], [], []>} : vector<16x20xf32>, vector<20x20xf32>, vector<16x20xf32> -> vector<16x20xf32>
    %43 = arith.addf %39, %42 : vector<16x20xf32>
    %44 = vector.broadcast %31 : vector<1x20xf32> to vector<16x20xf32>
    %45 = arith.addf %43, %44 : vector<16x20xf32>
    %cst_23 = arith.constant 0.000000e+00 : f32
    %46 = vector.broadcast %cst_23 : f32 to vector<16x20xf32>
    %47 = arith.maximumf %45, %46 : vector<16x20xf32>
    %c129_24 = arith.constant 129 : index
    %c0_25 = arith.constant 0 : index
    %48 = vector.load %arg2[%c129_24, %c0_25] : memref<1656x128xf32, #tpu.memory_space<vmem>>, vector<20x128xf32>
    %49 = vector.extract_strided_slice %48 {offsets = [0, 0], sizes = [20, 20], strides = [1, 1]} : vector<20x128xf32> to vector<20x20xf32>
    %cst_26 = arith.constant dense<0.000000e+00> : vector<16x20xf32>
    %50 = tpu.matmul %15, %49, %cst_26 {dimension_numbers = #tpu.dot_dimension_numbers<[1], [0], [0], [1], [0, 0, 1, 1], [], []>} : vector<16x20xf32>, vector<20x20xf32>, vector<16x20xf32> -> vector<16x20xf32>
    %c149_27 = arith.constant 149 : index
    %c0_28 = arith.constant 0 : index
    %51 = vector.load %arg2[%c149_27, %c0_28] : memref<1656x128xf32, #tpu.memory_space<vmem>>, vector<20x128xf32>
    %52 = vector.extract_strided_slice %51 {offsets = [0, 0], sizes = [20, 20], strides = [1, 1]} : vector<20x128xf32> to vector<20x20xf32>
    %cst_29 = arith.constant dense<0.000000e+00> : vector<16x20xf32>
    %53 = tpu.matmul %21, %52, %cst_29 {dimension_numbers = #tpu.dot_dimension_numbers<[1], [0], [0], [1], [0, 0, 1, 1], [], []>} : vector<16x20xf32>, vector<20x20xf32>, vector<16x20xf32> -> vector<16x20xf32>
    %54 = arith.addf %50, %53 : vector<16x20xf32>
    %c169_30 = arith.constant 169 : index
    %c0_31 = arith.constant 0 : index
    %55 = vector.load %arg2[%c169_30, %c0_31] : memref<1656x128xf32, #tpu.memory_space<vmem>>, vector<20x128xf32>
    %56 = vector.extract_strided_slice %55 {offsets = [0, 0], sizes = [20, 20], strides = [1, 1]} : vector<20x128xf32> to vector<20x20xf32>
    %cst_32 = arith.constant dense<0.000000e+00> : vector<16x20xf32>
    %57 = tpu.matmul %27, %56, %cst_32 {dimension_numbers = #tpu.dot_dimension_numbers<[1], [0], [0], [1], [0, 0, 1, 1], [], []>} : vector<16x20xf32>, vector<20x20xf32>, vector<16x20xf32> -> vector<16x20xf32>
    %58 = arith.addf %54, %57 : vector<16x20xf32>
    %59 = vector.broadcast %31 : vector<1x20xf32> to vector<16x20xf32>
    %60 = arith.addf %58, %59 : vector<16x20xf32>
    %cst_33 = arith.constant 0.000000e+00 : f32
    %61 = vector.broadcast %cst_33 : f32 to vector<16x20xf32>
    %62 = arith.maximumf %60, %61 : vector<16x20xf32>
    %63 = arith.maximumf %47, %62 : vector<16x20xf32>
    %c164 = arith.constant 164 : index
    %c0_34 = arith.constant 0 : index
    %64 = vector.load %arg3[%c164, %c0_34] : memref<200x512xf32, #tpu.memory_space<vmem>>, vector<16x512xf32>
    %65 = vector.extract_strided_slice %64 {offsets = [0, 0], sizes = [16, 260], strides = [1, 1]} : vector<16x512xf32> to vector<16x260xf32>
    %c1388 = arith.constant 1388 : index
    %c0_35 = arith.constant 0 : index
    %66 = vector.load %arg2[%c1388, %c0_35] : memref<1656x128xf32, #tpu.memory_space<vmem>>, vector<1x128xf32>
    %67 = vector.extract_strided_slice %66 {offsets = [0, 0], sizes = [1, 16], strides = [1, 1]} : vector<1x128xf32> to vector<1x16xf32>
    %c180 = arith.constant 180 : index
    %c0_36 = arith.constant 0 : index
    %68 = vector.load %arg3[%c180, %c0_36] : memref<200x512xf32, #tpu.memory_space<vmem>>, vector<20x512xf32>
    %69 = vector.extract_strided_slice %68 {offsets = [0, 0], sizes = [20, 260], strides = [1, 1]} : vector<20x512xf32> to vector<20x260xf32>
    %cst_37 = arith.constant dense<0.000000e+00> : vector<16x260xf32>
    %70 = tpu.matmul %63, %69, %cst_37 {dimension_numbers = #tpu.dot_dimension_numbers<[1], [0], [0], [1], [0, 0, 1, 1], [], []>} : vector<16x20xf32>, vector<20x260xf32>, vector<16x260xf32> -> vector<16x260xf32>
    %71 = arith.mulf %65, %70 : vector<16x260xf32>
    %cst_38 = arith.constant dense<0.000000e+00> : vector<1x260xf32>
    %72 = tpu.matmul %67, %71, %cst_38 {dimension_numbers = #tpu.dot_dimension_numbers<[1], [0], [0], [1], [0, 0, 1, 1], [], []>} : vector<1x16xf32>, vector<16x260xf32>, vector<1x260xf32> -> vector<1x260xf32>
    %c190 = arith.constant 190 : index
    %c0_39 = arith.constant 0 : index
    %73 = vector.load %arg2[%c190, %c0_39] : memref<1656x128xf32, #tpu.memory_space<vmem>>, vector<260x128xf32>
    %74 = vector.extract_strided_slice %73 {offsets = [0, 0], sizes = [260, 32], strides = [1, 1]} : vector<260x128xf32> to vector<260x32xf32>
    %cst_40 = arith.constant dense<0.000000e+00> : vector<1x32xf32>
    %75 = tpu.matmul %72, %74, %cst_40 {dimension_numbers = #tpu.dot_dimension_numbers<[1], [0], [0], [1], [0, 0, 1, 1], [], []>} : vector<1x260xf32>, vector<260x32xf32>, vector<1x32xf32> -> vector<1x32xf32>
    %c450 = arith.constant 450 : index
    %c0_41 = arith.constant 0 : index
    %76 = vector.load %arg2[%c450, %c0_41] : memref<1656x128xf32, #tpu.memory_space<vmem>>, vector<1x128xf32>
    %77 = vector.extract_strided_slice %76 {offsets = [0, 0], sizes = [1, 32], strides = [1, 1]} : vector<1x128xf32> to vector<1x32xf32>
    %78 = arith.addf %75, %77 : vector<1x32xf32>
    %79 = vector.extract_strided_slice %78 {offsets = [0, 0], sizes = [1, 16], strides = [1, 1]} : vector<1x32xf32> to vector<1x16xf32>
    %80 = vector.extract_strided_slice %78 {offsets = [0, 16], sizes = [1, 16], strides = [1, 1]} : vector<1x32xf32> to vector<1x16xf32>
    %c451 = arith.constant 451 : index
    %c0_42 = arith.constant 0 : index
    %81 = vector.load %arg2[%c451, %c0_42] : memref<1656x128xf32, #tpu.memory_space<vmem>>, vector<1x128xf32>
    %82 = vector.extract_strided_slice %81 {offsets = [0, 0], sizes = [1, 16], strides = [1, 1]} : vector<1x128xf32> to vector<1x16xf32>
    %c452 = arith.constant 452 : index
    %c0_43 = arith.constant 0 : index
    %83 = vector.load %arg2[%c452, %c0_43] : memref<1656x128xf32, #tpu.memory_space<vmem>>, vector<16x128xf32>
    %84 = vector.extract_strided_slice %83 {offsets = [0, 0], sizes = [16, 32], strides = [1, 1]} : vector<16x128xf32> to vector<16x32xf32>
    %c468 = arith.constant 468 : index
    %c0_44 = arith.constant 0 : index
    %85 = vector.load %arg2[%c468, %c0_44] : memref<1656x128xf32, #tpu.memory_space<vmem>>, vector<16x128xf32>
    %86 = vector.extract_strided_slice %85 {offsets = [0, 0], sizes = [16, 32], strides = [1, 1]} : vector<16x128xf32> to vector<16x32xf32>
    %c484 = arith.constant 484 : index
    %c0_45 = arith.constant 0 : index
    %87 = vector.load %arg2[%c484, %c0_45] : memref<1656x128xf32, #tpu.memory_space<vmem>>, vector<4x128xf32>
    %88 = vector.extract_strided_slice %87 {offsets = [0, 0], sizes = [4, 32], strides = [1, 1]} : vector<4x128xf32> to vector<4x32xf32>
    %c488 = arith.constant 488 : index
    %c0_46 = arith.constant 0 : index
    %89 = vector.load %arg2[%c488, %c0_46] : memref<1656x128xf32, #tpu.memory_space<vmem>>, vector<1x128xf32>
    %90 = vector.extract_strided_slice %89 {offsets = [0, 0], sizes = [1, 32], strides = [1, 1]} : vector<1x128xf32> to vector<1x32xf32>
    %c489 = arith.constant 489 : index
    %c0_47 = arith.constant 0 : index
    %91 = vector.load %arg2[%c489, %c0_47] : memref<1656x128xf32, #tpu.memory_space<vmem>>, vector<32x128xf32>
    %92 = vector.extract_strided_slice %91 {offsets = [0, 0], sizes = [32, 32], strides = [1, 1]} : vector<32x128xf32> to vector<32x32xf32>
    %c521 = arith.constant 521 : index
    %c0_48 = arith.constant 0 : index
    %93 = vector.load %arg2[%c521, %c0_48] : memref<1656x128xf32, #tpu.memory_space<vmem>>, vector<1x128xf32>
    %94 = vector.extract_strided_slice %93 {offsets = [0, 0], sizes = [1, 32], strides = [1, 1]} : vector<1x128xf32> to vector<1x32xf32>
    %c522 = arith.constant 522 : index
    %c0_49 = arith.constant 0 : index
    %95 = vector.load %arg2[%c522, %c0_49] : memref<1656x128xf32, #tpu.memory_space<vmem>>, vector<1x128xf32>
    %96 = vector.extract_strided_slice %95 {offsets = [0, 0], sizes = [1, 32], strides = [1, 1]} : vector<1x128xf32> to vector<1x32xf32>
    %c523 = arith.constant 523 : index
    %c0_50 = arith.constant 0 : index
    %97 = vector.load %arg2[%c523, %c0_50] : memref<1656x128xf32, #tpu.memory_space<vmem>>, vector<32x128xf32>
    %98 = vector.extract_strided_slice %97 {offsets = [0, 0], sizes = [32, 16], strides = [1, 1]} : vector<32x128xf32> to vector<32x16xf32>
    %c555 = arith.constant 555 : index
    %c0_51 = arith.constant 0 : index
    %99 = vector.load %arg2[%c555, %c0_51] : memref<1656x128xf32, #tpu.memory_space<vmem>>, vector<32x128xf32>
    %100 = vector.extract_strided_slice %99 {offsets = [0, 0], sizes = [32, 16], strides = [1, 1]} : vector<32x128xf32> to vector<32x16xf32>
    %c587 = arith.constant 587 : index
    %c0_52 = arith.constant 0 : index
    %101 = vector.load %arg2[%c587, %c0_52] : memref<1656x128xf32, #tpu.memory_space<vmem>>, vector<32x128xf32>
    %102 = vector.extract_strided_slice %101 {offsets = [0, 0], sizes = [32, 16], strides = [1, 1]} : vector<32x128xf32> to vector<32x16xf32>
    %c0_53 = arith.constant 0 : index
    %c0_54 = arith.constant 0 : index
    %103 = vector.load %arg3[%c0_53, %c0_54] : memref<200x512xf32, #tpu.memory_space<vmem>>, vector<1x512xf32>
    %c2 = arith.constant 2 : index
    %c0_55 = arith.constant 0 : index
    %104 = vector.load %arg3[%c2, %c0_55] : memref<200x512xf32, #tpu.memory_space<vmem>>, vector<32x512xf32>
    %c34 = arith.constant 34 : index
    %c0_56 = arith.constant 0 : index
    %105 = vector.load %arg3[%c34, %c0_56] : memref<200x512xf32, #tpu.memory_space<vmem>>, vector<16x512xf32>
    %c787 = arith.constant 787 : index
    %c0_57 = arith.constant 0 : index
    %106 = vector.load %arg2[%c787, %c0_57] : memref<1656x128xf32, #tpu.memory_space<vmem>>, vector<512x128xf32>
    %107 = vector.extract_strided_slice %106 {offsets = [0, 0], sizes = [512, 32], strides = [1, 1]} : vector<512x128xf32> to vector<512x32xf32>
    %108 = arith.mulf %79, %79 : vector<1x16xf32>
    %cst_58 = arith.constant dense<0.000000e+00> : vector<1xf32>
    %109 = vector.multi_reduction <add>, %108, %cst_58 [1] : vector<1x16xf32> to vector<1xf32>
    %110 = vector.shape_cast %109 : vector<1xf32> to vector<1x1xf32>
    %cst_59 = arith.constant 1.600000e+01 : f32
    %111 = vector.broadcast %cst_59 : f32 to vector<1x1xf32>
    %112 = arith.divf %110, %111 : vector<1x1xf32>
    %cst_60 = arith.constant 9.99999974E-6 : f32
    %113 = vector.broadcast %cst_60 : f32 to vector<1x1xf32>
    %114 = arith.addf %112, %113 : vector<1x1xf32>
    %115 = math.rsqrt %114 : vector<1x1xf32>
    %116 = vector.broadcast %115 : vector<1x1xf32> to vector<1x16xf32>
    %117 = arith.mulf %79, %116 : vector<1x16xf32>
    %118 = arith.mulf %117, %82 : vector<1x16xf32>
    %cst_61 = arith.constant dense<0.000000e+00> : vector<1x32xf32>
    %119 = tpu.matmul %118, %84, %cst_61 {dimension_numbers = #tpu.dot_dimension_numbers<[1], [0], [0], [1], [0, 0, 1, 1], [], []>} : vector<1x16xf32>, vector<16x32xf32>, vector<1x32xf32> -> vector<1x32xf32>
    %cst_62 = arith.constant dense<0.000000e+00> : vector<1x32xf32>
    %120 = tpu.matmul %118, %86, %cst_62 {dimension_numbers = #tpu.dot_dimension_numbers<[1], [0], [0], [1], [0, 0, 1, 1], [], []>} : vector<1x16xf32>, vector<16x32xf32>, vector<1x32xf32> -> vector<1x32xf32>
    %121 = arith.mulf %80, %80 : vector<1x16xf32>
    %cst_63 = arith.constant dense<0.000000e+00> : vector<1xf32>
    %122 = vector.multi_reduction <add>, %121, %cst_63 [1] : vector<1x16xf32> to vector<1xf32>
    %123 = vector.shape_cast %122 : vector<1xf32> to vector<1x1xf32>
    %cst_64 = arith.constant 1.600000e+01 : f32
    %124 = vector.broadcast %cst_64 : f32 to vector<1x1xf32>
    %125 = arith.divf %123, %124 : vector<1x1xf32>
    %cst_65 = arith.constant 9.99999974E-6 : f32
    %126 = vector.broadcast %cst_65 : f32 to vector<1x1xf32>
    %127 = arith.addf %125, %126 : vector<1x1xf32>
    %128 = math.rsqrt %127 : vector<1x1xf32>
    %129 = vector.broadcast %128 : vector<1x1xf32> to vector<1x16xf32>
    %130 = arith.mulf %80, %129 : vector<1x16xf32>
    %131 = arith.mulf %130, %82 : vector<1x16xf32>
    %cst_66 = arith.constant dense<0.000000e+00> : vector<1x32xf32>
    %132 = tpu.matmul %131, %84, %cst_66 {dimension_numbers = #tpu.dot_dimension_numbers<[1], [0], [0], [1], [0, 0, 1, 1], [], []>} : vector<1x16xf32>, vector<16x32xf32>, vector<1x32xf32> -> vector<1x32xf32>
    %cst_67 = arith.constant dense<0.000000e+00> : vector<1x32xf32>
    %133 = tpu.matmul %131, %86, %cst_67 {dimension_numbers = #tpu.dot_dimension_numbers<[1], [0], [0], [1], [0, 0, 1, 1], [], []>} : vector<1x16xf32>, vector<16x32xf32>, vector<1x32xf32> -> vector<1x32xf32>
    %134 = vector.extract_strided_slice %88 {offsets = [3, 0], sizes = [1, 32], strides = [1, 1]} : vector<4x32xf32> to vector<1x32xf32>
    %135 = arith.mulf %119, %134 : vector<1x32xf32>
    %136 = arith.addf %135, %90 : vector<1x32xf32>
    %cst_68 = arith.constant 5.000000e-01 : f32
    %137 = vector.broadcast %cst_68 : f32 to vector<1x32xf32>
    %138 = arith.mulf %137, %136 : vector<1x32xf32>
    %139 = math.tanh %138 : vector<1x32xf32>
    %cst_69 = arith.constant 1.000000e+00 : f32
    %140 = vector.broadcast %cst_69 : f32 to vector<1x32xf32>
    %141 = arith.addf %139, %140 : vector<1x32xf32>
    %cst_70 = arith.constant 5.000000e-01 : f32
    %142 = vector.broadcast %cst_70 : f32 to vector<1x32xf32>
    %143 = arith.mulf %142, %141 : vector<1x32xf32>
    %144 = arith.mulf %136, %143 : vector<1x32xf32>
    %cst_71 = arith.constant dense<0.000000e+00> : vector<1x32xf32>
    %145 = tpu.matmul %144, %92, %cst_71 {dimension_numbers = #tpu.dot_dimension_numbers<[1], [0], [0], [1], [0, 0, 1, 1], [], []>} : vector<1x32xf32>, vector<32x32xf32>, vector<1x32xf32> -> vector<1x32xf32>
    %146 = arith.addf %145, %94 : vector<1x32xf32>
    %cst_72 = arith.constant 2.000000e+01 : f32
    %147 = vector.broadcast %cst_72 : f32 to vector<1x32xf32>
    %148 = arith.cmpf ogt, %146, %147 : vector<1x32xf32>
    %cst_73 = arith.constant 2.000000e+01 : f32
    %149 = vector.broadcast %cst_73 : f32 to vector<1x32xf32>
    %150 = arith.minimumf %146, %149 : vector<1x32xf32>
    %151 = math.exp %150 : vector<1x32xf32>
    %cst_74 = arith.constant 1.000000e+00 : f32
    %152 = vector.broadcast %cst_74 : f32 to vector<1x32xf32>
    %153 = arith.addf %152, %151 : vector<1x32xf32>
    %154 = math.log %153 : vector<1x32xf32>
    %155 = arith.select %148, %146, %154 : vector<1x32xi1>, vector<1x32xf32>
    %cst_75 = arith.constant dense<0.000000e+00> : vector<1x16xf32>
    %156 = tpu.matmul %144, %98, %cst_75 {dimension_numbers = #tpu.dot_dimension_numbers<[1], [0], [0], [1], [0, 0, 1, 1], [], []>} : vector<1x32xf32>, vector<32x16xf32>, vector<1x16xf32> -> vector<1x16xf32>
    %cst_76 = arith.constant dense<0.000000e+00> : vector<1x16xf32>
    %157 = tpu.matmul %144, %100, %cst_76 {dimension_numbers = #tpu.dot_dimension_numbers<[1], [0], [0], [1], [0, 0, 1, 1], [], []>} : vector<1x32xf32>, vector<32x16xf32>, vector<1x16xf32> -> vector<1x16xf32>
    %158 = arith.mulf %155, %144 : vector<1x32xf32>
    %cst_77 = arith.constant dense<0.000000e+00> : vector<1x512xf32>
    %159 = tpu.matmul %158, %104, %cst_77 {dimension_numbers = #tpu.dot_dimension_numbers<[1], [0], [0], [1], [0, 0, 1, 1], [], []>} : vector<1x32xf32>, vector<32x512xf32>, vector<1x512xf32> -> vector<1x512xf32>
    %cst_78 = arith.constant dense<0.000000e+00> : vector<1x512xf32>
    %160 = tpu.matmul %156, %105, %cst_78 {dimension_numbers = #tpu.dot_dimension_numbers<[1], [0], [0], [1], [0, 0, 1, 1], [], []>} : vector<1x16xf32>, vector<16x512xf32>, vector<1x512xf32> -> vector<1x512xf32>
    %161 = arith.mulf %159, %160 : vector<1x512xf32>
    %cst_79 = arith.constant dense<0.000000e+00> : vector<1x512xf32>
    %162 = tpu.matmul %157, %105, %cst_79 {dimension_numbers = #tpu.dot_dimension_numbers<[1], [0], [0], [1], [0, 0, 1, 1], [], []>} : vector<1x16xf32>, vector<16x512xf32>, vector<1x512xf32> -> vector<1x512xf32>
    %163 = arith.mulf %161, %162 : vector<1x512xf32>
    %cst_80 = arith.constant dense<0.000000e+00> : vector<1x32xf32>
    %164 = tpu.matmul %163, %107, %cst_80 {dimension_numbers = #tpu.dot_dimension_numbers<[1], [0], [0], [1], [0, 0, 1, 1], [], []>} : vector<1x512xf32>, vector<512x32xf32>, vector<1x32xf32> -> vector<1x32xf32>
    %165 = arith.mulf %96, %144 : vector<1x32xf32>
    %166 = arith.addf %164, %165 : vector<1x32xf32>
    %cst_81 = arith.constant 5.000000e-01 : f32
    %167 = vector.broadcast %cst_81 : f32 to vector<1x32xf32>
    %168 = arith.mulf %167, %120 : vector<1x32xf32>
    %169 = math.tanh %168 : vector<1x32xf32>
    %cst_82 = arith.constant 1.000000e+00 : f32
    %170 = vector.broadcast %cst_82 : f32 to vector<1x32xf32>
    %171 = arith.addf %169, %170 : vector<1x32xf32>
    %cst_83 = arith.constant 5.000000e-01 : f32
    %172 = vector.broadcast %cst_83 : f32 to vector<1x32xf32>
    %173 = arith.mulf %172, %171 : vector<1x32xf32>
    %174 = arith.mulf %120, %173 : vector<1x32xf32>
    %175 = arith.mulf %166, %174 : vector<1x32xf32>
    %cst_84 = arith.constant dense<0.000000e+00> : vector<1x16xf32>
    %176 = tpu.matmul %175, %102, %cst_84 {dimension_numbers = #tpu.dot_dimension_numbers<[1], [0], [0], [1], [0, 0, 1, 1], [], []>} : vector<1x32xf32>, vector<32x16xf32>, vector<1x16xf32> -> vector<1x16xf32>
    %177 = arith.addf %79, %176 : vector<1x16xf32>
    %178 = vector.extract_strided_slice %88 {offsets = [3, 0], sizes = [1, 32], strides = [1, 1]} : vector<4x32xf32> to vector<1x32xf32>
    %179 = arith.mulf %132, %178 : vector<1x32xf32>
    %180 = arith.addf %179, %90 : vector<1x32xf32>
    %181 = vector.extract_strided_slice %88 {offsets = [2, 0], sizes = [1, 32], strides = [1, 1]} : vector<4x32xf32> to vector<1x32xf32>
    %182 = arith.mulf %119, %181 : vector<1x32xf32>
    %183 = arith.addf %180, %182 : vector<1x32xf32>
    %cst_85 = arith.constant 5.000000e-01 : f32
    %184 = vector.broadcast %cst_85 : f32 to vector<1x32xf32>
    %185 = arith.mulf %184, %183 : vector<1x32xf32>
    %186 = math.tanh %185 : vector<1x32xf32>
    %cst_86 = arith.constant 1.000000e+00 : f32
    %187 = vector.broadcast %cst_86 : f32 to vector<1x32xf32>
    %188 = arith.addf %186, %187 : vector<1x32xf32>
    %cst_87 = arith.constant 5.000000e-01 : f32
    %189 = vector.broadcast %cst_87 : f32 to vector<1x32xf32>
    %190 = arith.mulf %189, %188 : vector<1x32xf32>
    %191 = arith.mulf %183, %190 : vector<1x32xf32>
    %cst_88 = arith.constant dense<0.000000e+00> : vector<1x32xf32>
    %192 = tpu.matmul %191, %92, %cst_88 {dimension_numbers = #tpu.dot_dimension_numbers<[1], [0], [0], [1], [0, 0, 1, 1], [], []>} : vector<1x32xf32>, vector<32x32xf32>, vector<1x32xf32> -> vector<1x32xf32>
    %193 = arith.addf %192, %94 : vector<1x32xf32>
    %cst_89 = arith.constant 2.000000e+01 : f32
    %194 = vector.broadcast %cst_89 : f32 to vector<1x32xf32>
    %195 = arith.cmpf ogt, %193, %194 : vector<1x32xf32>
    %cst_90 = arith.constant 2.000000e+01 : f32
    %196 = vector.broadcast %cst_90 : f32 to vector<1x32xf32>
    %197 = arith.minimumf %193, %196 : vector<1x32xf32>
    %198 = math.exp %197 : vector<1x32xf32>
    %cst_91 = arith.constant 1.000000e+00 : f32
    %199 = vector.broadcast %cst_91 : f32 to vector<1x32xf32>
    %200 = arith.addf %199, %198 : vector<1x32xf32>
    %201 = math.log %200 : vector<1x32xf32>
    %202 = arith.select %195, %193, %201 : vector<1x32xi1>, vector<1x32xf32>
    %cst_92 = arith.constant dense<0.000000e+00> : vector<1x16xf32>
    %203 = tpu.matmul %191, %98, %cst_92 {dimension_numbers = #tpu.dot_dimension_numbers<[1], [0], [0], [1], [0, 0, 1, 1], [], []>} : vector<1x32xf32>, vector<32x16xf32>, vector<1x16xf32> -> vector<1x16xf32>
    %cst_93 = arith.constant dense<0.000000e+00> : vector<1x16xf32>
    %204 = tpu.matmul %191, %100, %cst_93 {dimension_numbers = #tpu.dot_dimension_numbers<[1], [0], [0], [1], [0, 0, 1, 1], [], []>} : vector<1x32xf32>, vector<32x16xf32>, vector<1x16xf32> -> vector<1x16xf32>
    %205 = arith.mulf %202, %191 : vector<1x32xf32>
    %cst_94 = arith.constant dense<0.000000e+00> : vector<1x512xf32>
    %206 = tpu.matmul %205, %104, %cst_94 {dimension_numbers = #tpu.dot_dimension_numbers<[1], [0], [0], [1], [0, 0, 1, 1], [], []>} : vector<1x32xf32>, vector<32x512xf32>, vector<1x512xf32> -> vector<1x512xf32>
    %cst_95 = arith.constant dense<0.000000e+00> : vector<1x512xf32>
    %207 = tpu.matmul %203, %105, %cst_95 {dimension_numbers = #tpu.dot_dimension_numbers<[1], [0], [0], [1], [0, 0, 1, 1], [], []>} : vector<1x16xf32>, vector<16x512xf32>, vector<1x512xf32> -> vector<1x512xf32>
    %208 = arith.mulf %206, %207 : vector<1x512xf32>
    %cst_96 = arith.constant dense<0.000000e+00> : vector<1x512xf32>
    %209 = tpu.matmul %202, %104, %cst_96 {dimension_numbers = #tpu.dot_dimension_numbers<[1], [0], [0], [1], [0, 0, 1, 1], [], []>} : vector<1x32xf32>, vector<32x512xf32>, vector<1x512xf32> -> vector<1x512xf32>
    %210 = arith.mulf %209, %103 : vector<1x512xf32>
    %211 = math.exp %210 : vector<1x512xf32>
    %212 = arith.mulf %211, %161 : vector<1x512xf32>
    %213 = arith.addf %212, %208 : vector<1x512xf32>
    %cst_97 = arith.constant dense<0.000000e+00> : vector<1x512xf32>
    %214 = tpu.matmul %204, %105, %cst_97 {dimension_numbers = #tpu.dot_dimension_numbers<[1], [0], [0], [1], [0, 0, 1, 1], [], []>} : vector<1x16xf32>, vector<16x512xf32>, vector<1x512xf32> -> vector<1x512xf32>
    %215 = arith.mulf %213, %214 : vector<1x512xf32>
    %cst_98 = arith.constant dense<0.000000e+00> : vector<1x32xf32>
    %216 = tpu.matmul %215, %107, %cst_98 {dimension_numbers = #tpu.dot_dimension_numbers<[1], [0], [0], [1], [0, 0, 1, 1], [], []>} : vector<1x512xf32>, vector<512x32xf32>, vector<1x32xf32> -> vector<1x32xf32>
    %217 = arith.mulf %96, %191 : vector<1x32xf32>
    %218 = arith.addf %216, %217 : vector<1x32xf32>
    %cst_99 = arith.constant 5.000000e-01 : f32
    %219 = vector.broadcast %cst_99 : f32 to vector<1x32xf32>
    %220 = arith.mulf %219, %133 : vector<1x32xf32>
    %221 = math.tanh %220 : vector<1x32xf32>
    %cst_100 = arith.constant 1.000000e+00 : f32
    %222 = vector.broadcast %cst_100 : f32 to vector<1x32xf32>
    %223 = arith.addf %221, %222 : vector<1x32xf32>
    %cst_101 = arith.constant 5.000000e-01 : f32
    %224 = vector.broadcast %cst_101 : f32 to vector<1x32xf32>
    %225 = arith.mulf %224, %223 : vector<1x32xf32>
    %226 = arith.mulf %133, %225 : vector<1x32xf32>
    %227 = arith.mulf %218, %226 : vector<1x32xf32>
    %cst_102 = arith.constant dense<0.000000e+00> : vector<1x16xf32>
    %228 = tpu.matmul %227, %102, %cst_102 {dimension_numbers = #tpu.dot_dimension_numbers<[1], [0], [0], [1], [0, 0, 1, 1], [], []>} : vector<1x32xf32>, vector<32x16xf32>, vector<1x16xf32> -> vector<1x16xf32>
    %229 = arith.addf %80, %228 : vector<1x16xf32>
    %c619 = arith.constant 619 : index
    %c0_103 = arith.constant 0 : index
    %230 = vector.load %arg2[%c619, %c0_103] : memref<1656x128xf32, #tpu.memory_space<vmem>>, vector<1x128xf32>
    %231 = vector.extract_strided_slice %230 {offsets = [0, 0], sizes = [1, 16], strides = [1, 1]} : vector<1x128xf32> to vector<1x16xf32>
    %c620 = arith.constant 620 : index
    %c0_104 = arith.constant 0 : index
    %232 = vector.load %arg2[%c620, %c0_104] : memref<1656x128xf32, #tpu.memory_space<vmem>>, vector<16x128xf32>
    %233 = vector.extract_strided_slice %232 {offsets = [0, 0], sizes = [16, 32], strides = [1, 1]} : vector<16x128xf32> to vector<16x32xf32>
    %c636 = arith.constant 636 : index
    %c0_105 = arith.constant 0 : index
    %234 = vector.load %arg2[%c636, %c0_105] : memref<1656x128xf32, #tpu.memory_space<vmem>>, vector<16x128xf32>
    %235 = vector.extract_strided_slice %234 {offsets = [0, 0], sizes = [16, 32], strides = [1, 1]} : vector<16x128xf32> to vector<16x32xf32>
    %c652 = arith.constant 652 : index
    %c0_106 = arith.constant 0 : index
    %236 = vector.load %arg2[%c652, %c0_106] : memref<1656x128xf32, #tpu.memory_space<vmem>>, vector<4x128xf32>
    %237 = vector.extract_strided_slice %236 {offsets = [0, 0], sizes = [4, 32], strides = [1, 1]} : vector<4x128xf32> to vector<4x32xf32>
    %c656 = arith.constant 656 : index
    %c0_107 = arith.constant 0 : index
    %238 = vector.load %arg2[%c656, %c0_107] : memref<1656x128xf32, #tpu.memory_space<vmem>>, vector<1x128xf32>
    %239 = vector.extract_strided_slice %238 {offsets = [0, 0], sizes = [1, 32], strides = [1, 1]} : vector<1x128xf32> to vector<1x32xf32>
    %c657 = arith.constant 657 : index
    %c0_108 = arith.constant 0 : index
    %240 = vector.load %arg2[%c657, %c0_108] : memref<1656x128xf32, #tpu.memory_space<vmem>>, vector<32x128xf32>
    %241 = vector.extract_strided_slice %240 {offsets = [0, 0], sizes = [32, 32], strides = [1, 1]} : vector<32x128xf32> to vector<32x32xf32>
    %c689 = arith.constant 689 : index
    %c0_109 = arith.constant 0 : index
    %242 = vector.load %arg2[%c689, %c0_109] : memref<1656x128xf32, #tpu.memory_space<vmem>>, vector<1x128xf32>
    %243 = vector.extract_strided_slice %242 {offsets = [0, 0], sizes = [1, 32], strides = [1, 1]} : vector<1x128xf32> to vector<1x32xf32>
    %c690 = arith.constant 690 : index
    %c0_110 = arith.constant 0 : index
    %244 = vector.load %arg2[%c690, %c0_110] : memref<1656x128xf32, #tpu.memory_space<vmem>>, vector<1x128xf32>
    %245 = vector.extract_strided_slice %244 {offsets = [0, 0], sizes = [1, 32], strides = [1, 1]} : vector<1x128xf32> to vector<1x32xf32>
    %c691 = arith.constant 691 : index
    %c0_111 = arith.constant 0 : index
    %246 = vector.load %arg2[%c691, %c0_111] : memref<1656x128xf32, #tpu.memory_space<vmem>>, vector<32x128xf32>
    %247 = vector.extract_strided_slice %246 {offsets = [0, 0], sizes = [32, 16], strides = [1, 1]} : vector<32x128xf32> to vector<32x16xf32>
    %c723 = arith.constant 723 : index
    %c0_112 = arith.constant 0 : index
    %248 = vector.load %arg2[%c723, %c0_112] : memref<1656x128xf32, #tpu.memory_space<vmem>>, vector<32x128xf32>
    %249 = vector.extract_strided_slice %248 {offsets = [0, 0], sizes = [32, 16], strides = [1, 1]} : vector<32x128xf32> to vector<32x16xf32>
    %c755 = arith.constant 755 : index
    %c0_113 = arith.constant 0 : index
    %250 = vector.load %arg2[%c755, %c0_113] : memref<1656x128xf32, #tpu.memory_space<vmem>>, vector<32x128xf32>
    %251 = vector.extract_strided_slice %250 {offsets = [0, 0], sizes = [32, 16], strides = [1, 1]} : vector<32x128xf32> to vector<32x16xf32>
    %c1 = arith.constant 1 : index
    %c0_114 = arith.constant 0 : index
    %252 = vector.load %arg3[%c1, %c0_114] : memref<200x512xf32, #tpu.memory_space<vmem>>, vector<1x512xf32>
    %c2_115 = arith.constant 2 : index
    %c0_116 = arith.constant 0 : index
    %253 = vector.load %arg3[%c2_115, %c0_116] : memref<200x512xf32, #tpu.memory_space<vmem>>, vector<32x512xf32>
    %c34_117 = arith.constant 34 : index
    %c0_118 = arith.constant 0 : index
    %254 = vector.load %arg3[%c34_117, %c0_118] : memref<200x512xf32, #tpu.memory_space<vmem>>, vector<16x512xf32>
    %c787_119 = arith.constant 787 : index
    %c0_120 = arith.constant 0 : index
    %255 = vector.load %arg2[%c787_119, %c0_120] : memref<1656x128xf32, #tpu.memory_space<vmem>>, vector<512x128xf32>
    %256 = vector.extract_strided_slice %255 {offsets = [0, 0], sizes = [512, 32], strides = [1, 1]} : vector<512x128xf32> to vector<512x32xf32>
    %257 = arith.mulf %177, %177 : vector<1x16xf32>
    %cst_121 = arith.constant dense<0.000000e+00> : vector<1xf32>
    %258 = vector.multi_reduction <add>, %257, %cst_121 [1] : vector<1x16xf32> to vector<1xf32>
    %259 = vector.shape_cast %258 : vector<1xf32> to vector<1x1xf32>
    %cst_122 = arith.constant 1.600000e+01 : f32
    %260 = vector.broadcast %cst_122 : f32 to vector<1x1xf32>
    %261 = arith.divf %259, %260 : vector<1x1xf32>
    %cst_123 = arith.constant 9.99999974E-6 : f32
    %262 = vector.broadcast %cst_123 : f32 to vector<1x1xf32>
    %263 = arith.addf %261, %262 : vector<1x1xf32>
    %264 = math.rsqrt %263 : vector<1x1xf32>
    %265 = vector.broadcast %264 : vector<1x1xf32> to vector<1x16xf32>
    %266 = arith.mulf %177, %265 : vector<1x16xf32>
    %267 = arith.mulf %266, %231 : vector<1x16xf32>
    %cst_124 = arith.constant dense<0.000000e+00> : vector<1x32xf32>
    %268 = tpu.matmul %267, %233, %cst_124 {dimension_numbers = #tpu.dot_dimension_numbers<[1], [0], [0], [1], [0, 0, 1, 1], [], []>} : vector<1x16xf32>, vector<16x32xf32>, vector<1x32xf32> -> vector<1x32xf32>
    %cst_125 = arith.constant dense<0.000000e+00> : vector<1x32xf32>
    %269 = tpu.matmul %267, %235, %cst_125 {dimension_numbers = #tpu.dot_dimension_numbers<[1], [0], [0], [1], [0, 0, 1, 1], [], []>} : vector<1x16xf32>, vector<16x32xf32>, vector<1x32xf32> -> vector<1x32xf32>
    %270 = arith.mulf %229, %229 : vector<1x16xf32>
    %cst_126 = arith.constant dense<0.000000e+00> : vector<1xf32>
    %271 = vector.multi_reduction <add>, %270, %cst_126 [1] : vector<1x16xf32> to vector<1xf32>
    %272 = vector.shape_cast %271 : vector<1xf32> to vector<1x1xf32>
    %cst_127 = arith.constant 1.600000e+01 : f32
    %273 = vector.broadcast %cst_127 : f32 to vector<1x1xf32>
    %274 = arith.divf %272, %273 : vector<1x1xf32>
    %cst_128 = arith.constant 9.99999974E-6 : f32
    %275 = vector.broadcast %cst_128 : f32 to vector<1x1xf32>
    %276 = arith.addf %274, %275 : vector<1x1xf32>
    %277 = math.rsqrt %276 : vector<1x1xf32>
    %278 = vector.broadcast %277 : vector<1x1xf32> to vector<1x16xf32>
    %279 = arith.mulf %229, %278 : vector<1x16xf32>
    %280 = arith.mulf %279, %231 : vector<1x16xf32>
    %cst_129 = arith.constant dense<0.000000e+00> : vector<1x32xf32>
    %281 = tpu.matmul %280, %233, %cst_129 {dimension_numbers = #tpu.dot_dimension_numbers<[1], [0], [0], [1], [0, 0, 1, 1], [], []>} : vector<1x16xf32>, vector<16x32xf32>, vector<1x32xf32> -> vector<1x32xf32>
    %cst_130 = arith.constant dense<0.000000e+00> : vector<1x32xf32>
    %282 = tpu.matmul %280, %235, %cst_130 {dimension_numbers = #tpu.dot_dimension_numbers<[1], [0], [0], [1], [0, 0, 1, 1], [], []>} : vector<1x16xf32>, vector<16x32xf32>, vector<1x32xf32> -> vector<1x32xf32>
    %283 = vector.extract_strided_slice %237 {offsets = [3, 0], sizes = [1, 32], strides = [1, 1]} : vector<4x32xf32> to vector<1x32xf32>
    %284 = arith.mulf %268, %283 : vector<1x32xf32>
    %285 = arith.addf %284, %239 : vector<1x32xf32>
    %cst_131 = arith.constant 5.000000e-01 : f32
    %286 = vector.broadcast %cst_131 : f32 to vector<1x32xf32>
    %287 = arith.mulf %286, %285 : vector<1x32xf32>
    %288 = math.tanh %287 : vector<1x32xf32>
    %cst_132 = arith.constant 1.000000e+00 : f32
    %289 = vector.broadcast %cst_132 : f32 to vector<1x32xf32>
    %290 = arith.addf %288, %289 : vector<1x32xf32>
    %cst_133 = arith.constant 5.000000e-01 : f32
    %291 = vector.broadcast %cst_133 : f32 to vector<1x32xf32>
    %292 = arith.mulf %291, %290 : vector<1x32xf32>
    %293 = arith.mulf %285, %292 : vector<1x32xf32>
    %cst_134 = arith.constant dense<0.000000e+00> : vector<1x32xf32>
    %294 = tpu.matmul %293, %241, %cst_134 {dimension_numbers = #tpu.dot_dimension_numbers<[1], [0], [0], [1], [0, 0, 1, 1], [], []>} : vector<1x32xf32>, vector<32x32xf32>, vector<1x32xf32> -> vector<1x32xf32>
    %295 = arith.addf %294, %243 : vector<1x32xf32>
    %cst_135 = arith.constant 2.000000e+01 : f32
    %296 = vector.broadcast %cst_135 : f32 to vector<1x32xf32>
    %297 = arith.cmpf ogt, %295, %296 : vector<1x32xf32>
    %cst_136 = arith.constant 2.000000e+01 : f32
    %298 = vector.broadcast %cst_136 : f32 to vector<1x32xf32>
    %299 = arith.minimumf %295, %298 : vector<1x32xf32>
    %300 = math.exp %299 : vector<1x32xf32>
    %cst_137 = arith.constant 1.000000e+00 : f32
    %301 = vector.broadcast %cst_137 : f32 to vector<1x32xf32>
    %302 = arith.addf %301, %300 : vector<1x32xf32>
    %303 = math.log %302 : vector<1x32xf32>
    %304 = arith.select %297, %295, %303 : vector<1x32xi1>, vector<1x32xf32>
    %cst_138 = arith.constant dense<0.000000e+00> : vector<1x16xf32>
    %305 = tpu.matmul %293, %247, %cst_138 {dimension_numbers = #tpu.dot_dimension_numbers<[1], [0], [0], [1], [0, 0, 1, 1], [], []>} : vector<1x32xf32>, vector<32x16xf32>, vector<1x16xf32> -> vector<1x16xf32>
    %cst_139 = arith.constant dense<0.000000e+00> : vector<1x16xf32>
    %306 = tpu.matmul %293, %249, %cst_139 {dimension_numbers = #tpu.dot_dimension_numbers<[1], [0], [0], [1], [0, 0, 1, 1], [], []>} : vector<1x32xf32>, vector<32x16xf32>, vector<1x16xf32> -> vector<1x16xf32>
    %307 = arith.mulf %304, %293 : vector<1x32xf32>
    %cst_140 = arith.constant dense<0.000000e+00> : vector<1x512xf32>
    %308 = tpu.matmul %307, %253, %cst_140 {dimension_numbers = #tpu.dot_dimension_numbers<[1], [0], [0], [1], [0, 0, 1, 1], [], []>} : vector<1x32xf32>, vector<32x512xf32>, vector<1x512xf32> -> vector<1x512xf32>
    %cst_141 = arith.constant dense<0.000000e+00> : vector<1x512xf32>
    %309 = tpu.matmul %305, %254, %cst_141 {dimension_numbers = #tpu.dot_dimension_numbers<[1], [0], [0], [1], [0, 0, 1, 1], [], []>} : vector<1x16xf32>, vector<16x512xf32>, vector<1x512xf32> -> vector<1x512xf32>
    %310 = arith.mulf %308, %309 : vector<1x512xf32>
    %cst_142 = arith.constant dense<0.000000e+00> : vector<1x512xf32>
    %311 = tpu.matmul %306, %254, %cst_142 {dimension_numbers = #tpu.dot_dimension_numbers<[1], [0], [0], [1], [0, 0, 1, 1], [], []>} : vector<1x16xf32>, vector<16x512xf32>, vector<1x512xf32> -> vector<1x512xf32>
    %312 = arith.mulf %310, %311 : vector<1x512xf32>
    %cst_143 = arith.constant dense<0.000000e+00> : vector<1x32xf32>
    %313 = tpu.matmul %312, %256, %cst_143 {dimension_numbers = #tpu.dot_dimension_numbers<[1], [0], [0], [1], [0, 0, 1, 1], [], []>} : vector<1x512xf32>, vector<512x32xf32>, vector<1x32xf32> -> vector<1x32xf32>
    %314 = arith.mulf %245, %293 : vector<1x32xf32>
    %315 = arith.addf %313, %314 : vector<1x32xf32>
    %cst_144 = arith.constant 5.000000e-01 : f32
    %316 = vector.broadcast %cst_144 : f32 to vector<1x32xf32>
    %317 = arith.mulf %316, %269 : vector<1x32xf32>
    %318 = math.tanh %317 : vector<1x32xf32>
    %cst_145 = arith.constant 1.000000e+00 : f32
    %319 = vector.broadcast %cst_145 : f32 to vector<1x32xf32>
    %320 = arith.addf %318, %319 : vector<1x32xf32>
    %cst_146 = arith.constant 5.000000e-01 : f32
    %321 = vector.broadcast %cst_146 : f32 to vector<1x32xf32>
    %322 = arith.mulf %321, %320 : vector<1x32xf32>
    %323 = arith.mulf %269, %322 : vector<1x32xf32>
    %324 = arith.mulf %315, %323 : vector<1x32xf32>
    %cst_147 = arith.constant dense<0.000000e+00> : vector<1x16xf32>
    %325 = tpu.matmul %324, %251, %cst_147 {dimension_numbers = #tpu.dot_dimension_numbers<[1], [0], [0], [1], [0, 0, 1, 1], [], []>} : vector<1x32xf32>, vector<32x16xf32>, vector<1x16xf32> -> vector<1x16xf32>
    %326 = arith.addf %177, %325 : vector<1x16xf32>
    %327 = vector.extract_strided_slice %237 {offsets = [3, 0], sizes = [1, 32], strides = [1, 1]} : vector<4x32xf32> to vector<1x32xf32>
    %328 = arith.mulf %281, %327 : vector<1x32xf32>
    %329 = arith.addf %328, %239 : vector<1x32xf32>
    %330 = vector.extract_strided_slice %237 {offsets = [2, 0], sizes = [1, 32], strides = [1, 1]} : vector<4x32xf32> to vector<1x32xf32>
    %331 = arith.mulf %268, %330 : vector<1x32xf32>
    %332 = arith.addf %329, %331 : vector<1x32xf32>
    %cst_148 = arith.constant 5.000000e-01 : f32
    %333 = vector.broadcast %cst_148 : f32 to vector<1x32xf32>
    %334 = arith.mulf %333, %332 : vector<1x32xf32>
    %335 = math.tanh %334 : vector<1x32xf32>
    %cst_149 = arith.constant 1.000000e+00 : f32
    %336 = vector.broadcast %cst_149 : f32 to vector<1x32xf32>
    %337 = arith.addf %335, %336 : vector<1x32xf32>
    %cst_150 = arith.constant 5.000000e-01 : f32
    %338 = vector.broadcast %cst_150 : f32 to vector<1x32xf32>
    %339 = arith.mulf %338, %337 : vector<1x32xf32>
    %340 = arith.mulf %332, %339 : vector<1x32xf32>
    %cst_151 = arith.constant dense<0.000000e+00> : vector<1x32xf32>
    %341 = tpu.matmul %340, %241, %cst_151 {dimension_numbers = #tpu.dot_dimension_numbers<[1], [0], [0], [1], [0, 0, 1, 1], [], []>} : vector<1x32xf32>, vector<32x32xf32>, vector<1x32xf32> -> vector<1x32xf32>
    %342 = arith.addf %341, %243 : vector<1x32xf32>
    %cst_152 = arith.constant 2.000000e+01 : f32
    %343 = vector.broadcast %cst_152 : f32 to vector<1x32xf32>
    %344 = arith.cmpf ogt, %342, %343 : vector<1x32xf32>
    %cst_153 = arith.constant 2.000000e+01 : f32
    %345 = vector.broadcast %cst_153 : f32 to vector<1x32xf32>
    %346 = arith.minimumf %342, %345 : vector<1x32xf32>
    %347 = math.exp %346 : vector<1x32xf32>
    %cst_154 = arith.constant 1.000000e+00 : f32
    %348 = vector.broadcast %cst_154 : f32 to vector<1x32xf32>
    %349 = arith.addf %348, %347 : vector<1x32xf32>
    %350 = math.log %349 : vector<1x32xf32>
    %351 = arith.select %344, %342, %350 : vector<1x32xi1>, vector<1x32xf32>
    %cst_155 = arith.constant dense<0.000000e+00> : vector<1x16xf32>
    %352 = tpu.matmul %340, %247, %cst_155 {dimension_numbers = #tpu.dot_dimension_numbers<[1], [0], [0], [1], [0, 0, 1, 1], [], []>} : vector<1x32xf32>, vector<32x16xf32>, vector<1x16xf32> -> vector<1x16xf32>
    %cst_156 = arith.constant dense<0.000000e+00> : vector<1x16xf32>
    %353 = tpu.matmul %340, %249, %cst_156 {dimension_numbers = #tpu.dot_dimension_numbers<[1], [0], [0], [1], [0, 0, 1, 1], [], []>} : vector<1x32xf32>, vector<32x16xf32>, vector<1x16xf32> -> vector<1x16xf32>
    %354 = arith.mulf %351, %340 : vector<1x32xf32>
    %cst_157 = arith.constant dense<0.000000e+00> : vector<1x512xf32>
    %355 = tpu.matmul %354, %253, %cst_157 {dimension_numbers = #tpu.dot_dimension_numbers<[1], [0], [0], [1], [0, 0, 1, 1], [], []>} : vector<1x32xf32>, vector<32x512xf32>, vector<1x512xf32> -> vector<1x512xf32>
    %cst_158 = arith.constant dense<0.000000e+00> : vector<1x512xf32>
    %356 = tpu.matmul %352, %254, %cst_158 {dimension_numbers = #tpu.dot_dimension_numbers<[1], [0], [0], [1], [0, 0, 1, 1], [], []>} : vector<1x16xf32>, vector<16x512xf32>, vector<1x512xf32> -> vector<1x512xf32>
    %357 = arith.mulf %355, %356 : vector<1x512xf32>
    %cst_159 = arith.constant dense<0.000000e+00> : vector<1x512xf32>
    %358 = tpu.matmul %351, %253, %cst_159 {dimension_numbers = #tpu.dot_dimension_numbers<[1], [0], [0], [1], [0, 0, 1, 1], [], []>} : vector<1x32xf32>, vector<32x512xf32>, vector<1x512xf32> -> vector<1x512xf32>
    %359 = arith.mulf %358, %252 : vector<1x512xf32>
    %360 = math.exp %359 : vector<1x512xf32>
    %361 = arith.mulf %360, %310 : vector<1x512xf32>
    %362 = arith.addf %361, %357 : vector<1x512xf32>
    %cst_160 = arith.constant dense<0.000000e+00> : vector<1x512xf32>
    %363 = tpu.matmul %353, %254, %cst_160 {dimension_numbers = #tpu.dot_dimension_numbers<[1], [0], [0], [1], [0, 0, 1, 1], [], []>} : vector<1x16xf32>, vector<16x512xf32>, vector<1x512xf32> -> vector<1x512xf32>
    %364 = arith.mulf %362, %363 : vector<1x512xf32>
    %cst_161 = arith.constant dense<0.000000e+00> : vector<1x32xf32>
    %365 = tpu.matmul %364, %256, %cst_161 {dimension_numbers = #tpu.dot_dimension_numbers<[1], [0], [0], [1], [0, 0, 1, 1], [], []>} : vector<1x512xf32>, vector<512x32xf32>, vector<1x32xf32> -> vector<1x32xf32>
    %366 = arith.mulf %245, %340 : vector<1x32xf32>
    %367 = arith.addf %365, %366 : vector<1x32xf32>
    %cst_162 = arith.constant 5.000000e-01 : f32
    %368 = vector.broadcast %cst_162 : f32 to vector<1x32xf32>
    %369 = arith.mulf %368, %282 : vector<1x32xf32>
    %370 = math.tanh %369 : vector<1x32xf32>
    %cst_163 = arith.constant 1.000000e+00 : f32
    %371 = vector.broadcast %cst_163 : f32 to vector<1x32xf32>
    %372 = arith.addf %370, %371 : vector<1x32xf32>
    %cst_164 = arith.constant 5.000000e-01 : f32
    %373 = vector.broadcast %cst_164 : f32 to vector<1x32xf32>
    %374 = arith.mulf %373, %372 : vector<1x32xf32>
    %375 = arith.mulf %282, %374 : vector<1x32xf32>
    %376 = arith.mulf %367, %375 : vector<1x32xf32>
    %cst_165 = arith.constant dense<0.000000e+00> : vector<1x16xf32>
    %377 = tpu.matmul %376, %251, %cst_165 {dimension_numbers = #tpu.dot_dimension_numbers<[1], [0], [0], [1], [0, 0, 1, 1], [], []>} : vector<1x32xf32>, vector<32x16xf32>, vector<1x16xf32> -> vector<1x16xf32>
    %378 = arith.addf %229, %377 : vector<1x16xf32>
    %c50 = arith.constant 50 : index
    %c0_166 = arith.constant 0 : index
    %379 = vector.load %arg3[%c50, %c0_166] : memref<200x512xf32, #tpu.memory_space<vmem>>, vector<32x512xf32>
    %380 = vector.extract_strided_slice %379 {offsets = [0, 0], sizes = [32, 260], strides = [1, 1]} : vector<32x512xf32> to vector<32x260xf32>
    %381 = vector.extract_strided_slice %380 {offsets = [0, 0], sizes = [16, 260], strides = [1, 1]} : vector<32x260xf32> to vector<16x260xf32>
    %cst_167 = arith.constant dense<0.000000e+00> : vector<1x260xf32>
    %382 = tpu.matmul %326, %381, %cst_167 {dimension_numbers = #tpu.dot_dimension_numbers<[1], [0], [0], [1], [0, 0, 1, 1], [], []>} : vector<1x16xf32>, vector<16x260xf32>, vector<1x260xf32> -> vector<1x260xf32>
    %383 = vector.extract_strided_slice %380 {offsets = [16, 0], sizes = [16, 260], strides = [1, 1]} : vector<32x260xf32> to vector<16x260xf32>
    %cst_168 = arith.constant dense<0.000000e+00> : vector<1x260xf32>
    %384 = tpu.matmul %378, %383, %cst_168 {dimension_numbers = #tpu.dot_dimension_numbers<[1], [0], [0], [1], [0, 0, 1, 1], [], []>} : vector<1x16xf32>, vector<16x260xf32>, vector<1x260xf32> -> vector<1x260xf32>
    %385 = arith.addf %382, %384 : vector<1x260xf32>
    %c82 = arith.constant 82 : index
    %c0_169 = arith.constant 0 : index
    %386 = vector.load %arg3[%c82, %c0_169] : memref<200x512xf32, #tpu.memory_space<vmem>>, vector<1x512xf32>
    %387 = vector.extract_strided_slice %386 {offsets = [0, 0], sizes = [1, 260], strides = [1, 1]} : vector<1x512xf32> to vector<1x260xf32>
    %388 = arith.addf %385, %387 : vector<1x260xf32>
    %c1372 = arith.constant 1372 : index
    %c0_170 = arith.constant 0 : index
    %389 = vector.load %arg2[%c1372, %c0_170] : memref<1656x128xf32, #tpu.memory_space<vmem>>, vector<16x128xf32>
    %390 = vector.extract_strided_slice %389 {offsets = [0, 0], sizes = [16, 1], strides = [1, 1]} : vector<16x128xf32> to vector<16x1xf32>
    %cst_171 = arith.constant dense<0.000000e+00> : vector<16x260xf32>
    %391 = tpu.matmul %390, %388, %cst_171 {dimension_numbers = #tpu.dot_dimension_numbers<[1], [0], [0], [1], [0, 0, 1, 1], [], []>} : vector<16x1xf32>, vector<1x260xf32>, vector<16x260xf32> -> vector<16x260xf32>
    %392 = arith.mulf %391, %65 : vector<16x260xf32>
    %c1389 = arith.constant 1389 : index
    %c0_172 = arith.constant 0 : index
    %393 = vector.load %arg2[%c1389, %c0_172] : memref<1656x128xf32, #tpu.memory_space<vmem>>, vector<260x128xf32>
    %394 = vector.extract_strided_slice %393 {offsets = [0, 0], sizes = [260, 20], strides = [1, 1]} : vector<260x128xf32> to vector<260x20xf32>
    %cst_173 = arith.constant dense<0.000000e+00> : vector<16x20xf32>
    %395 = tpu.matmul %392, %394, %cst_173 {dimension_numbers = #tpu.dot_dimension_numbers<[1], [0], [0], [1], [0, 0, 1, 1], [], []>} : vector<16x260xf32>, vector<260x20xf32>, vector<16x20xf32> -> vector<16x20xf32>
    %c1356 = arith.constant 1356 : index
    %c0_174 = arith.constant 0 : index
    %396 = vector.load %arg2[%c1356, %c0_174] : memref<1656x128xf32, #tpu.memory_space<vmem>>, vector<16x128xf32>
    %397 = vector.extract_strided_slice %396 {offsets = [0, 0], sizes = [16, 16], strides = [1, 1]} : vector<16x128xf32> to vector<16x16xf32>
    %cst_175 = arith.constant dense<0.000000e+00> : vector<16x20xf32>
    %398 = tpu.matmul %397, %395, %cst_175 {dimension_numbers = #tpu.dot_dimension_numbers<[1], [0], [0], [1], [0, 0, 1, 1], [], []>} : vector<16x16xf32>, vector<16x20xf32>, vector<16x20xf32> -> vector<16x20xf32>
    %c1299 = arith.constant 1299 : index
    %c0_176 = arith.constant 0 : index
    %399 = vector.load %arg2[%c1299, %c0_176] : memref<1656x128xf32, #tpu.memory_space<vmem>>, vector<20x128xf32>
    %400 = vector.extract_strided_slice %399 {offsets = [0, 0], sizes = [20, 40], strides = [1, 1]} : vector<20x128xf32> to vector<20x40xf32>
    %cst_177 = arith.constant dense<0.000000e+00> : vector<16x40xf32>
    %401 = tpu.matmul %395, %400, %cst_177 {dimension_numbers = #tpu.dot_dimension_numbers<[1], [0], [0], [1], [0, 0, 1, 1], [], []>} : vector<16x20xf32>, vector<20x40xf32>, vector<16x40xf32> -> vector<16x40xf32>
    %c1319 = arith.constant 1319 : index
    %c0_178 = arith.constant 0 : index
    %402 = vector.load %arg2[%c1319, %c0_178] : memref<1656x128xf32, #tpu.memory_space<vmem>>, vector<20x128xf32>
    %403 = vector.extract_strided_slice %402 {offsets = [0, 0], sizes = [20, 40], strides = [1, 1]} : vector<20x128xf32> to vector<20x40xf32>
    %cst_179 = arith.constant dense<0.000000e+00> : vector<16x40xf32>
    %404 = tpu.matmul %398, %403, %cst_179 {dimension_numbers = #tpu.dot_dimension_numbers<[1], [0], [0], [1], [0, 0, 1, 1], [], []>} : vector<16x20xf32>, vector<20x40xf32>, vector<16x40xf32> -> vector<16x40xf32>
    %405 = arith.addf %401, %404 : vector<16x40xf32>
    %c1339 = arith.constant 1339 : index
    %c0_180 = arith.constant 0 : index
    %406 = vector.load %arg2[%c1339, %c0_180] : memref<1656x128xf32, #tpu.memory_space<vmem>>, vector<1x128xf32>
    %407 = vector.extract_strided_slice %406 {offsets = [0, 0], sizes = [1, 40], strides = [1, 1]} : vector<1x128xf32> to vector<1x40xf32>
    %408 = vector.broadcast %407 : vector<1x40xf32> to vector<16x40xf32>
    %409 = arith.addf %405, %408 : vector<16x40xf32>
    %cst_181 = arith.constant 0.000000e+00 : f32
    %410 = vector.broadcast %cst_181 : f32 to vector<16x40xf32>
    %411 = arith.maximumf %409, %410 : vector<16x40xf32>
    %cst_182 = arith.constant dense<0.000000e+00> : vector<16x40xf32>
    %412 = tpu.matmul %397, %411, %cst_182 {dimension_numbers = #tpu.dot_dimension_numbers<[1], [0], [0], [1], [0, 0, 1, 1], [], []>} : vector<16x16xf32>, vector<16x40xf32>, vector<16x40xf32> -> vector<16x40xf32>
    %c83 = arith.constant 83 : index
    %c0_183 = arith.constant 0 : index
    %413 = vector.load %arg3[%c83, %c0_183] : memref<200x512xf32, #tpu.memory_space<vmem>>, vector<40x512xf32>
    %414 = vector.extract_strided_slice %413 {offsets = [0, 0], sizes = [40, 384], strides = [1, 1]} : vector<40x512xf32> to vector<40x384xf32>
    %cst_184 = arith.constant dense<0.000000e+00> : vector<16x384xf32>
    %415 = tpu.matmul %411, %414, %cst_184 {dimension_numbers = #tpu.dot_dimension_numbers<[1], [0], [0], [1], [0, 0, 1, 1], [], []>} : vector<16x40xf32>, vector<40x384xf32>, vector<16x384xf32> -> vector<16x384xf32>
    %c123 = arith.constant 123 : index
    %c0_185 = arith.constant 0 : index
    %416 = vector.load %arg3[%c123, %c0_185] : memref<200x512xf32, #tpu.memory_space<vmem>>, vector<40x512xf32>
    %417 = vector.extract_strided_slice %416 {offsets = [0, 0], sizes = [40, 384], strides = [1, 1]} : vector<40x512xf32> to vector<40x384xf32>
    %cst_186 = arith.constant dense<0.000000e+00> : vector<16x384xf32>
    %418 = tpu.matmul %412, %417, %cst_186 {dimension_numbers = #tpu.dot_dimension_numbers<[1], [0], [0], [1], [0, 0, 1, 1], [], []>} : vector<16x40xf32>, vector<40x384xf32>, vector<16x384xf32> -> vector<16x384xf32>
    %419 = arith.addf %415, %418 : vector<16x384xf32>
    %c163 = arith.constant 163 : index
    %c0_187 = arith.constant 0 : index
    %420 = vector.load %arg3[%c163, %c0_187] : memref<200x512xf32, #tpu.memory_space<vmem>>, vector<1x512xf32>
    %421 = vector.extract_strided_slice %420 {offsets = [0, 0], sizes = [1, 384], strides = [1, 1]} : vector<1x512xf32> to vector<1x384xf32>
    %422 = vector.broadcast %421 : vector<1x384xf32> to vector<16x384xf32>
    %423 = arith.addf %419, %422 : vector<16x384xf32>
    %cst_188 = arith.constant 0.000000e+00 : f32
    %424 = vector.broadcast %cst_188 : f32 to vector<16x384xf32>
    %425 = arith.maximumf %423, %424 : vector<16x384xf32>
    %c0_189 = arith.constant 0 : index
    %c0_190 = arith.constant 0 : index
    %426 = vector.load %arg4[%c0_189, %c0_190] : memref<16x384xf32, #tpu.memory_space<vmem>>, vector<16x384xf32>
    tpu.vector_store %arg4[%c0_189, %c0_190], %425 {strides = array<i32>} : memref<16x384xf32, #tpu.memory_space<vmem>>, vector<16x384xf32>,
    return
  }
  func.func @transform_0(%arg0: i32) -> (i32, i32) {
    %c0_i32 = arith.constant 0 : i32
    %c0_i32_0 = arith.constant 0 : i32
    return %arg0, %c0_i32 : i32, i32
  }
  func.func @transform_1(%arg0: i32) -> (i32, i32) {
    %c0_i32 = arith.constant 0 : i32
    %c0_i32_0 = arith.constant 0 : i32
    %c0_i32_1 = arith.constant 0 : i32
    return %c0_i32, %c0_i32_0 : i32, i32
  }
  func.func @transform_2(%arg0: i32) -> (i32, i32) {
    %c0_i32 = arith.constant 0 : i32
    %c0_i32_0 = arith.constant 0 : i32
    %c0_i32_1 = arith.constant 0 : i32
    return %c0_i32, %c0_i32_0 : i32, i32
  }
  func.func @transform_3(%arg0: i32) -> (i32, i32) {
    %c0_i32 = arith.constant 0 : i32
    %c0_i32_0 = arith.constant 0 : i32
    return %arg0, %c0_i32 : i32, i32
  }
}

</mosaic_0001>

<llo_original>
// kernel: mamba_forward.1
$region0: #{mamba_forward.1}
  #allocation0 [shape = 'u32[]', space=smem, size = 0x4, offset = 0x4, fixed_abs, tag = 'smem constant byte address 0x4 - core index']
  #allocation1 [shape = 'u32[72,128]{1,0:T(1,128)}', space=vmem, size = 0x9000, scoped, tag = 'internal scratch']
  %s0 = inlined_call_operand.vmem [shape: f32[128,128], index: 0, kind: input, shape index: {}]
  %s1 = inlined_call_operand.vmem [shape: f32[1656,128], index: 1, kind: input, shape index: {}]
  %s2 = inlined_call_operand.vmem [shape: f32[200,512], index: 2, kind: input, shape index: {}]
  %s3 = inlined_call_operand.vmem [shape: f32[32,384], index: 3, kind: output, shape index: {}]
  %s4 = sld [smem:[#allocation0]]
  $region45: #{mamba_forward.1} parent=0
    _
  %s6 = ssub.s32 1, %s4
  %s7 = scalar_select 0, %s6, %s4
  loop: start=0, step=1, limit=4
  $region2: #{mamba_forward.1} parent=0 // loop_pre_header
    _
  $region3: #{mamba_forward.1} parent=0 // loop_header
    %s9 = sphi 0, %s13
    %p10 = scmp.ge.s32.totalorder %s9, 4
    %s19 = sphi 0, %s21
    %s22 = sphi 0, %s19
    %s23 = sphi 0, %s22
    %s39 = sphi 0, %s23
    %s43 = sphi 0, %s43
    %s45 = sphi 0, %s43
    %s46 = sphi 0, %s45
    %s60 = sphi 0, %s46
    %s64 = sphi 0, %s64
    %s66 = sphi 0, %s64
    %s67 = sphi 0, %s66
    %s81 = sphi 0, %s67
    %s87 = sphi 0, %s89
    %s90 = sphi 0, %s87
    %s91 = sphi 0, %s90
    %s107 = sphi 0, %s91
  $region4: #{mamba_forward.1} parent=0 // loop_header_branch
    %12 = sbr.rel (%p10) target = $region8
  $region5: #{mamba_forward.1} parent=0 // loop_body
    %s14 = ssub.s32 %s9, 1
    %s15 = ssub.s32 %s9, 2
    %s16 = sadd.s32 %s9, 1
    %s17 = ssub.s32 %s9, %s16
    %p18 = scmp.eq.s32.totalorder %s17, 0
    %s20 = sadd.s32 %s19, 1
    %s21 = scalar_select %p18, %s19, %s20
    %p24 = pneg %p18
    %p25 = scmp.eq.s32.totalorder %s9, 1
    %p26 = por %p24, %p25
    %p27 = scmp.ne.s32.totalorder %s19, %s22
    %p28 = scmp.eq.s32.totalorder %s9, 0
    %p29 = por %p27, %p28
    %p30 = scmp.ne.s32.totalorder %s19, %s22
    %p31 = scmp.eq.s32.totalorder %s14, 1
    %p32 = por %p30, %p31
    %p33 = scmp.ne.s32.totalorder %s22, %s23
    %p34 = scmp.eq.s32.totalorder %s14, 0
    %p35 = por %p33, %p34
    %p36 = scmp.ne.s32.totalorder %s22, %s23
    %p37 = scmp.eq.s32.totalorder %s15, 1
    %p38 = por %p36, %p37
    %p40 = scmp.ne.s32.totalorder %s23, %s39
    %p41 = scmp.eq.s32.totalorder %s15, 0
    %p42 = por %p40, %p41
    %s44 = sadd.s32 %s43, 1
    %p47 = scmp.eq.s32.totalorder %s9, 1
    %p48 = scmp.ne.s32.totalorder %s43, %s45
    %p49 = scmp.eq.s32.totalorder %s9, 0
    %p50 = por %p48, %p49
    %p51 = scmp.ne.s32.totalorder %s43, %s45
    %p52 = scmp.eq.s32.totalorder %s14, 1
    %p53 = por %p51, %p52
    %p54 = scmp.ne.s32.totalorder %s45, %s46
    %p55 = scmp.eq.s32.totalorder %s14, 0
    %p56 = por %p54, %p55
    %p57 = scmp.ne.s32.totalorder %s45, %s46
    %p58 = scmp.eq.s32.totalorder %s15, 1
    %p59 = por %p57, %p58
    %p61 = scmp.ne.s32.totalorder %s46, %s60
    %p62 = scmp.eq.s32.totalorder %s15, 0
    %p63 = por %p61, %p62
    %s65 = sadd.s32 %s64, 1
    %p68 = scmp.eq.s32.totalorder %s9, 1
    %p69 = scmp.ne.s32.totalorder %s64, %s66
    %p70 = scmp.eq.s32.totalorder %s9, 0
    %p71 = por %p69, %p70
    %p72 = scmp.ne.s32.totalorder %s64, %s66
    %p73 = scmp.eq.s32.totalorder %s14, 1
    %p74 = por %p72, %p73
    %p75 = scmp.ne.s32.totalorder %s66, %s67
    %p76 = scmp.eq.s32.totalorder %s14, 0
    %p77 = por %p75, %p76
    %p78 = scmp.ne.s32.totalorder %s66, %s67
    %p79 = scmp.eq.s32.totalorder %s15, 1
    %p80 = por %p78, %p79
    %p82 = scmp.ne.s32.totalorder %s67, %s81
    %p83 = scmp.eq.s32.totalorder %s15, 0
    %p84 = por %p82, %p83
    %s85 = ssub.s32 %s9, %s16
    %p86 = scmp.eq.s32.totalorder %s85, 0
    %s88 = sadd.s32 %s87, 1
    %s89 = scalar_select %p86, %s87, %s88
    %p92 = pneg %p86
    %p93 = scmp.eq.s32.totalorder %s9, 1
    %p94 = por %p92, %p93
    %p95 = scmp.ne.s32.totalorder %s87, %s90
    %p96 = scmp.eq.s32.totalorder %s9, 0
    %p97 = por %p95, %p96
    %p98 = scmp.ne.s32.totalorder %s87, %s90
    %p99 = scmp.eq.s32.totalorder %s14, 1
    %p100 = por %p98, %p99
    %p101 = scmp.ne.s32.totalorder %s90, %s91
    %p102 = scmp.eq.s32.totalorder %s14, 0
    %p103 = por %p101, %p102
    %p104 = scmp.ne.s32.totalorder %s90, %s91
    %p105 = scmp.eq.s32.totalorder %s15, 1
    %p106 = por %p104, %p105
    %p108 = scmp.ne.s32.totalorder %s91, %s107
    %p109 = scmp.eq.s32.totalorder %s15, 0
    %p110 = por %p108, %p109
    %p111 = scmp.le.s32.totalorder 1, %s9
    %p112 = scmp.lt.s32.totalorder %s9, 3
    %p113 = pnand %p111, %p112
    %p114 = pneg %p113
    // Predicated region
    $region9: #{mamba_forward.1} parent=5 // pred_check
      _
    $region10: #{mamba_forward.1} parent=5 // pred_check_branch
      %116 = sbr.rel (%p113) target = $region12
    $region11: #{mamba_forward.1} parent=5 // pred_region
      %s117 = ssub.s32 %s9, 1
      // Predicated region
      $region13: #{mamba_forward.1} parent=11 // pred_check
        %p118 = pneg %p56
      $region14: #{mamba_forward.1} parent=11 // pred_check_branch
        %120 = sbr.rel (%p118) target = $region16
      $region15: #{mamba_forward.1} parent=11 // pred_region
        _
      $region16: #{mamba_forward.1} parent=11 // pred_fallthru
        _
      // Predicated region
      $region17: #{mamba_forward.1} parent=11 // pred_check
        %p121 = pneg %p77
      $region18: #{mamba_forward.1} parent=11 // pred_check_branch
        %123 = sbr.rel (%p121) target = $region20
      $region19: #{mamba_forward.1} parent=11 // pred_region
        _
      $region20: #{mamba_forward.1} parent=11 // pred_fallthru
        _
    $region12: #{mamba_forward.1} parent=5 // pred_fallthru
      _
    %p124 = scmp.lt.s32.totalorder %s9, 2
    // Predicated region
    $region21: #{mamba_forward.1} parent=5 // pred_check
      %p125 = pneg %p124
    $region22: #{mamba_forward.1} parent=5 // pred_check_branch
      %127 = sbr.rel (%p125) target = $region24
    $region23: #{mamba_forward.1} parent=5 // pred_region
      // Predicated region
      $region25: #{mamba_forward.1} parent=23 // pred_check
        %p128 = pneg %p29
      $region26: #{mamba_forward.1} parent=23 // pred_check_branch
        %130 = sbr.rel (%p128) target = $region28
      $region27: #{mamba_forward.1} parent=23 // pred_region
        %s131 = smul.u32 8, %s9
        %p132 = scmp.lt.s32.totalorder %s131, 15
        %s133 = scalar_select %p132, %s131, 15
        %s134 = smul.addr %s133, 8
        %s135 = scalar_lea.vmem %s0, %s134
        %s136 = smul.u32 8, %s9
      $region28: #{mamba_forward.1} parent=23 // pred_fallthru
        _
    $region24: #{mamba_forward.1} parent=5 // pred_fallthru
      _
    %p137 = scmp.le.s32.totalorder 1, %s9
    %p138 = scmp.lt.s32.totalorder %s9, 3
    %p139 = pnand %p137, %p138
    %p140 = pneg %p139
    // Predicated region
    $region29: #{mamba_forward.1} parent=5 // pred_check
      _
    $region30: #{mamba_forward.1} parent=5 // pred_check_branch
      %142 = sbr.rel (%p139) target = $region32
    $region31: #{mamba_forward.1} parent=5 // pred_region
      %s143 = ssub.s32 %s9, 1
      %s144 = smul.u32 8, %s14
      %p145 = scmp.lt.s32.totalorder %s144, 15
      %s146 = scalar_select %p145, %s144, 15
      %s147 = smul.addr %s146, 8
      %s148 = scalar_lea.vmem %s0, %s147
      %p149 = pneg %p35
      %p150 = pneg %p32
      %p151 = pneg %p56
      %p152 = pneg %p53
      %p153 = pneg %p77
      %p154 = pneg %p74
      %p155 = pneg %p103
      %p156 = pneg %p100
      %s157 = smul.u32 2, %s14
      %p158 = scmp.lt.s32.totalorder %s157, 3
      %s159 = scalar_select %p158, %s157, 3
      %s160 = smul.addr %s159, 3
      %s161 = smul.addr %s160, 8
      %s162 = scalar_lea.vmem %s3, %s161
      %s163 = smul.u32 8, %s14
      %p164 = scmp.lt.s32.totalorder %s163, 15
      %s165 = scalar_select %p164, %s163, 15
      %s166 = smul.addr %s165, 8
      %s167 = scalar_lea.vmem %s0, %s166
      %s168 = smul.u32 8, %s14
      %s169 = smul.u32 2, %s14
      %p170 = scmp.lt.s32.totalorder %s169, 3
      %s171 = scalar_select %p170, %s169, 3
      %s172 = smul.addr %s171, 3
      %s173 = smul.addr %s172, 8
      %s174 = scalar_lea.vmem %s3, %s173
      %s175 = smul.u32 2, %s14
      %v176 = vld [vmem:[%s1] sm:$0xff]
      %v177 = vld [vmem:[%s1 + $0x8] sm:$0xff]
      %v178 = vld [vmem:[%s1 + $0x10] sm:$0xff]
      %v179 = vld [vmem:[%s1 + $0x18] sm:$0xff]
      %v180 = vld [vmem:[%s1 + $0x20] sm:$0xff]
      %v181 = vld [vmem:[%s1 + $0x28] sm:$0xff]
      %v182 = vld [vmem:[%s1 + $0x30] sm:$0xff]
      %v183 = vld [vmem:[%s1 + $0x38] sm:$0xff]
      %v184 = vld [vmem:[%s1 + $0x40] sm:$0xff]
      %v185 = vld [vmem:[%s1 + $0x48] sm:$0xff]
      %v186 = vld [vmem:[%s1 + $0x50] sm:$0xff]
      %v187 = vld [vmem:[%s1 + $0x58] sm:$0xff]
      %v188 = vld [vmem:[%s1 + $0x60] sm:$0xff]
      %v189 = vld [vmem:[%s1 + $0x68] sm:$0xff]
      %v190 = vld [vmem:[%s1 + $0x70] sm:$0xff]
      %v191 = vld [vmem:[%s1 + $0x78] sm:$0xff]
      %v192 = vld [vmem:[%s1 + $0x80] sm:$0x1]
      %v193 = vld [vmem:[%s167] sm:$0xff]
      %v194 = vld [vmem:[%s167 + $0x8] sm:$0xff]
      %v195 = vperm.slane %v192, 0
      %196 = vmatpush.msra.mxu0 %v191
      %197 = vmatpush.msra.mxu0 %v190
      %198 = vmatpush.msra.mxu0 %v189
      %199 = vmatpush.msra.mxu0 %v188
      %200 = vmatpush.msra.mxu0 %v187
      %201 = vmatpush.msra.mxu0 %v186
      %202 = vmatpush.msra.mxu0 %v185
      %203 = vmatpush.msra.mxu0 %v184
      %204 = vmatpush.msra.mxu0 %v183
      %205 = vmatpush.msra.mxu0 %v182
      %206 = vmatpush.msra.mxu0 %v181
      %207 = vmatpush.msra.mxu0 %v180
      %208 = vmatpush.msra.mxu0 %v179
      %209 = vmatpush.msra.mxu0 %v178
      %210 = vmatpush.msra.mxu0 %v177
      %211 = vmatpush.msra.mxu0 %v176
      %212 = vmatmul.f32.gmra.mxu0 %v193
      %v213 = vpop.f32.mrf.mxu0
      %v214 = vadd.f32 %v195, %v213
      %215 = vmatmul.f32.gmra.mxu0 %v194
      %v216 = vpop.f32.mrf.mxu0
      %v217 = vadd.f32 %v195, %v216
      %218 = vdwg.mxu0
      %v219 = vmax.f32 %v214, 0.0
      %v220 = vmax.f32 %v217, 0.0
      %v221 = vld [vmem:[%s167 + $0x10] sm:$0xff]
      %v222 = vld [vmem:[%s167 + $0x18] sm:$0xff]
      %223 = vmatpush.msra.mxu0 %v191
      %224 = vmatpush.msra.mxu0 %v190
      %225 = vmatpush.msra.mxu0 %v189
      %226 = vmatpush.msra.mxu0 %v188
      %227 = vmatpush.msra.mxu0 %v187
      %228 = vmatpush.msra.mxu0 %v186
      %229 = vmatpush.msra.mxu0 %v185
      %230 = vmatpush.msra.mxu0 %v184
      %231 = vmatpush.msra.mxu0 %v183
      %232 = vmatpush.msra.mxu0 %v182
      %233 = vmatpush.msra.mxu0 %v181
      %234 = vmatpush.msra.mxu0 %v180
      %235 = vmatpush.msra.mxu0 %v179
      %236 = vmatpush.msra.mxu0 %v178
      %237 = vmatpush.msra.mxu0 %v177
      %238 = vmatpush.msra.mxu0 %v176
      %239 = vmatmul.f32.gmra.mxu0 %v221
      %v240 = vpop.f32.mrf.mxu0
      %v241 = vadd.f32 %v195, %v240
      %242 = vmatmul.f32.gmra.mxu0 %v222
      %v243 = vpop.f32.mrf.mxu0
      %v244 = vadd.f32 %v195, %v243
      %245 = vdwg.mxu0
      %v246 = vmax.f32 %v241, 0.0
      %v247 = vmax.f32 %v244, 0.0
      %v248 = vld [vmem:[%s167 + $0x20] sm:$0xff]
      %v249 = vld [vmem:[%s167 + $0x28] sm:$0xff]
      %250 = vmatpush.msra.mxu0 %v191
      %251 = vmatpush.msra.mxu0 %v190
      %252 = vmatpush.msra.mxu0 %v189
      %253 = vmatpush.msra.mxu0 %v188
      %254 = vmatpush.msra.mxu0 %v187
      %255 = vmatpush.msra.mxu0 %v186
      %256 = vmatpush.msra.mxu0 %v185
      %257 = vmatpush.msra.mxu0 %v184
      %258 = vmatpush.msra.mxu0 %v183
      %259 = vmatpush.msra.mxu0 %v182
      %260 = vmatpush.msra.mxu0 %v181
      %261 = vmatpush.msra.mxu0 %v180
      %262 = vmatpush.msra.mxu0 %v179
      %263 = vmatpush.msra.mxu0 %v178
      %264 = vmatpush.msra.mxu0 %v177
      %265 = vmatpush.msra.mxu0 %v176
      %266 = vmatmul.f32.gmra.mxu0 %v248
      %v267 = vpop.f32.mrf.mxu0
      %v268 = vadd.f32 %v195, %v267
      %269 = vmatmul.f32.gmra.mxu0 %v249
      %v270 = vpop.f32.mrf.mxu0
      %v271 = vadd.f32 %v195, %v270
      %272 = vdwg.mxu0
      %v273 = vmax.f32 %v268, 0.0
      %v274 = vmax.f32 %v271, 0.0
      %v275 = vld [vmem:[%s167 + $0x30] sm:$0xff]
      %v276 = vld [vmem:[%s167 + $0x38] sm:$0xff]
      %277 = vmatpush.msra.mxu0 %v191
      %278 = vmatpush.msra.mxu0 %v190
      %279 = vmatpush.msra.mxu0 %v189
      %280 = vmatpush.msra.mxu0 %v188
      %281 = vmatpush.msra.mxu0 %v187
      %282 = vmatpush.msra.mxu0 %v186
      %283 = vmatpush.msra.mxu0 %v185
      %284 = vmatpush.msra.mxu0 %v184
      %285 = vmatpush.msra.mxu0 %v183
      %286 = vmatpush.msra.mxu0 %v182
      %287 = vmatpush.msra.mxu0 %v181
      %288 = vmatpush.msra.mxu0 %v180
      %289 = vmatpush.msra.mxu0 %v179
      %290 = vmatpush.msra.mxu0 %v178
      %291 = vmatpush.msra.mxu0 %v177
      %292 = vmatpush.msra.mxu0 %v176
      %293 = vmatmul.f32.gmra.mxu0 %v275
      %v294 = vpop.f32.mrf.mxu0
      %v295 = vadd.f32 %v195, %v294
      %296 = vmatmul.f32.gmra.mxu0 %v276
      %v297 = vpop.f32.mrf.mxu0
      %v298 = vadd.f32 %v195, %v297
      %299 = vdwg.mxu0
      %v300 = vmax.f32 %v295, 0.0
      %v301 = vmax.f32 %v298, 0.0
      %v302 = vld [vmem:[%s1 + $0x53c] sm:$0xff]
      %v303 = vld [vmem:[%s1 + $0x544] sm:$0xff]
      %v304 = vld [vmem:[%s1 + $0xbd] sm:$0x1]
      %vm305 = vcmask 130048
      %v307 = vsel %vm305, %v302, 0
      %v310 = vsel %vm305, %v303, 0
      %312 = vmatpush.msra.mxu0 0.0
      %313 = vmatpush.msra.mxu0 0.0
      %314 = vmatpush.msra.mxu0 0.0
      %315 = vmatpush.msra.mxu0 0.0
      %316 = vmatpush.msra.mxu0 0.0
      %317 = vmatpush.msra.mxu0 0.0
      %318 = vmatpush.msra.mxu0 0.0
      %319 = vmatpush.msra.mxu0 0.0
      %320 = vmatpush.msra.mxu0 0.0
      %321 = vmatpush.msra.mxu0 0.0
      %322 = vmatpush.msra.mxu0 0.0
      %323 = vmatpush.msra.mxu0 0.0
      %324 = vmatpush.msra.mxu0 0.0
      %325 = vmatpush.msra.mxu0 0.0
      %326 = vmatpush.msra.mxu0 %v301
      %327 = vmatpush.msra.mxu0 %v300
      %328 = vmatmul.f32.gmra.mxu0 %v307
      %v329 = vpop.f32.mrf.mxu0
      %v330 = vadd.f32 0.0, %v329
      %331 = vmatmul.f32.gmra.mxu0 %v310
      %v332 = vpop.f32.mrf.mxu0
      %v333 = vadd.f32 0.0, %v332
      %334 = vdwg.mxu0
      %v335 = vld [vmem:[%s1 + $0x81] sm:$0xff]
      %v336 = vld [vmem:[%s1 + $0x89] sm:$0xff]
      %v337 = vld [vmem:[%s1 + $0x91] sm:$0xf]
      %v338 = vld [vmem:[%s1 + $0x95] sm:$0xff]
      %v339 = vld [vmem:[%s1 + $0x9d] sm:$0xff]
      %v340 = vld [vmem:[%s1 + $0xa5] sm:$0xf]
      %vm341 = vcmask 162816
      %v343 = vsel %vm341, %v219, 0
      %v346 = vsel %vm341, %v220, 0
      %vm348 = vcmask 1043456
      %v350 = vsel %vm348, %v340, 0
      %352 = vmatpush.msra.mxu0 0.0
      %353 = vmatpush.msra.mxu0 0.0
      %354 = vmatpush.msra.mxu0 0.0
      %355 = vmatpush.msra.mxu0 0.0
      %356 = vmatpush.msra.mxu0 0.0
      %357 = vmatpush.msra.mxu0 0.0
      %358 = vmatpush.msra.mxu0 0.0
      %359 = vmatpush.msra.mxu0 0.0
      %360 = vmatpush.msra.mxu0 0.0
      %361 = vmatpush.msra.mxu0 0.0
      %362 = vmatpush.msra.mxu0 0.0
      %363 = vmatpush.msra.mxu0 0.0
      %364 = vmatpush.msra.mxu0 0.0
      %365 = vmatpush.msra.mxu0 %v350
      %366 = vmatpush.msra.mxu0 %v339
      %367 = vmatpush.msra.mxu0 %v338
      %368 = vmatmul.f32.gmra.mxu0 %v343
      %v369 = vpop.f32.mrf.mxu0
      %v370 = vadd.f32 0.0, %v369
      %371 = vmatmul.f32.gmra.mxu0 %v346
      %v372 = vpop.f32.mrf.mxu0
      %v373 = vadd.f32 0.0, %v372
      %374 = vdwg.mxu0
      %v376 = vsel %vm341, %v330, 0
      %v379 = vsel %vm341, %v333, 0
      %v382 = vsel %vm348, %v337, 0
      %384 = vmatpush.msra.mxu0 0.0
      %385 = vmatpush.msra.mxu0 0.0
      %386 = vmatpush.msra.mxu0 0.0
      %387 = vmatpush.msra.mxu0 0.0
      %388 = vmatpush.msra.mxu0 0.0
      %389 = vmatpush.msra.mxu0 0.0
      %390 = vmatpush.msra.mxu0 0.0
      %391 = vmatpush.msra.mxu0 0.0
      %392 = vmatpush.msra.mxu0 0.0
      %393 = vmatpush.msra.mxu0 0.0
      %394 = vmatpush.msra.mxu0 0.0
      %395 = vmatpush.msra.mxu0 0.0
      %396 = vmatpush.msra.mxu0 0.0
      %397 = vmatpush.msra.mxu0 %v382
      %398 = vmatpush.msra.mxu0 %v336
      %399 = vmatpush.msra.mxu0 %v335
      %400 = vmatmul.f32.gmra.mxu0 %v376
      %v401 = vpop.f32.mrf.mxu0
      %v402 = vadd.f32 %v370, %v401
      %403 = vmatmul.f32.gmra.mxu0 %v379
      %v404 = vpop.f32.mrf.mxu0
      %v405 = vadd.f32 %v373, %v404
      %406 = vdwg.mxu0
      %v407 = vld [vmem:[%s1 + $0xa9] sm:$0xff]
      %v408 = vld [vmem:[%s1 + $0xb1] sm:$0xff]
      %v409 = vld [vmem:[%s1 + $0xb9] sm:$0xf]
      %v411 = vsel %vm341, %v246, 0
      %v414 = vsel %vm341, %v247, 0
      %v417 = vsel %vm348, %v409, 0
      %419 = vmatpush.msra.mxu0 0.0
      %420 = vmatpush.msra.mxu0 0.0
      %421 = vmatpush.msra.mxu0 0.0
      %422 = vmatpush.msra.mxu0 0.0
      %423 = vmatpush.msra.mxu0 0.0
      %424 = vmatpush.msra.mxu0 0.0
      %425 = vmatpush.msra.mxu0 0.0
      %426 = vmatpush.msra.mxu0 0.0
      %427 = vmatpush.msra.mxu0 0.0
      %428 = vmatpush.msra.mxu0 0.0
      %429 = vmatpush.msra.mxu0 0.0
      %430 = vmatpush.msra.mxu0 0.0
      %431 = vmatpush.msra.mxu0 0.0
      %432 = vmatpush.msra.mxu0 %v417
      %433 = vmatpush.msra.mxu0 %v408
      %434 = vmatpush.msra.mxu0 %v407
      %435 = vmatmul.f32.gmra.mxu0 %v411
      %v436 = vpop.f32.mrf.mxu0
      %v437 = vadd.f32 0.0, %v436
      %438 = vmatmul.f32.gmra.mxu0 %v414
      %v439 = vpop.f32.mrf.mxu0
      %v440 = vadd.f32 0.0, %v439
      %441 = vdwg.mxu0
      %v442 = vadd.f32 %v402, %v437
      %v443 = vadd.f32 %v405, %v440
      %v444 = vperm.slane %v304, 0
      %v445 = vadd.f32 %v442, %v444
      %v446 = vadd.f32 %v443, %v444
      %v447 = vmax.f32 %v445, 0.0
      %v448 = vmax.f32 %v446, 0.0
      %v450 = vsel %vm341, %v273, 0
      %v453 = vsel %vm341, %v274, 0
      %455 = vmatpush.msra.mxu0 0.0
      %456 = vmatpush.msra.mxu0 0.0
      %457 = vmatpush.msra.mxu0 0.0
      %458 = vmatpush.msra.mxu0 0.0
      %459 = vmatpush.msra.mxu0 0.0
      %460 = vmatpush.msra.mxu0 0.0
      %461 = vmatpush.msra.mxu0 0.0
      %462 = vmatpush.msra.mxu0 0.0
      %463 = vmatpush.msra.mxu0 0.0
      %464 = vmatpush.msra.mxu0 0.0
      %465 = vmatpush.msra.mxu0 0.0
      %466 = vmatpush.msra.mxu0 0.0
      %467 = vmatpush.msra.mxu0 0.0
      %468 = vmatpush.msra.mxu0 %v350
      %469 = vmatpush.msra.mxu0 %v339
      %470 = vmatpush.msra.mxu0 %v338
      %471 = vmatmul.f32.gmra.mxu0 %v450
      %v472 = vpop.f32.mrf.mxu0
      %v473 = vadd.f32 0.0, %v472
      %474 = vmatmul.f32.gmra.mxu0 %v453
      %v475 = vpop.f32.mrf.mxu0
      %v476 = vadd.f32 0.0, %v475
      %477 = vdwg.mxu0
      %478 = vmatpush.msra.mxu0 0.0
      %479 = vmatpush.msra.mxu0 0.0
      %480 = vmatpush.msra.mxu0 0.0
      %481 = vmatpush.msra.mxu0 0.0
      %482 = vmatpush.msra.mxu0 0.0
      %483 = vmatpush.msra.mxu0 0.0
      %484 = vmatpush.msra.mxu0 0.0
      %485 = vmatpush.msra.mxu0 0.0
      %486 = vmatpush.msra.mxu0 0.0
      %487 = vmatpush.msra.mxu0 0.0
      %488 = vmatpush.msra.mxu0 0.0
      %489 = vmatpush.msra.mxu0 0.0
      %490 = vmatpush.msra.mxu0 0.0
      %491 = vmatpush.msra.mxu0 %v382
      %492 = vmatpush.msra.mxu0 %v336
      %493 = vmatpush.msra.mxu0 %v335
      %494 = vmatmul.f32.gmra.mxu0 %v411
      %v495 = vpop.f32.mrf.mxu0
      %v496 = vadd.f32 %v473, %v495
      %497 = vmatmul.f32.gmra.mxu0 %v414
      %v498 = vpop.f32.mrf.mxu0
      %v499 = vadd.f32 %v476, %v498
      %500 = vdwg.mxu0
      %v502 = vsel %vm341, %v300, 0
      %v505 = vsel %vm341, %v301, 0
      %507 = vmatpush.msra.mxu0 0.0
      %508 = vmatpush.msra.mxu0 0.0
      %509 = vmatpush.msra.mxu0 0.0
      %510 = vmatpush.msra.mxu0 0.0
      %511 = vmatpush.msra.mxu0 0.0
      %512 = vmatpush.msra.mxu0 0.0
      %513 = vmatpush.msra.mxu0 0.0
      %514 = vmatpush.msra.mxu0 0.0
      %515 = vmatpush.msra.mxu0 0.0
      %516 = vmatpush.msra.mxu0 0.0
      %517 = vmatpush.msra.mxu0 0.0
      %518 = vmatpush.msra.mxu0 0.0
      %519 = vmatpush.msra.mxu0 0.0
      %520 = vmatpush.msra.mxu0 %v417
      %521 = vmatpush.msra.mxu0 %v408
      %522 = vmatpush.msra.mxu0 %v407
      %523 = vmatmul.f32.gmra.mxu0 %v502
      %v524 = vpop.f32.mrf.mxu0
      %v525 = vadd.f32 0.0, %v524
      %526 = vmatmul.f32.gmra.mxu0 %v505
      %v527 = vpop.f32.mrf.mxu0
      %v528 = vadd.f32 0.0, %v527
      %529 = vdwg.mxu0
      %v530 = vadd.f32 %v496, %v525
      %v531 = vadd.f32 %v499, %v528
      %v532 = vadd.f32 %v530, %v444
      %v533 = vadd.f32 %v531, %v444
      %v534 = vmax.f32 %v532, 0.0
      %v535 = vmax.f32 %v533, 0.0
      %v536 = vmax.f32 %v447, %v534
      %v537 = vmax.f32 %v448, %v535
      %v538 = vld [vmem:[%s2 + $0x280] sm:$0xf0]
      %v539 = vld [vmem:[%s2 + $0x288] sm:$0xf0]
      %v540 = vld [vmem:[%s2 + $0x290] sm:$0xf0]
      %v541 = vld [vmem:[%s2 + $0x2a0] sm:$0xff]
      %v542 = vld [vmem:[%s2 + $0x2a8] sm:$0xff]
      %v543 = vld [vmem:[%s2 + $0x2b0] sm:$0xff]
      %v544 = vld [vmem:[%s2 + $0x2c0] sm:$0xf]
      %v545 = vld [vmem:[%s2 + $0x2c8] sm:$0xf]
      %v546 = vld [vmem:[%s2 + $0x2d0] sm:$0xf]
      %v547 = vld [vmem:[%s1 + $0x56c] sm:$0x1]
      %v548 = vld [vmem:[%s2 + $0x2c0] sm:$0xf0]
      %v549 = vld [vmem:[%s2 + $0x2c8] sm:$0xf0]
      %v550 = vld [vmem:[%s2 + $0x2d0] sm:$0xf0]
      %v551 = vld [vmem:[%s2 + $0x2e0] sm:$0xff]
      %v552 = vld [vmem:[%s2 + $0x2e8] sm:$0xff]
      %v553 = vld [vmem:[%s2 + $0x2f0] sm:$0xff]
      %v554 = vld [vmem:[%s2 + $0x300] sm:$0xff]
      %v555 = vld [vmem:[%s2 + $0x308] sm:$0xff]
      %v556 = vld [vmem:[%s2 + $0x310] sm:$0xff]
      %v566 = vrot.slane %v548, 4
      %v567 = vrot.slane %v551, 4
      %v568 = vsel %vm348, %v566, %v567
      %v569 = vrot.slane %v549, 4
      %v570 = vrot.slane %v552, 4
      %v571 = vsel %vm348, %v569, %v570
      %v572 = vrot.slane %v550, 4
      %v573 = vrot.slane %v553, 4
      %v574 = vsel %vm348, %v572, %v573
      %v575 = vrot.slane %v554, 4
      %v576 = vsel %vm348, %v567, %v575
      %v577 = vrot.slane %v555, 4
      %v578 = vsel %vm348, %v570, %v577
      %v579 = vrot.slane %v556, 4
      %v580 = vsel %vm348, %v573, %v579
      %v588 = vsel %vm341, %v536, 0
      %v591 = vsel %vm341, %v537, 0
      %v593 = vsel %vm348, %v575, 0
      %v595 = vsel %vm348, %v577, 0
      %v597 = vsel %vm348, %v579, 0
      %599 = vmatpush.msra.mxu0 0.0
      %600 = vmatpush.msra.mxu0 0.0
      %601 = vmatpush.msra.mxu0 0.0
      %602 = vmatpush.msra.mxu0 0.0
      %603 = vmatpush.msra.mxu0 0.0
      %604 = vmatpush.msra.mxu0 0.0
      %605 = vmatpush.msra.mxu0 0.0
      %606 = vmatpush.msra.mxu0 0.0
      %607 = vmatpush.msra.mxu0 0.0
      %608 = vmatpush.msra.mxu0 0.0
      %609 = vmatpush.msra.mxu0 0.0
      %610 = vmatpush.msra.mxu0 0.0
      %611 = vmatpush.msra.mxu0 0.0
      %612 = vmatpush.msra.mxu0 %v593
      %613 = vmatpush.msra.mxu0 %v576
      %614 = vmatpush.msra.mxu0 %v568
      %615 = vmatmul.f32.gmra.mxu0 %v588
      %v616 = vpop.f32.mrf.mxu0
      %v617 = vadd.f32 0.0, %v616
      %618 = vmatmul.f32.gmra.mxu0 %v591
      %v619 = vpop.f32.mrf.mxu0
      %v620 = vadd.f32 0.0, %v619
      %621 = vdwg.mxu0
      %622 = vmatpush.msra.mxu0 0.0
      %623 = vmatpush.msra.mxu0 0.0
      %624 = vmatpush.msra.mxu0 0.0
      %625 = vmatpush.msra.mxu0 0.0
      %626 = vmatpush.msra.mxu0 0.0
      %627 = vmatpush.msra.mxu0 0.0
      %628 = vmatpush.msra.mxu0 0.0
      %629 = vmatpush.msra.mxu0 0.0
      %630 = vmatpush.msra.mxu0 0.0
      %631 = vmatpush.msra.mxu0 0.0
      %632 = vmatpush.msra.mxu0 0.0
      %633 = vmatpush.msra.mxu0 0.0
      %634 = vmatpush.msra.mxu0 0.0
      %635 = vmatpush.msra.mxu0 %v595
      %636 = vmatpush.msra.mxu0 %v578
      %637 = vmatpush.msra.mxu0 %v571
      %638 = vmatmul.f32.gmra.mxu0 %v588
      %v639 = vpop.f32.mrf.mxu0
      %v640 = vadd.f32 0.0, %v639
      %641 = vmatmul.f32.gmra.mxu0 %v591
      %v642 = vpop.f32.mrf.mxu0
      %v643 = vadd.f32 0.0, %v642
      %644 = vdwg.mxu0
      %645 = vmatpush.msra.mxu0 0.0
      %646 = vmatpush.msra.mxu0 0.0
      %647 = vmatpush.msra.mxu0 0.0
      %648 = vmatpush.msra.mxu0 0.0
      %649 = vmatpush.msra.mxu0 0.0
      %650 = vmatpush.msra.mxu0 0.0
      %651 = vmatpush.msra.mxu0 0.0
      %652 = vmatpush.msra.mxu0 0.0
      %653 = vmatpush.msra.mxu0 0.0
      %654 = vmatpush.msra.mxu0 0.0
      %655 = vmatpush.msra.mxu0 0.0
      %656 = vmatpush.msra.mxu0 0.0
      %657 = vmatpush.msra.mxu0 0.0
      %658 = vmatpush.msra.mxu0 %v597
      %659 = vmatpush.msra.mxu0 %v580
      %660 = vmatpush.msra.mxu0 %v574
      %661 = vmatmul.f32.gmra.mxu0 %v588
      %v662 = vpop.f32.mrf.mxu0
      %v663 = vadd.f32 0.0, %v662
      %664 = vmatmul.f32.gmra.mxu0 %v591
      %v665 = vpop.f32.mrf.mxu0
      %v666 = vadd.f32 0.0, %v665
      %667 = vdwg.mxu0
      %v674 = vrot.slane %v617, 4
      %v675 = vrot.slane %v640, 4
      %v676 = vrot.slane %v663, 4
      %v677 = vrot.slane %v620, 4
      %v678 = vsel %vm348, %v674, %v677
      %v679 = vrot.slane %v643, 4
      %v680 = vsel %vm348, %v675, %v679
      %v681 = vrot.slane %v666, 4
      %v682 = vsel %vm348, %v676, %v681
      %v692 = vmul.f32 %v538, %v674
      %v693 = vmul.f32 %v539, %v675
      %v694 = vmul.f32 %v540, %v676
      %v695 = vmul.f32 %v541, %v678
      %v696 = vmul.f32 %v542, %v680
      %v697 = vmul.f32 %v543, %v682
      %v698 = vmul.f32 %v544, %v677
      %v699 = vmul.f32 %v545, %v679
      %v700 = vmul.f32 %v546, %v681
      %v710 = vrot.slane %v692, 4
      %v711 = vrot.slane %v695, 4
      %v712 = vsel %vm348, %v710, %v711
      %v713 = vrot.slane %v693, 4
      %v714 = vrot.slane %v696, 4
      %v715 = vsel %vm348, %v713, %v714
      %v716 = vrot.slane %v694, 4
      %v717 = vrot.slane %v697, 4
      %v718 = vsel %vm348, %v716, %v717
      %v719 = vrot.slane %v698, 4
      %v720 = vsel %vm348, %v711, %v719
      %v721 = vrot.slane %v699, 4
      %v722 = vsel %vm348, %v714, %v721
      %v723 = vrot.slane %v700, 4
      %v724 = vsel %vm348, %v717, %v723
      %v732 = vsel %vm305, %v547, 0
      %734 = vmatpush.msra.mxu0 0.0
      %735 = vmatpush.msra.mxu0 0.0
      %736 = vmatpush.msra.mxu0 0.0
      %737 = vmatpush.msra.mxu0 0.0
      %738 = vmatpush.msra.mxu0 0.0
      %739 = vmatpush.msra.mxu0 0.0
      %740 = vmatpush.msra.mxu0 0.0
      %741 = vmatpush.msra.mxu0 0.0
      %742 = vmatpush.msra.mxu0 0.0
      %743 = vmatpush.msra.mxu0 0.0
      %744 = vmatpush.msra.mxu0 0.0
      %745 = vmatpush.msra.mxu0 0.0
      %746 = vmatpush.msra.mxu0 0.0
      %747 = vmatpush.msra.mxu0 0.0
      %748 = vmatpush.msra.mxu0 %v720
      %749 = vmatpush.msra.mxu0 %v712
      %750 = vmatmul.f32.gmra.mxu0 %v732
      %v751 = vpop.f32.mrf.mxu0
      %v752 = vadd.f32 0.0, %v751
      %753 = vdwg.mxu0
      %754 = vmatpush.msra.mxu0 0.0
      %755 = vmatpush.msra.mxu0 0.0
      %756 = vmatpush.msra.mxu0 0.0
      %757 = vmatpush.msra.mxu0 0.0
      %758 = vmatpush.msra.mxu0 0.0
      %759 = vmatpush.msra.mxu0 0.0
      %760 = vmatpush.msra.mxu0 0.0
      %761 = vmatpush.msra.mxu0 0.0
      %762 = vmatpush.msra.mxu0 0.0
      %763 = vmatpush.msra.mxu0 0.0
      %764 = vmatpush.msra.mxu0 0.0
      %765 = vmatpush.msra.mxu0 0.0
      %766 = vmatpush.msra.mxu0 0.0
      %767 = vmatpush.msra.mxu0 0.0
      %768 = vmatpush.msra.mxu0 %v722
      %769 = vmatpush.msra.mxu0 %v715
      %770 = vmatmul.f32.gmra.mxu0 %v732
      %v771 = vpop.f32.mrf.mxu0
      %v772 = vadd.f32 0.0, %v771
      %773 = vdwg.mxu0
      %774 = vmatpush.msra.mxu0 0.0
      %775 = vmatpush.msra.mxu0 0.0
      %776 = vmatpush.msra.mxu0 0.0
      %777 = vmatpush.msra.mxu0 0.0
      %778 = vmatpush.msra.mxu0 0.0
      %779 = vmatpush.msra.mxu0 0.0
      %780 = vmatpush.msra.mxu0 0.0
      %781 = vmatpush.msra.mxu0 0.0
      %782 = vmatpush.msra.mxu0 0.0
      %783 = vmatpush.msra.mxu0 0.0
      %784 = vmatpush.msra.mxu0 0.0
      %785 = vmatpush.msra.mxu0 0.0
      %786 = vmatpush.msra.mxu0 0.0
      %787 = vmatpush.msra.mxu0 0.0
      %788 = vmatpush.msra.mxu0 %v724
      %789 = vmatpush.msra.mxu0 %v718
      %790 = vmatmul.f32.gmra.mxu0 %v732
      %v791 = vpop.f32.mrf.mxu0
      %v792 = vadd.f32 0.0, %v791
      %793 = vdwg.mxu0
      %v794 = vld [vmem:[%s1 + $0xbe] sm:$0xff]
      %v795 = vld [vmem:[%s1 + $0xc6] sm:$0xff]
      %v796 = vld [vmem:[%s1 + $0xce] sm:$0xff]
      %v797 = vld [vmem:[%s1 + $0xd6] sm:$0xff]
      %v798 = vld [vmem:[%s1 + $0xde] sm:$0xff]
      %v799 = vld [vmem:[%s1 + $0xe6] sm:$0xff]
      %v800 = vld [vmem:[%s1 + $0xee] sm:$0xff]
      %v801 = vld [vmem:[%s1 + $0xf6] sm:$0xff]
      %v802 = vld [vmem:[%s1 + $0xfe] sm:$0xff]
      %v803 = vld [vmem:[%s1 + $0x106] sm:$0xff]
      %v804 = vld [vmem:[%s1 + $0x10e] sm:$0xff]
      %v805 = vld [vmem:[%s1 + $0x116] sm:$0xff]
      %v806 = vld [vmem:[%s1 + $0x11e] sm:$0xff]
      %v807 = vld [vmem:[%s1 + $0x126] sm:$0xff]
      %v808 = vld [vmem:[%s1 + $0x12e] sm:$0xff]
      %v809 = vld [vmem:[%s1 + $0x136] sm:$0xff]
      %v810 = vld [vmem:[%s1 + $0x13e] sm:$0xff]
      %v811 = vld [vmem:[%s1 + $0x146] sm:$0xff]
      %v812 = vld [vmem:[%s1 + $0x14e] sm:$0xff]
      %v813 = vld [vmem:[%s1 + $0x156] sm:$0xff]
      %v814 = vld [vmem:[%s1 + $0x15e] sm:$0xff]
      %v815 = vld [vmem:[%s1 + $0x166] sm:$0xff]
      %v816 = vld [vmem:[%s1 + $0x16e] sm:$0xff]
      %v817 = vld [vmem:[%s1 + $0x176] sm:$0xff]
      %v818 = vld [vmem:[%s1 + $0x17e] sm:$0xff]
      %v819 = vld [vmem:[%s1 + $0x186] sm:$0xff]
      %v820 = vld [vmem:[%s1 + $0x18e] sm:$0xff]
      %v821 = vld [vmem:[%s1 + $0x196] sm:$0xff]
      %v822 = vld [vmem:[%s1 + $0x19e] sm:$0xff]
      %v823 = vld [vmem:[%s1 + $0x1a6] sm:$0xff]
      %v824 = vld [vmem:[%s1 + $0x1ae] sm:$0xff]
      %v825 = vld [vmem:[%s1 + $0x1b6] sm:$0xff]
      %v826 = vld [vmem:[%s1 + $0x1be] sm:$0xf]
      %v827 = vld [vmem:[%s1 + $0x1c2] sm:$0x1]
      %vm828 = vcmask 31744
      %v830 = vsel %vm828, %v792, 0
      %v833 = vsel %vm348, %v826, 0
      %835 = vmatpush.msra.mxu0 %v809
      %836 = vmatpush.msra.mxu0 %v808
      %837 = vmatpush.msra.mxu0 %v807
      %838 = vmatpush.msra.mxu0 %v806
      %839 = vmatpush.msra.mxu0 %v805
      %840 = vmatpush.msra.mxu0 %v804
      %841 = vmatpush.msra.mxu0 %v803
      %842 = vmatpush.msra.mxu0 %v802
      %843 = vmatpush.msra.mxu0 %v801
      %844 = vmatpush.msra.mxu0 %v800
      %845 = vmatpush.msra.mxu0 %v799
      %846 = vmatpush.msra.mxu0 %v798
      %847 = vmatpush.msra.mxu0 %v797
      %848 = vmatpush.msra.mxu0 %v796
      %849 = vmatpush.msra.mxu0 %v795
      %850 = vmatpush.msra.mxu0 %v794
      %851 = vmatmul.f32.gmra.mxu0 %v752
      %v852 = vpop.f32.mrf.mxu0
      %v853 = vadd.f32 %v827, %v852
      %854 = vdwg.mxu0
      %855 = vmatpush.msra.mxu0 %v825
      %856 = vmatpush.msra.mxu0 %v824
      %857 = vmatpush.msra.mxu0 %v823
      %858 = vmatpush.msra.mxu0 %v822
      %859 = vmatpush.msra.mxu0 %v821
      %860 = vmatpush.msra.mxu0 %v820
      %861 = vmatpush.msra.mxu0 %v819
      %862 = vmatpush.msra.mxu0 %v818
      %863 = vmatpush.msra.mxu0 %v817
      %864 = vmatpush.msra.mxu0 %v816
      %865 = vmatpush.msra.mxu0 %v815
      %866 = vmatpush.msra.mxu0 %v814
      %867 = vmatpush.msra.mxu0 %v813
      %868 = vmatpush.msra.mxu0 %v812
      %869 = vmatpush.msra.mxu0 %v811
      %870 = vmatpush.msra.mxu0 %v810
      %871 = vmatmul.f32.gmra.mxu0 %v772
      %v872 = vpop.f32.mrf.mxu0
      %v873 = vadd.f32 %v853, %v872
      %874 = vdwg.mxu0
      %875 = vmatpush.msra.mxu0 0.0
      %876 = vmatpush.msra.mxu0 0.0
      %877 = vmatpush.msra.mxu0 0.0
      %878 = vmatpush.msra.mxu0 0.0
      %879 = vmatpush.msra.mxu0 0.0
      %880 = vmatpush.msra.mxu0 0.0
      %881 = vmatpush.msra.mxu0 0.0
      %882 = vmatpush.msra.mxu0 0.0
      %883 = vmatpush.msra.mxu0 0.0
      %884 = vmatpush.msra.mxu0 0.0
      %885 = vmatpush.msra.mxu0 0.0
      %886 = vmatpush.msra.mxu0 0.0
      %887 = vmatpush.msra.mxu0 0.0
      %888 = vmatpush.msra.mxu0 0.0
      %889 = vmatpush.msra.mxu0 0.0
      %890 = vmatpush.msra.mxu0 %v833
      %891 = vmatmul.f32.gmra.mxu0 %v830
      %v892 = vpop.f32.mrf.mxu0
      %v893 = vadd.f32 %v873, %v892
      %894 = vdwg.mxu0
      %v895 = vld [vmem:[%s1 + $0x1c3] sm:$0x1]
      %v896 = vld [vmem:[%s1 + $0x1c4] sm:$0xff]
      %v897 = vld [vmem:[%s1 + $0x1cc] sm:$0xff]
      %v898 = vld [vmem:[%s1 + $0x1d4] sm:$0xff]
      %v899 = vld [vmem:[%s1 + $0x1dc] sm:$0xff]
      %v900 = vld [vmem:[%s1 + $0x1e4] sm:$0xf]
      %v901 = vld [vmem:[%s1 + $0x1e8] sm:$0x1]
      %v902 = vld [vmem:[%s1 + $0x1e9] sm:$0xff]
      %v903 = vld [vmem:[%s1 + $0x1f1] sm:$0xff]
      %v904 = vld [vmem:[%s1 + $0x1f9] sm:$0xff]
      %v905 = vld [vmem:[%s1 + $0x201] sm:$0xff]
      %v906 = vld [vmem:[%s1 + $0x209] sm:$0x1]
      %v907 = vld [vmem:[%s1 + $0x20a] sm:$0x1]
      %v908 = vld [vmem:[%s1 + $0x20b] sm:$0xff]
      %v909 = vld [vmem:[%s1 + $0x213] sm:$0xff]
      %v910 = vld [vmem:[%s1 + $0x21b] sm:$0xff]
      %v911 = vld [vmem:[%s1 + $0x223] sm:$0xff]
      %v912 = vld [vmem:[%s1 + $0x22b] sm:$0xff]
      %v913 = vld [vmem:[%s1 + $0x233] sm:$0xff]
      %v914 = vld [vmem:[%s1 + $0x23b] sm:$0xff]
      %v915 = vld [vmem:[%s1 + $0x243] sm:$0xff]
      %v916 = vld [vmem:[%s1 + $0x24b] sm:$0xff]
      %v917 = vld [vmem:[%s1 + $0x253] sm:$0xff]
      %v918 = vld [vmem:[%s1 + $0x25b] sm:$0xff]
      %v919 = vld [vmem:[%s1 + $0x263] sm:$0xff]
      %v920 = vld [vmem:[%s2] ss:$8 sm:$0xf]
      %v921 = vld [vmem:[%s2] sm:$0xfc]
      %v922 = vld [vmem:[%s2 + $0x8] sm:$0xfc]
      %v923 = vld [vmem:[%s2 + $0x10] sm:$0xfc]
      %v924 = vld [vmem:[%s2 + $0x18] sm:$0xfc]
      %v925 = vld [vmem:[%s2 + $0x20] sm:$0xff]
      %v926 = vld [vmem:[%s2 + $0x28] sm:$0xff]
      %v927 = vld [vmem:[%s2 + $0x30] sm:$0xff]
      %v928 = vld [vmem:[%s2 + $0x38] sm:$0xff]
      %v929 = vld [vmem:[%s2 + $0x40] sm:$0xff]
      %v930 = vld [vmem:[%s2 + $0x48] sm:$0xff]
      %v931 = vld [vmem:[%s2 + $0x50] sm:$0xff]
      %v932 = vld [vmem:[%s2 + $0x58] sm:$0xff]
      %v933 = vld [vmem:[%s2 + $0x60] sm:$0xff]
      %v934 = vld [vmem:[%s2 + $0x68] sm:$0xff]
      %v935 = vld [vmem:[%s2 + $0x70] sm:$0xff]
      %v936 = vld [vmem:[%s2 + $0x78] sm:$0xff]
      %v937 = vld [vmem:[%s2 + $0x80] sm:$0x3]
      %v938 = vld [vmem:[%s2 + $0x88] sm:$0x3]
      %v939 = vld [vmem:[%s2 + $0x90] sm:$0x3]
      %v940 = vld [vmem:[%s2 + $0x98] sm:$0x3]
      %v941 = vld [vmem:[%s2 + $0x80] sm:$0xfc]
      %v942 = vld [vmem:[%s2 + $0x88] sm:$0xfc]
      %v943 = vld [vmem:[%s2 + $0x90] sm:$0xfc]
      %v944 = vld [vmem:[%s2 + $0x98] sm:$0xfc]
      %v945 = vld [vmem:[%s2 + $0xa0] sm:$0xff]
      %v946 = vld [vmem:[%s2 + $0xa8] sm:$0xff]
      %v947 = vld [vmem:[%s2 + $0xb0] sm:$0xff]
      %v948 = vld [vmem:[%s2 + $0xb8] sm:$0xff]
      %v949 = vld [vmem:[%s2 + $0xc0] sm:$0x3]
      %v950 = vld [vmem:[%s2 + $0xc8] sm:$0x3]
      %v951 = vld [vmem:[%s2 + $0xd0] sm:$0x3]
      %v952 = vld [vmem:[%s2 + $0xd8] sm:$0x3]
      %v953 = vld [vmem:[%s1 + $0x313] sm:$0xff]
      %v954 = vld [vmem:[%s1 + $0x31b] sm:$0xff]
      %v955 = vld [vmem:[%s1 + $0x323] sm:$0xff]
      %v956 = vld [vmem:[%s1 + $0x32b] sm:$0xff]
      %v957 = vld [vmem:[%s1 + $0x333] sm:$0xff]
      %v958 = vld [vmem:[%s1 + $0x33b] sm:$0xff]
      %v959 = vld [vmem:[%s1 + $0x343] sm:$0xff]
      %v960 = vld [vmem:[%s1 + $0x34b] sm:$0xff]
      %v961 = vld [vmem:[%s1 + $0x353] sm:$0xff]
      %v962 = vld [vmem:[%s1 + $0x35b] sm:$0xff]
      %v963 = vld [vmem:[%s1 + $0x363] sm:$0xff]
      %v964 = vld [vmem:[%s1 + $0x36b] sm:$0xff]
      %v965 = vld [vmem:[%s1 + $0x373] sm:$0xff]
      %v966 = vld [vmem:[%s1 + $0x37b] sm:$0xff]
      %v967 = vld [vmem:[%s1 + $0x383] sm:$0xff]
      %v968 = vld [vmem:[%s1 + $0x38b] sm:$0xff]
      %v969 = vld [vmem:[%s1 + $0x393] sm:$0xff]
      %v970 = vld [vmem:[%s1 + $0x39b] sm:$0xff]
      %v971 = vld [vmem:[%s1 + $0x3a3] sm:$0xff]
      %v972 = vld [vmem:[%s1 + $0x3ab] sm:$0xff]
      %v973 = vld [vmem:[%s1 + $0x3b3] sm:$0xff]
      %v974 = vld [vmem:[%s1 + $0x3bb] sm:$0xff]
      %v975 = vld [vmem:[%s1 + $0x3c3] sm:$0xff]
      %v976 = vld [vmem:[%s1 + $0x3cb] sm:$0xff]
      %v977 = vld [vmem:[%s1 + $0x3d3] sm:$0xff]
      %v978 = vld [vmem:[%s1 + $0x3db] sm:$0xff]
      %v979 = vld [vmem:[%s1 + $0x3e3] sm:$0xff]
      %v980 = vld [vmem:[%s1 + $0x3eb] sm:$0xff]
      %v981 = vld [vmem:[%s1 + $0x3f3] sm:$0xff]
      %v982 = vld [vmem:[%s1 + $0x3fb] sm:$0xff]
      %v983 = vld [vmem:[%s1 + $0x403] sm:$0xff]
      %v984 = vld [vmem:[%s1 + $0x40b] sm:$0xff]
      %v985 = vld [vmem:[%s1 + $0x413] sm:$0xff]
      %v986 = vld [vmem:[%s1 + $0x41b] sm:$0xff]
      %v987 = vld [vmem:[%s1 + $0x423] sm:$0xff]
      %v988 = vld [vmem:[%s1 + $0x42b] sm:$0xff]
      %v989 = vld [vmem:[%s1 + $0x433] sm:$0xff]
      %v990 = vld [vmem:[%s1 + $0x43b] sm:$0xff]
      %v991 = vld [vmem:[%s1 + $0x443] sm:$0xff]
      %v992 = vld [vmem:[%s1 + $0x44b] sm:$0xff]
      %v993 = vld [vmem:[%s1 + $0x453] sm:$0xff]
      %v994 = vld [vmem:[%s1 + $0x45b] sm:$0xff]
      %v995 = vld [vmem:[%s1 + $0x463] sm:$0xff]
      %v996 = vld [vmem:[%s1 + $0x46b] sm:$0xff]
      %v997 = vld [vmem:[%s1 + $0x473] sm:$0xff]
      %v998 = vld [vmem:[%s1 + $0x47b] sm:$0xff]
      %v999 = vld [vmem:[%s1 + $0x483] sm:$0xff]
      %v1000 = vld [vmem:[%s1 + $0x48b] sm:$0xff]
      %v1001 = vld [vmem:[%s1 + $0x493] sm:$0xff]
      %v1002 = vld [vmem:[%s1 + $0x49b] sm:$0xff]
      %v1003 = vld [vmem:[%s1 + $0x4a3] sm:$0xff]
      %v1004 = vld [vmem:[%s1 + $0x4ab] sm:$0xff]
      %v1005 = vld [vmem:[%s1 + $0x4b3] sm:$0xff]
      %v1006 = vld [vmem:[%s1 + $0x4bb] sm:$0xff]
      %v1007 = vld [vmem:[%s1 + $0x4c3] sm:$0xff]
      %v1008 = vld [vmem:[%s1 + $0x4cb] sm:$0xff]
      %v1009 = vld [vmem:[%s1 + $0x4d3] sm:$0xff]
      %v1010 = vld [vmem:[%s1 + $0x4db] sm:$0xff]
      %v1011 = vld [vmem:[%s1 + $0x4e3] sm:$0xff]
      %v1012 = vld [vmem:[%s1 + $0x4eb] sm:$0xff]
      %v1013 = vld [vmem:[%s1 + $0x4f3] sm:$0xff]
      %v1014 = vld [vmem:[%s1 + $0x4fb] sm:$0xff]
      %v1015 = vld [vmem:[%s1 + $0x503] sm:$0xff]
      %v1016 = vld [vmem:[%s1 + $0x50b] sm:$0xff]
      %v1017 = vmul.f32 %v893, %v893
      %vm1018 = vcmask 122880
      %v1019 = vsel %vm1018, %v1017, 0.0
      %1020 = vadd.xlane.f32.xlu0 %v1019
      %v1021 = vpop.xlane.xlu0 %1020
      %v1022 = vrcp.pop 16.0
      %v1023 = vmul.f32 16.0, %v1022
      %v1024 = vsub.f32 1.0, %v1023
      %v1025 = vmul.f32 %v1022, %v1024
      %v1026 = vadd.f32 %v1022, %v1025
      %vm1027 = vweird.f32 %v1022
      %v1028 = vsel %vm1027, %v1022, %v1026
      %v1029 = vmul.f32 %v1021, %v1028
      %v1030 = vadd.f32 %v1029, 1e-05
      %v1031 = vrsqrt.pop %v1030
      %v1032 = vmul.f32 %v1031, %v1030
      %v1033 = vmul.f32 %v1032, %v1031
      %v1034 = vmul.f32 0.5, %v1033
      %v1035 = vsub.f32 1.5, %v1034
      %v1036 = vmul.f32 %v1031, %v1035
      %vm1037 = vweird.f32 %v1030
      %vm1038 = vweird.f32 %v1031
      %vm1039 = vmor %vm1037, %vm1038
      %v1040 = vsel %vm1039, %v1031, %v1036
      %v1041 = vmul.f32 %v893, %v1040
      %v1042 = vmul.f32 %v1041, %v895
      %v1044 = vsel %vm305, %v1042, 0
      %1046 = vmatpush.msra.mxu0 0.0
      %1047 = vmatpush.msra.mxu0 0.0
      %1048 = vmatpush.msra.mxu0 0.0
      %1049 = vmatpush.msra.mxu0 0.0
      %1050 = vmatpush.msra.mxu0 0.0
      %1051 = vmatpush.msra.mxu0 0.0
      %1052 = vmatpush.msra.mxu0 0.0
      %1053 = vmatpush.msra.mxu0 0.0
      %1054 = vmatpush.msra.mxu0 0.0
      %1055 = vmatpush.msra.mxu0 0.0
      %1056 = vmatpush.msra.mxu0 0.0
      %1057 = vmatpush.msra.mxu0 0.0
      %1058 = vmatpush.msra.mxu0 0.0
      %1059 = vmatpush.msra.mxu0 0.0
      %1060 = vmatpush.msra.mxu0 %v897
      %1061 = vmatpush.msra.mxu0 %v896
      %1062 = vmatmul.f32.gmra.mxu0 %v1044
      %v1063 = vpop.f32.mrf.mxu0
      %v1064 = vadd.f32 0.0, %v1063
      %1065 = vdwg.mxu0
      %1066 = vmatpush.msra.mxu0 0.0
      %1067 = vmatpush.msra.mxu0 0.0
      %1068 = vmatpush.msra.mxu0 0.0
      %1069 = vmatpush.msra.mxu0 0.0
      %1070 = vmatpush.msra.mxu0 0.0
      %1071 = vmatpush.msra.mxu0 0.0
      %1072 = vmatpush.msra.mxu0 0.0
      %1073 = vmatpush.msra.mxu0 0.0
      %1074 = vmatpush.msra.mxu0 0.0
      %1075 = vmatpush.msra.mxu0 0.0
      %1076 = vmatpush.msra.mxu0 0.0
      %1077 = vmatpush.msra.mxu0 0.0
      %1078 = vmatpush.msra.mxu0 0.0
      %1079 = vmatpush.msra.mxu0 0.0
      %1080 = vmatpush.msra.mxu0 %v899
      %1081 = vmatpush.msra.mxu0 %v898
      %1082 = vmatmul.f32.gmra.mxu0 %v1044
      %v1083 = vpop.f32.mrf.mxu0
      %v1084 = vadd.f32 0.0, %v1083
      %1085 = vdwg.mxu0
      %1087 = vrot.lane.b32.xlu0 %v1017, 112
      %v1088 = vpop.permute.xlu0 %1087
      %v1090 = vsel %vm1018, %v1088, 0.0
      %1091 = vadd.xlane.f32.xlu0 %v1090
      %v1092 = vpop.xlane.xlu0 %1091
      %v1093 = vmul.f32 %v1092, %v1028
      %v1094 = vadd.f32 %v1093, 1e-05
      %v1095 = vrsqrt.pop %v1094
      %v1096 = vmul.f32 %v1095, %v1094
      %v1097 = vmul.f32 %v1096, %v1095
      %v1098 = vmul.f32 0.5, %v1097
      %v1099 = vsub.f32 1.5, %v1098
      %v1100 = vmul.f32 %v1095, %v1099
      %vm1101 = vweird.f32 %v1094
      %vm1102 = vweird.f32 %v1095
      %vm1103 = vmor %vm1101, %vm1102
      %v1104 = vsel %vm1103, %v1095, %v1100
      %v1105 = vmul.f32 %v893, %v1104
      %1107 = vrot.lane.b32.xlu0 %v895, 16
      %v1108 = vpop.permute.xlu0 %1107
      %v1110 = vmul.f32 %v1105, %v1108
      %1112 = vrot.lane.b32.xlu0 %v1110, 112
      %v1113 = vpop.permute.xlu0 %1112
      %v1114 = vsel %vm305, %v1113, 0
      %1116 = vmatpush.msra.mxu0 0.0
      %1117 = vmatpush.msra.mxu0 0.0
      %1118 = vmatpush.msra.mxu0 0.0
      %1119 = vmatpush.msra.mxu0 0.0
      %1120 = vmatpush.msra.mxu0 0.0
      %1121 = vmatpush.msra.mxu0 0.0
      %1122 = vmatpush.msra.mxu0 0.0
      %1123 = vmatpush.msra.mxu0 0.0
      %1124 = vmatpush.msra.mxu0 0.0
      %1125 = vmatpush.msra.mxu0 0.0
      %1126 = vmatpush.msra.mxu0 0.0
      %1127 = vmatpush.msra.mxu0 0.0
      %1128 = vmatpush.msra.mxu0 0.0
      %1129 = vmatpush.msra.mxu0 0.0
      %1130 = vmatpush.msra.mxu0 %v897
      %1131 = vmatpush.msra.mxu0 %v896
      %1132 = vmatmul.f32.gmra.mxu0 %v1114
      %v1133 = vpop.f32.mrf.mxu0
      %v1134 = vadd.f32 0.0, %v1133
      %1135 = vdwg.mxu0
      %1136 = vmatpush.msra.mxu0 0.0
      %1137 = vmatpush.msra.mxu0 0.0
      %1138 = vmatpush.msra.mxu0 0.0
      %1139 = vmatpush.msra.mxu0 0.0
      %1140 = vmatpush.msra.mxu0 0.0
      %1141 = vmatpush.msra.mxu0 0.0
      %1142 = vmatpush.msra.mxu0 0.0
      %1143 = vmatpush.msra.mxu0 0.0
      %1144 = vmatpush.msra.mxu0 0.0
      %1145 = vmatpush.msra.mxu0 0.0
      %1146 = vmatpush.msra.mxu0 0.0
      %1147 = vmatpush.msra.mxu0 0.0
      %1148 = vmatpush.msra.mxu0 0.0
      %1149 = vmatpush.msra.mxu0 0.0
      %1150 = vmatpush.msra.mxu0 %v899
      %1151 = vmatpush.msra.mxu0 %v898
      %1152 = vmatmul.f32.gmra.mxu0 %v1114
      %v1153 = vpop.f32.mrf.mxu0
      %v1154 = vadd.f32 0.0, %v1153
      %1155 = vdwg.mxu0
      %v1157 = vrot.slane %v900, 3
      %v1159 = vmul.f32 %v1064, %v1157
      %v1160 = vadd.f32 %v1159, %v901
      %v1161 = vmul.f32 %v1160, 0.5
      %v1162 = vtanh.pop %v1161
      %v1163 = vadd.f32 %v1162, 1.0
      %v1164 = vmul.f32 %v1163, 0.5
      %v1165 = vmul.f32 %v1160, %v1164
      %vm1166 = vcmask 261120
      %v1168 = vsel %vm1166, %v1165, 0
      %1170 = vmatpush.msra.mxu0 0.0
      %1171 = vmatpush.msra.mxu0 0.0
      %1172 = vmatpush.msra.mxu0 0.0
      %1173 = vmatpush.msra.mxu0 0.0
      %1174 = vmatpush.msra.mxu0 0.0
      %1175 = vmatpush.msra.mxu0 0.0
      %1176 = vmatpush.msra.mxu0 0.0
      %1177 = vmatpush.msra.mxu0 0.0
      %1178 = vmatpush.msra.mxu0 0.0
      %1179 = vmatpush.msra.mxu0 0.0
      %1180 = vmatpush.msra.mxu0 0.0
      %1181 = vmatpush.msra.mxu0 0.0
      %1182 = vmatpush.msra.mxu0 %v905
      %1183 = vmatpush.msra.mxu0 %v904
      %1184 = vmatpush.msra.mxu0 %v903
      %1185 = vmatpush.msra.mxu0 %v902
      %1186 = vmatmul.f32.gmra.mxu0 %v1168
      %v1187 = vpop.f32.mrf.mxu0
      %v1188 = vadd.f32 %v906, %v1187
      %1189 = vdwg.mxu0
      %vm1190 = vcmp.gt.f32.partialorder %v1188, 20.0
      %v1191 = vmin.f32 %v1188, 20.0
      %v1192 = vmul.f32 %v1191, 1.442695
      %v1193 = vpow.pop %v1192
      %v1194 = vadd.f32 %v1193, 1.0
      %v1195 = vlog2.pop %v1194
      %v1196 = vmul.f32 %v1195, 0.6931472
      %v1197 = vsel %vm1190, %v1188, %v1196
      %1198 = vmatpush.msra.mxu0 0.0
      %1199 = vmatpush.msra.mxu0 0.0
      %1200 = vmatpush.msra.mxu0 0.0
      %1201 = vmatpush.msra.mxu0 0.0
      %1202 = vmatpush.msra.mxu0 0.0
      %1203 = vmatpush.msra.mxu0 0.0
      %1204 = vmatpush.msra.mxu0 0.0
      %1205 = vmatpush.msra.mxu0 0.0
      %1206 = vmatpush.msra.mxu0 0.0
      %1207 = vmatpush.msra.mxu0 0.0
      %1208 = vmatpush.msra.mxu0 0.0
      %1209 = vmatpush.msra.mxu0 0.0
      %1210 = vmatpush.msra.mxu0 %v911
      %1211 = vmatpush.msra.mxu0 %v910
      %1212 = vmatpush.msra.mxu0 %v909
      %1213 = vmatpush.msra.mxu0 %v908
      %1214 = vmatmul.f32.gmra.mxu0 %v1168
      %v1215 = vpop.f32.mrf.mxu0
      %v1216 = vadd.f32 0.0, %v1215
      %1217 = vdwg.mxu0
      %1218 = vmatpush.msra.mxu0 0.0
      %1219 = vmatpush.msra.mxu0 0.0
      %1220 = vmatpush.msra.mxu0 0.0
      %1221 = vmatpush.msra.mxu0 0.0
      %1222 = vmatpush.msra.mxu0 0.0
      %1223 = vmatpush.msra.mxu0 0.0
      %1224 = vmatpush.msra.mxu0 0.0
      %1225 = vmatpush.msra.mxu0 0.0
      %1226 = vmatpush.msra.mxu0 0.0
      %1227 = vmatpush.msra.mxu0 0.0
      %1228 = vmatpush.msra.mxu0 0.0
      %1229 = vmatpush.msra.mxu0 0.0
      %1230 = vmatpush.msra.mxu0 %v915
      %1231 = vmatpush.msra.mxu0 %v914
      %1232 = vmatpush.msra.mxu0 %v913
      %1233 = vmatpush.msra.mxu0 %v912
      %1234 = vmatmul.f32.gmra.mxu0 %v1168
      %v1235 = vpop.f32.mrf.mxu0
      %v1236 = vadd.f32 0.0, %v1235
      %1237 = vdwg.mxu0
      %v1238 = vmul.f32 %v1197, %v1165
      %vm1259 = vcmask 1045504
      %v1260 = vrot.slane %v921, 2
      %v1261 = vrot.slane %v925, 2
      %v1262 = vsel %vm1259, %v1260, %v1261
      %v1263 = vrot.slane %v922, 2
      %v1264 = vrot.slane %v926, 2
      %v1265 = vsel %vm1259, %v1263, %v1264
      %v1266 = vrot.slane %v923, 2
      %v1267 = vrot.slane %v927, 2
      %v1268 = vsel %vm1259, %v1266, %v1267
      %v1269 = vrot.slane %v924, 2
      %v1270 = vrot.slane %v928, 2
      %v1271 = vsel %vm1259, %v1269, %v1270
      %v1272 = vrot.slane %v929, 2
      %v1273 = vsel %vm1259, %v1261, %v1272
      %v1274 = vrot.slane %v930, 2
      %v1275 = vsel %vm1259, %v1264, %v1274
      %v1276 = vrot.slane %v931, 2
      %v1277 = vsel %vm1259, %v1267, %v1276
      %v1278 = vrot.slane %v932, 2
      %v1279 = vsel %vm1259, %v1270, %v1278
      %v1280 = vrot.slane %v933, 2
      %v1281 = vsel %vm1259, %v1272, %v1280
      %v1282 = vrot.slane %v934, 2
      %v1283 = vsel %vm1259, %v1274, %v1282
      %v1284 = vrot.slane %v935, 2
      %v1285 = vsel %vm1259, %v1276, %v1284
      %v1286 = vrot.slane %v936, 2
      %v1287 = vsel %vm1259, %v1278, %v1286
      %v1288 = vrot.slane %v937, 2
      %v1289 = vsel %vm1259, %v1280, %v1288
      %v1290 = vrot.slane %v938, 2
      %v1291 = vsel %vm1259, %v1282, %v1290
      %v1292 = vrot.slane %v939, 2
      %v1293 = vsel %vm1259, %v1284, %v1292
      %v1294 = vrot.slane %v940, 2
      %v1295 = vsel %vm1259, %v1286, %v1294
      %v1313 = vsel %vm1166, %v1238, 0
      %1315 = vmatpush.msra.mxu0 0.0
      %1316 = vmatpush.msra.mxu0 0.0
      %1317 = vmatpush.msra.mxu0 0.0
      %1318 = vmatpush.msra.mxu0 0.0
      %1319 = vmatpush.msra.mxu0 0.0
      %1320 = vmatpush.msra.mxu0 0.0
      %1321 = vmatpush.msra.mxu0 0.0
      %1322 = vmatpush.msra.mxu0 0.0
      %1323 = vmatpush.msra.mxu0 0.0
      %1324 = vmatpush.msra.mxu0 0.0
      %1325 = vmatpush.msra.mxu0 0.0
      %1326 = vmatpush.msra.mxu0 0.0
      %1327 = vmatpush.msra.mxu0 %v1289
      %1328 = vmatpush.msra.mxu0 %v1281
      %1329 = vmatpush.msra.mxu0 %v1273
      %1330 = vmatpush.msra.mxu0 %v1262
      %1331 = vmatmul.f32.gmra.mxu0 %v1313
      %v1332 = vpop.f32.mrf.mxu0
      %v1333 = vadd.f32 0.0, %v1332
      %1334 = vdwg.mxu0
      %1335 = vmatpush.msra.mxu0 0.0
      %1336 = vmatpush.msra.mxu0 0.0
      %1337 = vmatpush.msra.mxu0 0.0
      %1338 = vmatpush.msra.mxu0 0.0
      %1339 = vmatpush.msra.mxu0 0.0
      %1340 = vmatpush.msra.mxu0 0.0
      %1341 = vmatpush.msra.mxu0 0.0
      %1342 = vmatpush.msra.mxu0 0.0
      %1343 = vmatpush.msra.mxu0 0.0
      %1344 = vmatpush.msra.mxu0 0.0
      %1345 = vmatpush.msra.mxu0 0.0
      %1346 = vmatpush.msra.mxu0 0.0
      %1347 = vmatpush.msra.mxu0 %v1291
      %1348 = vmatpush.msra.mxu0 %v1283
      %1349 = vmatpush.msra.mxu0 %v1275
      %1350 = vmatpush.msra.mxu0 %v1265
      %1351 = vmatmul.f32.gmra.mxu0 %v1313
      %v1352 = vpop.f32.mrf.mxu0
      %v1353 = vadd.f32 0.0, %v1352
      %1354 = vdwg.mxu0
      %1355 = vmatpush.msra.mxu0 0.0
      %1356 = vmatpush.msra.mxu0 0.0
      %1357 = vmatpush.msra.mxu0 0.0
      %1358 = vmatpush.msra.mxu0 0.0
      %1359 = vmatpush.msra.mxu0 0.0
      %1360 = vmatpush.msra.mxu0 0.0
      %1361 = vmatpush.msra.mxu0 0.0
      %1362 = vmatpush.msra.mxu0 0.0
      %1363 = vmatpush.msra.mxu0 0.0
      %1364 = vmatpush.msra.mxu0 0.0
      %1365 = vmatpush.msra.mxu0 0.0
      %1366 = vmatpush.msra.mxu0 0.0
      %1367 = vmatpush.msra.mxu0 %v1293
      %1368 = vmatpush.msra.mxu0 %v1285
      %1369 = vmatpush.msra.mxu0 %v1277
      %1370 = vmatpush.msra.mxu0 %v1268
      %1371 = vmatmul.f32.gmra.mxu0 %v1313
      %v1372 = vpop.f32.mrf.mxu0
      %v1373 = vadd.f32 0.0, %v1372
      %1374 = vdwg.mxu0
      %1375 = vmatpush.msra.mxu0 0.0
      %1376 = vmatpush.msra.mxu0 0.0
      %1377 = vmatpush.msra.mxu0 0.0
      %1378 = vmatpush.msra.mxu0 0.0
      %1379 = vmatpush.msra.mxu0 0.0
      %1380 = vmatpush.msra.mxu0 0.0
      %1381 = vmatpush.msra.mxu0 0.0
      %1382 = vmatpush.msra.mxu0 0.0
      %1383 = vmatpush.msra.mxu0 0.0
      %1384 = vmatpush.msra.mxu0 0.0
      %1385 = vmatpush.msra.mxu0 0.0
      %1386 = vmatpush.msra.mxu0 0.0
      %1387 = vmatpush.msra.mxu0 %v1295
      %1388 = vmatpush.msra.mxu0 %v1287
      %1389 = vmatpush.msra.mxu0 %v1279
      %1390 = vmatpush.msra.mxu0 %v1271
      %1391 = vmatmul.f32.gmra.mxu0 %v1313
      %v1392 = vpop.f32.mrf.mxu0
      %v1393 = vadd.f32 0.0, %v1392
      %1394 = vdwg.mxu0
      %v1407 = vrot.slane %v941, 2
      %v1408 = vrot.slane %v945, 2
      %v1409 = vsel %vm1259, %v1407, %v1408
      %v1410 = vrot.slane %v942, 2
      %v1411 = vrot.slane %v946, 2
      %v1412 = vsel %vm1259, %v1410, %v1411
      %v1413 = vrot.slane %v943, 2
      %v1414 = vrot.slane %v947, 2
      %v1415 = vsel %vm1259, %v1413, %v1414
      %v1416 = vrot.slane %v944, 2
      %v1417 = vrot.slane %v948, 2
      %v1418 = vsel %vm1259, %v1416, %v1417
      %v1419 = vrot.slane %v949, 2
      %v1420 = vsel %vm1259, %v1408, %v1419
      %v1421 = vrot.slane %v950, 2
      %v1422 = vsel %vm1259, %v1411, %v1421
      %v1423 = vrot.slane %v951, 2
      %v1424 = vsel %vm1259, %v1414, %v1423
      %v1425 = vrot.slane %v952, 2
      %v1426 = vsel %vm1259, %v1417, %v1425
      %v1436 = vsel %vm305, %v1216, 0
      %1438 = vmatpush.msra.mxu0 0.0
      %1439 = vmatpush.msra.mxu0 0.0
      %1440 = vmatpush.msra.mxu0 0.0
      %1441 = vmatpush.msra.mxu0 0.0
      %1442 = vmatpush.msra.mxu0 0.0
      %1443 = vmatpush.msra.mxu0 0.0
      %1444 = vmatpush.msra.mxu0 0.0
      %1445 = vmatpush.msra.mxu0 0.0
      %1446 = vmatpush.msra.mxu0 0.0
      %1447 = vmatpush.msra.mxu0 0.0
      %1448 = vmatpush.msra.mxu0 0.0
      %1449 = vmatpush.msra.mxu0 0.0
      %1450 = vmatpush.msra.mxu0 0.0
      %1451 = vmatpush.msra.mxu0 0.0
      %1452 = vmatpush.msra.mxu0 %v1420
      %1453 = vmatpush.msra.mxu0 %v1409
      %1454 = vmatmul.f32.gmra.mxu0 %v1436
      %v1455 = vpop.f32.mrf.mxu0
      %v1456 = vadd.f32 0.0, %v1455
      %1457 = vdwg.mxu0
      %1458 = vmatpush.msra.mxu0 0.0
      %1459 = vmatpush.msra.mxu0 0.0
      %1460 = vmatpush.msra.mxu0 0.0
      %1461 = vmatpush.msra.mxu0 0.0
      %1462 = vmatpush.msra.mxu0 0.0
      %1463 = vmatpush.msra.mxu0 0.0
      %1464 = vmatpush.msra.mxu0 0.0
      %1465 = vmatpush.msra.mxu0 0.0
      %1466 = vmatpush.msra.mxu0 0.0
      %1467 = vmatpush.msra.mxu0 0.0
      %1468 = vmatpush.msra.mxu0 0.0
      %1469 = vmatpush.msra.mxu0 0.0
      %1470 = vmatpush.msra.mxu0 0.0
      %1471 = vmatpush.msra.mxu0 0.0
      %1472 = vmatpush.msra.mxu0 %v1422
      %1473 = vmatpush.msra.mxu0 %v1412
      %1474 = vmatmul.f32.gmra.mxu0 %v1436
      %v1475 = vpop.f32.mrf.mxu0
      %v1476 = vadd.f32 0.0, %v1475
      %1477 = vdwg.mxu0
      %1478 = vmatpush.msra.mxu0 0.0
      %1479 = vmatpush.msra.mxu0 0.0
      %1480 = vmatpush.msra.mxu0 0.0
      %1481 = vmatpush.msra.mxu0 0.0
      %1482 = vmatpush.msra.mxu0 0.0
      %1483 = vmatpush.msra.mxu0 0.0
      %1484 = vmatpush.msra.mxu0 0.0
      %1485 = vmatpush.msra.mxu0 0.0
      %1486 = vmatpush.msra.mxu0 0.0
      %1487 = vmatpush.msra.mxu0 0.0
      %1488 = vmatpush.msra.mxu0 0.0
      %1489 = vmatpush.msra.mxu0 0.0
      %1490 = vmatpush.msra.mxu0 0.0
      %1491 = vmatpush.msra.mxu0 0.0
      %1492 = vmatpush.msra.mxu0 %v1424
      %1493 = vmatpush.msra.mxu0 %v1415
      %1494 = vmatmul.f32.gmra.mxu0 %v1436
      %v1495 = vpop.f32.mrf.mxu0
      %v1496 = vadd.f32 0.0, %v1495
      %1497 = vdwg.mxu0
      %1498 = vmatpush.msra.mxu0 0.0
      %1499 = vmatpush.msra.mxu0 0.0
      %1500 = vmatpush.msra.mxu0 0.0
      %1501 = vmatpush.msra.mxu0 0.0
      %1502 = vmatpush.msra.mxu0 0.0
      %1503 = vmatpush.msra.mxu0 0.0
      %1504 = vmatpush.msra.mxu0 0.0
      %1505 = vmatpush.msra.mxu0 0.0
      %1506 = vmatpush.msra.mxu0 0.0
      %1507 = vmatpush.msra.mxu0 0.0
      %1508 = vmatpush.msra.mxu0 0.0
      %1509 = vmatpush.msra.mxu0 0.0
      %1510 = vmatpush.msra.mxu0 0.0
      %1511 = vmatpush.msra.mxu0 0.0
      %1512 = vmatpush.msra.mxu0 %v1426
      %1513 = vmatpush.msra.mxu0 %v1418
      %1514 = vmatmul.f32.gmra.mxu0 %v1436
      %v1515 = vpop.f32.mrf.mxu0
      %v1516 = vadd.f32 0.0, %v1515
      %1517 = vdwg.mxu0
      %v1518 = vmul.f32 %v1333, %v1456
      %v1519 = vmul.f32 %v1353, %v1476
      %v1520 = vmul.f32 %v1373, %v1496
      %v1521 = vmul.f32 %v1393, %v1516
      %v1523 = vsel %vm305, %v1236, 0
      %1525 = vmatpush.msra.mxu0 0.0
      %1526 = vmatpush.msra.mxu0 0.0
      %1527 = vmatpush.msra.mxu0 0.0
      %1528 = vmatpush.msra.mxu0 0.0
      %1529 = vmatpush.msra.mxu0 0.0
      %1530 = vmatpush.msra.mxu0 0.0
      %1531 = vmatpush.msra.mxu0 0.0
      %1532 = vmatpush.msra.mxu0 0.0
      %1533 = vmatpush.msra.mxu0 0.0
      %1534 = vmatpush.msra.mxu0 0.0
      %1535 = vmatpush.msra.mxu0 0.0
      %1536 = vmatpush.msra.mxu0 0.0
      %1537 = vmatpush.msra.mxu0 0.0
      %1538 = vmatpush.msra.mxu0 0.0
      %1539 = vmatpush.msra.mxu0 %v1420
      %1540 = vmatpush.msra.mxu0 %v1409
      %1541 = vmatmul.f32.gmra.mxu0 %v1523
      %v1542 = vpop.f32.mrf.mxu0
      %v1543 = vadd.f32 0.0, %v1542
      %1544 = vdwg.mxu0
      %1545 = vmatpush.msra.mxu0 0.0
      %1546 = vmatpush.msra.mxu0 0.0
      %1547 = vmatpush.msra.mxu0 0.0
      %1548 = vmatpush.msra.mxu0 0.0
      %1549 = vmatpush.msra.mxu0 0.0
      %1550 = vmatpush.msra.mxu0 0.0
      %1551 = vmatpush.msra.mxu0 0.0
      %1552 = vmatpush.msra.mxu0 0.0
      %1553 = vmatpush.msra.mxu0 0.0
      %1554 = vmatpush.msra.mxu0 0.0
      %1555 = vmatpush.msra.mxu0 0.0
      %1556 = vmatpush.msra.mxu0 0.0
      %1557 = vmatpush.msra.mxu0 0.0
      %1558 = vmatpush.msra.mxu0 0.0
      %1559 = vmatpush.msra.mxu0 %v1422
      %1560 = vmatpush.msra.mxu0 %v1412
      %1561 = vmatmul.f32.gmra.mxu0 %v1523
      %v1562 = vpop.f32.mrf.mxu0
      %v1563 = vadd.f32 0.0, %v1562
      %1564 = vdwg.mxu0
      %1565 = vmatpush.msra.mxu0 0.0
      %1566 = vmatpush.msra.mxu0 0.0
      %1567 = vmatpush.msra.mxu0 0.0
      %1568 = vmatpush.msra.mxu0 0.0
      %1569 = vmatpush.msra.mxu0 0.0
      %1570 = vmatpush.msra.mxu0 0.0
      %1571 = vmatpush.msra.mxu0 0.0
      %1572 = vmatpush.msra.mxu0 0.0
      %1573 = vmatpush.msra.mxu0 0.0
      %1574 = vmatpush.msra.mxu0 0.0
      %1575 = vmatpush.msra.mxu0 0.0
      %1576 = vmatpush.msra.mxu0 0.0
      %1577 = vmatpush.msra.mxu0 0.0
      %1578 = vmatpush.msra.mxu0 0.0
      %1579 = vmatpush.msra.mxu0 %v1424
      %1580 = vmatpush.msra.mxu0 %v1415
      %1581 = vmatmul.f32.gmra.mxu0 %v1523
      %v1582 = vpop.f32.mrf.mxu0
      %v1583 = vadd.f32 0.0, %v1582
      %1584 = vdwg.mxu0
      %1585 = vmatpush.msra.mxu0 0.0
      %1586 = vmatpush.msra.mxu0 0.0
      %1587 = vmatpush.msra.mxu0 0.0
      %1588 = vmatpush.msra.mxu0 0.0
      %1589 = vmatpush.msra.mxu0 0.0
      %1590 = vmatpush.msra.mxu0 0.0
      %1591 = vmatpush.msra.mxu0 0.0
      %1592 = vmatpush.msra.mxu0 0.0
      %1593 = vmatpush.msra.mxu0 0.0
      %1594 = vmatpush.msra.mxu0 0.0
      %1595 = vmatpush.msra.mxu0 0.0
      %1596 = vmatpush.msra.mxu0 0.0
      %1597 = vmatpush.msra.mxu0 0.0
      %1598 = vmatpush.msra.mxu0 0.0
      %1599 = vmatpush.msra.mxu0 %v1426
      %1600 = vmatpush.msra.mxu0 %v1418
      %1601 = vmatmul.f32.gmra.mxu0 %v1523
      %v1602 = vpop.f32.mrf.mxu0
      %v1603 = vadd.f32 0.0, %v1602
      %1604 = vdwg.mxu0
      %v1605 = vmul.f32 %v1518, %v1543
      %v1606 = vmul.f32 %v1519, %v1563
      %v1607 = vmul.f32 %v1520, %v1583
      %v1608 = vmul.f32 %v1521, %v1603
      %v1609 = vmul.f32 %v907, %v1165
      %1610 = vmatpush.msra.mxu0 %v968
      %1611 = vmatpush.msra.mxu0 %v967
      %1612 = vmatpush.msra.mxu0 %v966
      %1613 = vmatpush.msra.mxu0 %v965
      %1614 = vmatpush.msra.mxu0 %v964
      %1615 = vmatpush.msra.mxu0 %v963
      %1616 = vmatpush.msra.mxu0 %v962
      %1617 = vmatpush.msra.mxu0 %v961
      %1618 = vmatpush.msra.mxu0 %v960
      %1619 = vmatpush.msra.mxu0 %v959
      %1620 = vmatpush.msra.mxu0 %v958
      %1621 = vmatpush.msra.mxu0 %v957
      %1622 = vmatpush.msra.mxu0 %v956
      %1623 = vmatpush.msra.mxu0 %v955
      %1624 = vmatpush.msra.mxu0 %v954
      %1625 = vmatpush.msra.mxu0 %v953
      %1626 = vmatmul.f32.gmra.mxu0 %v1605
      %v1627 = vpop.f32.mrf.mxu0
      %v1628 = vadd.f32 %v1609, %v1627
      %1629 = vdwg.mxu0
      %1630 = vmatpush.msra.mxu0 %v984
      %1631 = vmatpush.msra.mxu0 %v983
      %1632 = vmatpush.msra.mxu0 %v982
      %1633 = vmatpush.msra.mxu0 %v981
      %1634 = vmatpush.msra.mxu0 %v980
      %1635 = vmatpush.msra.mxu0 %v979
      %1636 = vmatpush.msra.mxu0 %v978
      %1637 = vmatpush.msra.mxu0 %v977
      %1638 = vmatpush.msra.mxu0 %v976
      %1639 = vmatpush.msra.mxu0 %v975
      %1640 = vmatpush.msra.mxu0 %v974
      %1641 = vmatpush.msra.mxu0 %v973
      %1642 = vmatpush.msra.mxu0 %v972
      %1643 = vmatpush.msra.mxu0 %v971
      %1644 = vmatpush.msra.mxu0 %v970
      %1645 = vmatpush.msra.mxu0 %v969
      %1646 = vmatmul.f32.gmra.mxu0 %v1606
      %v1647 = vpop.f32.mrf.mxu0
      %v1648 = vadd.f32 %v1628, %v1647
      %1649 = vdwg.mxu0
      %1650 = vmatpush.msra.mxu0 %v1000
      %1651 = vmatpush.msra.mxu0 %v999
      %1652 = vmatpush.msra.mxu0 %v998
      %1653 = vmatpush.msra.mxu0 %v997
      %1654 = vmatpush.msra.mxu0 %v996
      %1655 = vmatpush.msra.mxu0 %v995
      %1656 = vmatpush.msra.mxu0 %v994
      %1657 = vmatpush.msra.mxu0 %v993
      %1658 = vmatpush.msra.mxu0 %v992
      %1659 = vmatpush.msra.mxu0 %v991
      %1660 = vmatpush.msra.mxu0 %v990
      %1661 = vmatpush.msra.mxu0 %v989
      %1662 = vmatpush.msra.mxu0 %v988
      %1663 = vmatpush.msra.mxu0 %v987
      %1664 = vmatpush.msra.mxu0 %v986
      %1665 = vmatpush.msra.mxu0 %v985
      %1666 = vmatmul.f32.gmra.mxu0 %v1607
      %v1667 = vpop.f32.mrf.mxu0
      %v1668 = vadd.f32 %v1648, %v1667
      %1669 = vdwg.mxu0
      %1670 = vmatpush.msra.mxu0 %v1016
      %1671 = vmatpush.msra.mxu0 %v1015
      %1672 = vmatpush.msra.mxu0 %v1014
      %1673 = vmatpush.msra.mxu0 %v1013
      %1674 = vmatpush.msra.mxu0 %v1012
      %1675 = vmatpush.msra.mxu0 %v1011
      %1676 = vmatpush.msra.mxu0 %v1010
      %1677 = vmatpush.msra.mxu0 %v1009
      %1678 = vmatpush.msra.mxu0 %v1008
      %1679 = vmatpush.msra.mxu0 %v1007
      %1680 = vmatpush.msra.mxu0 %v1006
      %1681 = vmatpush.msra.mxu0 %v1005
      %1682 = vmatpush.msra.mxu0 %v1004
      %1683 = vmatpush.msra.mxu0 %v1003
      %1684 = vmatpush.msra.mxu0 %v1002
      %1685 = vmatpush.msra.mxu0 %v1001
      %1686 = vmatmul.f32.gmra.mxu0 %v1608
      %v1687 = vpop.f32.mrf.mxu0
      %v1688 = vadd.f32 %v1668, %v1687
      %1689 = vdwg.mxu0
      %v1690 = vmul.f32 %v1084, 0.5
      %v1691 = vtanh.pop %v1690
      %v1692 = vadd.f32 %v1691, 1.0
      %v1693 = vmul.f32 %v1692, 0.5
      %v1694 = vmul.f32 %v1084, %v1693
      %v1695 = vmul.f32 %v1688, %v1694
      %v1697 = vsel %vm1166, %v1695, 0
      %1699 = vmatpush.msra.mxu0 0.0
      %1700 = vmatpush.msra.mxu0 0.0
      %1701 = vmatpush.msra.mxu0 0.0
      %1702 = vmatpush.msra.mxu0 0.0
      %1703 = vmatpush.msra.mxu0 0.0
      %1704 = vmatpush.msra.mxu0 0.0
      %1705 = vmatpush.msra.mxu0 0.0
      %1706 = vmatpush.msra.mxu0 0.0
      %1707 = vmatpush.msra.mxu0 0.0
      %1708 = vmatpush.msra.mxu0 0.0
      %1709 = vmatpush.msra.mxu0 0.0
      %1710 = vmatpush.msra.mxu0 0.0
      %1711 = vmatpush.msra.mxu0 %v919
      %1712 = vmatpush.msra.mxu0 %v918
      %1713 = vmatpush.msra.mxu0 %v917
      %1714 = vmatpush.msra.mxu0 %v916
      %1715 = vmatmul.f32.gmra.mxu0 %v1697
      %v1716 = vpop.f32.mrf.mxu0
      %v1717 = vadd.f32 0.0, %v1716
      %1718 = vdwg.mxu0
      %v1719 = vadd.f32 %v893, %v1717
      %v1720 = vmul.f32 %v1134, %v1157
      %v1721 = vadd.f32 %v1720, %v901
      %v1722 = vrot.slane %v900, 2
      %v1724 = vmul.f32 %v1064, %v1722
      %v1725 = vadd.f32 %v1721, %v1724
      %v1726 = vmul.f32 %v1725, 0.5
      %v1727 = vtanh.pop %v1726
      %v1728 = vadd.f32 %v1727, 1.0
      %v1729 = vmul.f32 %v1728, 0.5
      %v1730 = vmul.f32 %v1725, %v1729
      %v1732 = vsel %vm1166, %v1730, 0
      %1734 = vmatpush.msra.mxu0 0.0
      %1735 = vmatpush.msra.mxu0 0.0
      %1736 = vmatpush.msra.mxu0 0.0
      %1737 = vmatpush.msra.mxu0 0.0
      %1738 = vmatpush.msra.mxu0 0.0
      %1739 = vmatpush.msra.mxu0 0.0
      %1740 = vmatpush.msra.mxu0 0.0
      %1741 = vmatpush.msra.mxu0 0.0
      %1742 = vmatpush.msra.mxu0 0.0
      %1743 = vmatpush.msra.mxu0 0.0
      %1744 = vmatpush.msra.mxu0 0.0
      %1745 = vmatpush.msra.mxu0 0.0
      %1746 = vmatpush.msra.mxu0 %v905
      %1747 = vmatpush.msra.mxu0 %v904
      %1748 = vmatpush.msra.mxu0 %v903
      %1749 = vmatpush.msra.mxu0 %v902
      %1750 = vmatmul.f32.gmra.mxu0 %v1732
      %v1751 = vpop.f32.mrf.mxu0
      %v1752 = vadd.f32 %v906, %v1751
      %1753 = vdwg.mxu0
      %vm1754 = vcmp.gt.f32.partialorder %v1752, 20.0
      %v1755 = vmin.f32 %v1752, 20.0
      %v1756 = vmul.f32 %v1755, 1.442695
      %v1757 = vpow.pop %v1756
      %v1758 = vadd.f32 %v1757, 1.0
      %v1759 = vlog2.pop %v1758
      %v1760 = vmul.f32 %v1759, 0.6931472
      %v1761 = vsel %vm1754, %v1752, %v1760
      %1762 = vmatpush.msra.mxu0 0.0
      %1763 = vmatpush.msra.mxu0 0.0
      %1764 = vmatpush.msra.mxu0 0.0
      %1765 = vmatpush.msra.mxu0 0.0
      %1766 = vmatpush.msra.mxu0 0.0
      %1767 = vmatpush.msra.mxu0 0.0
      %1768 = vmatpush.msra.mxu0 0.0
      %1769 = vmatpush.msra.mxu0 0.0
      %1770 = vmatpush.msra.mxu0 0.0
      %1771 = vmatpush.msra.mxu0 0.0
      %1772 = vmatpush.msra.mxu0 0.0
      %1773 = vmatpush.msra.mxu0 0.0
      %1774 = vmatpush.msra.mxu0 %v911
      %1775 = vmatpush.msra.mxu0 %v910
      %1776 = vmatpush.msra.mxu0 %v909
      %1777 = vmatpush.msra.mxu0 %v908
      %1778 = vmatmul.f32.gmra.mxu0 %v1732
      %v1779 = vpop.f32.mrf.mxu0
      %v1780 = vadd.f32 0.0, %v1779
      %1781 = vdwg.mxu0
      %1782 = vmatpush.msra.mxu0 0.0
      %1783 = vmatpush.msra.mxu0 0.0
      %1784 = vmatpush.msra.mxu0 0.0
      %1785 = vmatpush.msra.mxu0 0.0
      %1786 = vmatpush.msra.mxu0 0.0
      %1787 = vmatpush.msra.mxu0 0.0
      %1788 = vmatpush.msra.mxu0 0.0
      %1789 = vmatpush.msra.mxu0 0.0
      %1790 = vmatpush.msra.mxu0 0.0
      %1791 = vmatpush.msra.mxu0 0.0
      %1792 = vmatpush.msra.mxu0 0.0
      %1793 = vmatpush.msra.mxu0 0.0
      %1794 = vmatpush.msra.mxu0 %v915
      %1795 = vmatpush.msra.mxu0 %v914
      %1796 = vmatpush.msra.mxu0 %v913
      %1797 = vmatpush.msra.mxu0 %v912
      %1798 = vmatmul.f32.gmra.mxu0 %v1732
      %v1799 = vpop.f32.mrf.mxu0
      %v1800 = vadd.f32 0.0, %v1799
      %1801 = vdwg.mxu0
      %v1802 = vmul.f32 %v1761, %v1730
      %v1804 = vsel %vm1166, %v1802, 0
      %1806 = vmatpush.msra.mxu0 0.0
      %1807 = vmatpush.msra.mxu0 0.0
      %1808 = vmatpush.msra.mxu0 0.0
      %1809 = vmatpush.msra.mxu0 0.0
      %1810 = vmatpush.msra.mxu0 0.0
      %1811 = vmatpush.msra.mxu0 0.0
      %1812 = vmatpush.msra.mxu0 0.0
      %1813 = vmatpush.msra.mxu0 0.0
      %1814 = vmatpush.msra.mxu0 0.0
      %1815 = vmatpush.msra.mxu0 0.0
      %1816 = vmatpush.msra.mxu0 0.0
      %1817 = vmatpush.msra.mxu0 0.0
      %1818 = vmatpush.msra.mxu0 %v1289
      %1819 = vmatpush.msra.mxu0 %v1281
      %1820 = vmatpush.msra.mxu0 %v1273
      %1821 = vmatpush.msra.mxu0 %v1262
      %1822 = vmatmul.f32.gmra.mxu0 %v1804
      %v1823 = vpop.f32.mrf.mxu0
      %v1824 = vadd.f32 0.0, %v1823
      %1825 = vdwg.mxu0
      %1826 = vmatpush.msra.mxu0 0.0
      %1827 = vmatpush.msra.mxu0 0.0
      %1828 = vmatpush.msra.mxu0 0.0
      %1829 = vmatpush.msra.mxu0 0.0
      %1830 = vmatpush.msra.mxu0 0.0
      %1831 = vmatpush.msra.mxu0 0.0
      %1832 = vmatpush.msra.mxu0 0.0
      %1833 = vmatpush.msra.mxu0 0.0
      %1834 = vmatpush.msra.mxu0 0.0
      %1835 = vmatpush.msra.mxu0 0.0
      %1836 = vmatpush.msra.mxu0 0.0
      %1837 = vmatpush.msra.mxu0 0.0
      %1838 = vmatpush.msra.mxu0 %v1291
      %1839 = vmatpush.msra.mxu0 %v1283
      %1840 = vmatpush.msra.mxu0 %v1275
      %1841 = vmatpush.msra.mxu0 %v1265
      %1842 = vmatmul.f32.gmra.mxu0 %v1804
      %v1843 = vpop.f32.mrf.mxu0
      %v1844 = vadd.f32 0.0, %v1843
      %1845 = vdwg.mxu0
      %1846 = vmatpush.msra.mxu0 0.0
      %1847 = vmatpush.msra.mxu0 0.0
      %1848 = vmatpush.msra.mxu0 0.0
      %1849 = vmatpush.msra.mxu0 0.0
      %1850 = vmatpush.msra.mxu0 0.0
      %1851 = vmatpush.msra.mxu0 0.0
      %1852 = vmatpush.msra.mxu0 0.0
      %1853 = vmatpush.msra.mxu0 0.0
      %1854 = vmatpush.msra.mxu0 0.0
      %1855 = vmatpush.msra.mxu0 0.0
      %1856 = vmatpush.msra.mxu0 0.0
      %1857 = vmatpush.msra.mxu0 0.0
      %1858 = vmatpush.msra.mxu0 %v1293
      %1859 = vmatpush.msra.mxu0 %v1285
      %1860 = vmatpush.msra.mxu0 %v1277
      %1861 = vmatpush.msra.mxu0 %v1268
      %1862 = vmatmul.f32.gmra.mxu0 %v1804
      %v1863 = vpop.f32.mrf.mxu0
      %v1864 = vadd.f32 0.0, %v1863
      %1865 = vdwg.mxu0
      %1866 = vmatpush.msra.mxu0 0.0
      %1867 = vmatpush.msra.mxu0 0.0
      %1868 = vmatpush.msra.mxu0 0.0
      %1869 = vmatpush.msra.mxu0 0.0
      %1870 = vmatpush.msra.mxu0 0.0
      %1871 = vmatpush.msra.mxu0 0.0
      %1872 = vmatpush.msra.mxu0 0.0
      %1873 = vmatpush.msra.mxu0 0.0
      %1874 = vmatpush.msra.mxu0 0.0
      %1875 = vmatpush.msra.mxu0 0.0
      %1876 = vmatpush.msra.mxu0 0.0
      %1877 = vmatpush.msra.mxu0 0.0
      %1878 = vmatpush.msra.mxu0 %v1295
      %1879 = vmatpush.msra.mxu0 %v1287
      %1880 = vmatpush.msra.mxu0 %v1279
      %1881 = vmatpush.msra.mxu0 %v1271
      %1882 = vmatmul.f32.gmra.mxu0 %v1804
      %v1883 = vpop.f32.mrf.mxu0
      %v1884 = vadd.f32 0.0, %v1883
      %1885 = vdwg.mxu0
      %v1887 = vsel %vm305, %v1780, 0
      %1889 = vmatpush.msra.mxu0 0.0
      %1890 = vmatpush.msra.mxu0 0.0
      %1891 = vmatpush.msra.mxu0 0.0
      %1892 = vmatpush.msra.mxu0 0.0
      %1893 = vmatpush.msra.mxu0 0.0
      %1894 = vmatpush.msra.mxu0 0.0
      %1895 = vmatpush.msra.mxu0 0.0
      %1896 = vmatpush.msra.mxu0 0.0
      %1897 = vmatpush.msra.mxu0 0.0
      %1898 = vmatpush.msra.mxu0 0.0
      %1899 = vmatpush.msra.mxu0 0.0
      %1900 = vmatpush.msra.mxu0 0.0
      %1901 = vmatpush.msra.mxu0 0.0
      %1902 = vmatpush.msra.mxu0 0.0
      %1903 = vmatpush.msra.mxu0 %v1420
      %1904 = vmatpush.msra.mxu0 %v1409
      %1905 = vmatmul.f32.gmra.mxu0 %v1887
      %v1906 = vpop.f32.mrf.mxu0
      %v1907 = vadd.f32 0.0, %v1906
      %1908 = vdwg.mxu0
      %1909 = vmatpush.msra.mxu0 0.0
      %1910 = vmatpush.msra.mxu0 0.0
      %1911 = vmatpush.msra.mxu0 0.0
      %1912 = vmatpush.msra.mxu0 0.0
      %1913 = vmatpush.msra.mxu0 0.0
      %1914 = vmatpush.msra.mxu0 0.0
      %1915 = vmatpush.msra.mxu0 0.0
      %1916 = vmatpush.msra.mxu0 0.0
      %1917 = vmatpush.msra.mxu0 0.0
      %1918 = vmatpush.msra.mxu0 0.0
      %1919 = vmatpush.msra.mxu0 0.0
      %1920 = vmatpush.msra.mxu0 0.0
      %1921 = vmatpush.msra.mxu0 0.0
      %1922 = vmatpush.msra.mxu0 0.0
      %1923 = vmatpush.msra.mxu0 %v1422
      %1924 = vmatpush.msra.mxu0 %v1412
      %1925 = vmatmul.f32.gmra.mxu0 %v1887
      %v1926 = vpop.f32.mrf.mxu0
      %v1927 = vadd.f32 0.0, %v1926
      %1928 = vdwg.mxu0
      %1929 = vmatpush.msra.mxu0 0.0
      %1930 = vmatpush.msra.mxu0 0.0
      %1931 = vmatpush.msra.mxu0 0.0
      %1932 = vmatpush.msra.mxu0 0.0
      %1933 = vmatpush.msra.mxu0 0.0
      %1934 = vmatpush.msra.mxu0 0.0
      %1935 = vmatpush.msra.mxu0 0.0
      %1936 = vmatpush.msra.mxu0 0.0
      %1937 = vmatpush.msra.mxu0 0.0
      %1938 = vmatpush.msra.mxu0 0.0
      %1939 = vmatpush.msra.mxu0 0.0
      %1940 = vmatpush.msra.mxu0 0.0
      %1941 = vmatpush.msra.mxu0 0.0
      %1942 = vmatpush.msra.mxu0 0.0
      %1943 = vmatpush.msra.mxu0 %v1424
      %1944 = vmatpush.msra.mxu0 %v1415
      %1945 = vmatmul.f32.gmra.mxu0 %v1887
      %v1946 = vpop.f32.mrf.mxu0
      %v1947 = vadd.f32 0.0, %v1946
      %1948 = vdwg.mxu0
      %1949 = vmatpush.msra.mxu0 0.0
      %1950 = vmatpush.msra.mxu0 0.0
      %1951 = vmatpush.msra.mxu0 0.0
      %1952 = vmatpush.msra.mxu0 0.0
      %1953 = vmatpush.msra.mxu0 0.0
      %1954 = vmatpush.msra.mxu0 0.0
      %1955 = vmatpush.msra.mxu0 0.0
      %1956 = vmatpush.msra.mxu0 0.0
      %1957 = vmatpush.msra.mxu0 0.0
      %1958 = vmatpush.msra.mxu0 0.0
      %1959 = vmatpush.msra.mxu0 0.0
      %1960 = vmatpush.msra.mxu0 0.0
      %1961 = vmatpush.msra.mxu0 0.0
      %1962 = vmatpush.msra.mxu0 0.0
      %1963 = vmatpush.msra.mxu0 %v1426
      %1964 = vmatpush.msra.mxu0 %v1418
      %1965 = vmatmul.f32.gmra.mxu0 %v1887
      %v1966 = vpop.f32.mrf.mxu0
      %v1967 = vadd.f32 0.0, %v1966
      %1968 = vdwg.mxu0
      %v1969 = vmul.f32 %v1824, %v1907
      %v1970 = vmul.f32 %v1844, %v1927
      %v1971 = vmul.f32 %v1864, %v1947
      %v1972 = vmul.f32 %v1884, %v1967
      %v1974 = vsel %vm1166, %v1761, 0
      %1976 = vmatpush.msra.mxu0 0.0
      %1977 = vmatpush.msra.mxu0 0.0
      %1978 = vmatpush.msra.mxu0 0.0
      %1979 = vmatpush.msra.mxu0 0.0
      %1980 = vmatpush.msra.mxu0 0.0
      %1981 = vmatpush.msra.mxu0 0.0
      %1982 = vmatpush.msra.mxu0 0.0
      %1983 = vmatpush.msra.mxu0 0.0
      %1984 = vmatpush.msra.mxu0 0.0
      %1985 = vmatpush.msra.mxu0 0.0
      %1986 = vmatpush.msra.mxu0 0.0
      %1987 = vmatpush.msra.mxu0 0.0
      %1988 = vmatpush.msra.mxu0 %v1289
      %1989 = vmatpush.msra.mxu0 %v1281
      %1990 = vmatpush.msra.mxu0 %v1273
      %1991 = vmatpush.msra.mxu0 %v1262
      %1992 = vmatmul.f32.gmra.mxu0 %v1974
      %v1993 = vpop.f32.mrf.mxu0
      %v1994 = vadd.f32 0.0, %v1993
      %1995 = vdwg.mxu0
      %1996 = vmatpush.msra.mxu0 0.0
      %1997 = vmatpush.msra.mxu0 0.0
      %1998 = vmatpush.msra.mxu0 0.0
      %1999 = vmatpush.msra.mxu0 0.0
      %2000 = vmatpush.msra.mxu0 0.0
      %2001 = vmatpush.msra.mxu0 0.0
      %2002 = vmatpush.msra.mxu0 0.0
      %2003 = vmatpush.msra.mxu0 0.0
      %2004 = vmatpush.msra.mxu0 0.0
      %2005 = vmatpush.msra.mxu0 0.0
      %2006 = vmatpush.msra.mxu0 0.0
      %2007 = vmatpush.msra.mxu0 0.0
      %2008 = vmatpush.msra.mxu0 %v1291
      %2009 = vmatpush.msra.mxu0 %v1283
      %2010 = vmatpush.msra.mxu0 %v1275
      %2011 = vmatpush.msra.mxu0 %v1265
      %2012 = vmatmul.f32.gmra.mxu0 %v1974
      %v2013 = vpop.f32.mrf.mxu0
      %v2014 = vadd.f32 0.0, %v2013
      %2015 = vdwg.mxu0
      %2016 = vmatpush.msra.mxu0 0.0
      %2017 = vmatpush.msra.mxu0 0.0
      %2018 = vmatpush.msra.mxu0 0.0
      %2019 = vmatpush.msra.mxu0 0.0
      %2020 = vmatpush.msra.mxu0 0.0
      %2021 = vmatpush.msra.mxu0 0.0
      %2022 = vmatpush.msra.mxu0 0.0
      %2023 = vmatpush.msra.mxu0 0.0
      %2024 = vmatpush.msra.mxu0 0.0
      %2025 = vmatpush.msra.mxu0 0.0
      %2026 = vmatpush.msra.mxu0 0.0
      %2027 = vmatpush.msra.mxu0 0.0
      %2028 = vmatpush.msra.mxu0 %v1293
      %2029 = vmatpush.msra.mxu0 %v1285
      %2030 = vmatpush.msra.mxu0 %v1277
      %2031 = vmatpush.msra.mxu0 %v1268
      %2032 = vmatmul.f32.gmra.mxu0 %v1974
      %v2033 = vpop.f32.mrf.mxu0
      %v2034 = vadd.f32 0.0, %v2033
      %2035 = vdwg.mxu0
      %2036 = vmatpush.msra.mxu0 0.0
      %2037 = vmatpush.msra.mxu0 0.0
      %2038 = vmatpush.msra.mxu0 0.0
      %2039 = vmatpush.msra.mxu0 0.0
      %2040 = vmatpush.msra.mxu0 0.0
      %2041 = vmatpush.msra.mxu0 0.0
      %2042 = vmatpush.msra.mxu0 0.0
      %2043 = vmatpush.msra.mxu0 0.0
      %2044 = vmatpush.msra.mxu0 0.0
      %2045 = vmatpush.msra.mxu0 0.0
      %2046 = vmatpush.msra.mxu0 0.0
      %2047 = vmatpush.msra.mxu0 0.0
      %2048 = vmatpush.msra.mxu0 %v1295
      %2049 = vmatpush.msra.mxu0 %v1287
      %2050 = vmatpush.msra.mxu0 %v1279
      %2051 = vmatpush.msra.mxu0 %v1271
      %2052 = vmatmul.f32.gmra.mxu0 %v1974
      %v2053 = vpop.f32.mrf.mxu0
      %v2054 = vadd.f32 0.0, %v2053
      %2055 = vdwg.mxu0
      %v2057 = vperm.slane %v920, 0
      %v2058 = vperm.slane %v920, 1
      %v2059 = vperm.slane %v920, 2
      %v2060 = vperm.slane %v920, 3
      %v2065 = vmul.f32 %v1994, %v2057
      %v2066 = vmul.f32 %v2014, %v2058
      %v2067 = vmul.f32 %v2034, %v2059
      %v2068 = vmul.f32 %v2054, %v2060
      %v2069 = vmul.f32 %v2065, 1.442695
      %v2070 = vpow.pop %v2069
      %v2071 = vmul.f32 %v2066, 1.442695
      %v2072 = vpow.pop %v2071
      %v2073 = vmul.f32 %v2067, 1.442695
      %v2074 = vpow.pop %v2073
      %v2075 = vmul.f32 %v2068, 1.442695
      %v2076 = vpow.pop %v2075
      %v2077 = vmul.f32 %v2070, %v1518
      %v2078 = vmul.f32 %v2072, %v1519
      %v2079 = vmul.f32 %v2074, %v1520
      %v2080 = vmul.f32 %v2076, %v1521
      %v2081 = vadd.f32 %v2077, %v1969
      %v2082 = vadd.f32 %v2078, %v1970
      %v2083 = vadd.f32 %v2079, %v1971
      %v2084 = vadd.f32 %v2080, %v1972
      %v2086 = vsel %vm305, %v1800, 0
      %2088 = vmatpush.msra.mxu0 0.0
      %2089 = vmatpush.msra.mxu0 0.0
      %2090 = vmatpush.msra.mxu0 0.0
      %2091 = vmatpush.msra.mxu0 0.0
      %2092 = vmatpush.msra.mxu0 0.0
      %2093 = vmatpush.msra.mxu0 0.0
      %2094 = vmatpush.msra.mxu0 0.0
      %2095 = vmatpush.msra.mxu0 0.0
      %2096 = vmatpush.msra.mxu0 0.0
      %2097 = vmatpush.msra.mxu0 0.0
      %2098 = vmatpush.msra.mxu0 0.0
      %2099 = vmatpush.msra.mxu0 0.0
      %2100 = vmatpush.msra.mxu0 0.0
      %2101 = vmatpush.msra.mxu0 0.0
      %2102 = vmatpush.msra.mxu0 %v1420
      %2103 = vmatpush.msra.mxu0 %v1409
      %2104 = vmatmul.f32.gmra.mxu0 %v2086
      %v2105 = vpop.f32.mrf.mxu0
      %v2106 = vadd.f32 0.0, %v2105
      %2107 = vdwg.mxu0
      %2108 = vmatpush.msra.mxu0 0.0
      %2109 = vmatpush.msra.mxu0 0.0
      %2110 = vmatpush.msra.mxu0 0.0
      %2111 = vmatpush.msra.mxu0 0.0
      %2112 = vmatpush.msra.mxu0 0.0
      %2113 = vmatpush.msra.mxu0 0.0
      %2114 = vmatpush.msra.mxu0 0.0
      %2115 = vmatpush.msra.mxu0 0.0
      %2116 = vmatpush.msra.mxu0 0.0
      %2117 = vmatpush.msra.mxu0 0.0
      %2118 = vmatpush.msra.mxu0 0.0
      %2119 = vmatpush.msra.mxu0 0.0
      %2120 = vmatpush.msra.mxu0 0.0
      %2121 = vmatpush.msra.mxu0 0.0
      %2122 = vmatpush.msra.mxu0 %v1422
      %2123 = vmatpush.msra.mxu0 %v1412
      %2124 = vmatmul.f32.gmra.mxu0 %v2086
      %v2125 = vpop.f32.mrf.mxu0
      %v2126 = vadd.f32 0.0, %v2125
      %2127 = vdwg.mxu0
      %2128 = vmatpush.msra.mxu0 0.0
      %2129 = vmatpush.msra.mxu0 0.0
      %2130 = vmatpush.msra.mxu0 0.0
      %2131 = vmatpush.msra.mxu0 0.0
      %2132 = vmatpush.msra.mxu0 0.0
      %2133 = vmatpush.msra.mxu0 0.0
      %2134 = vmatpush.msra.mxu0 0.0
      %2135 = vmatpush.msra.mxu0 0.0
      %2136 = vmatpush.msra.mxu0 0.0
      %2137 = vmatpush.msra.mxu0 0.0
      %2138 = vmatpush.msra.mxu0 0.0
      %2139 = vmatpush.msra.mxu0 0.0
      %2140 = vmatpush.msra.mxu0 0.0
      %2141 = vmatpush.msra.mxu0 0.0
      %2142 = vmatpush.msra.mxu0 %v1424
      %2143 = vmatpush.msra.mxu0 %v1415
      %2144 = vmatmul.f32.gmra.mxu0 %v2086
      %v2145 = vpop.f32.mrf.mxu0
      %v2146 = vadd.f32 0.0, %v2145
      %2147 = vdwg.mxu0
      %2148 = vmatpush.msra.mxu0 0.0
      %2149 = vmatpush.msra.mxu0 0.0
      %2150 = vmatpush.msra.mxu0 0.0
      %2151 = vmatpush.msra.mxu0 0.0
      %2152 = vmatpush.msra.mxu0 0.0
      %2153 = vmatpush.msra.mxu0 0.0
      %2154 = vmatpush.msra.mxu0 0.0
      %2155 = vmatpush.msra.mxu0 0.0
      %2156 = vmatpush.msra.mxu0 0.0
      %2157 = vmatpush.msra.mxu0 0.0
      %2158 = vmatpush.msra.mxu0 0.0
      %2159 = vmatpush.msra.mxu0 0.0
      %2160 = vmatpush.msra.mxu0 0.0
      %2161 = vmatpush.msra.mxu0 0.0
      %2162 = vmatpush.msra.mxu0 %v1426
      %2163 = vmatpush.msra.mxu0 %v1418
      %2164 = vmatmul.f32.gmra.mxu0 %v2086
      %v2165 = vpop.f32.mrf.mxu0
      %v2166 = vadd.f32 0.0, %v2165
      %2167 = vdwg.mxu0
      %v2168 = vmul.f32 %v2081, %v2106
      %v2169 = vmul.f32 %v2082, %v2126
      %v2170 = vmul.f32 %v2083, %v2146
      %v2171 = vmul.f32 %v2084, %v2166
      %v2172 = vmul.f32 %v907, %v1730
      %2173 = vmatpush.msra.mxu0 %v968
      %2174 = vmatpush.msra.mxu0 %v967
      %2175 = vmatpush.msra.mxu0 %v966
      %2176 = vmatpush.msra.mxu0 %v965
      %2177 = vmatpush.msra.mxu0 %v964
      %2178 = vmatpush.msra.mxu0 %v963
      %2179 = vmatpush.msra.mxu0 %v962
      %2180 = vmatpush.msra.mxu0 %v961
      %2181 = vmatpush.msra.mxu0 %v960
      %2182 = vmatpush.msra.mxu0 %v959
      %2183 = vmatpush.msra.mxu0 %v958
      %2184 = vmatpush.msra.mxu0 %v957
      %2185 = vmatpush.msra.mxu0 %v956
      %2186 = vmatpush.msra.mxu0 %v955
      %2187 = vmatpush.msra.mxu0 %v954
      %2188 = vmatpush.msra.mxu0 %v953
      %2189 = vmatmul.f32.gmra.mxu0 %v2168
      %v2190 = vpop.f32.mrf.mxu0
      %v2191 = vadd.f32 %v2172, %v2190
      %2192 = vdwg.mxu0
      %2193 = vmatpush.msra.mxu0 %v984
      %2194 = vmatpush.msra.mxu0 %v983
      %2195 = vmatpush.msra.mxu0 %v982
      %2196 = vmatpush.msra.mxu0 %v981
      %2197 = vmatpush.msra.mxu0 %v980
      %2198 = vmatpush.msra.mxu0 %v979
      %2199 = vmatpush.msra.mxu0 %v978
      %2200 = vmatpush.msra.mxu0 %v977
      %2201 = vmatpush.msra.mxu0 %v976
      %2202 = vmatpush.msra.mxu0 %v975
      %2203 = vmatpush.msra.mxu0 %v974
      %2204 = vmatpush.msra.mxu0 %v973
      %2205 = vmatpush.msra.mxu0 %v972
      %2206 = vmatpush.msra.mxu0 %v971
      %2207 = vmatpush.msra.mxu0 %v970
      %2208 = vmatpush.msra.mxu0 %v969
      %2209 = vmatmul.f32.gmra.mxu0 %v2169
      %v2210 = vpop.f32.mrf.mxu0
      %v2211 = vadd.f32 %v2191, %v2210
      %2212 = vdwg.mxu0
      %2213 = vmatpush.msra.mxu0 %v1000
      %2214 = vmatpush.msra.mxu0 %v999
      %2215 = vmatpush.msra.mxu0 %v998
      %2216 = vmatpush.msra.mxu0 %v997
      %2217 = vmatpush.msra.mxu0 %v996
      %2218 = vmatpush.msra.mxu0 %v995
      %2219 = vmatpush.msra.mxu0 %v994
      %2220 = vmatpush.msra.mxu0 %v993
      %2221 = vmatpush.msra.mxu0 %v992
      %2222 = vmatpush.msra.mxu0 %v991
      %2223 = vmatpush.msra.mxu0 %v990
      %2224 = vmatpush.msra.mxu0 %v989
      %2225 = vmatpush.msra.mxu0 %v988
      %2226 = vmatpush.msra.mxu0 %v987
      %2227 = vmatpush.msra.mxu0 %v986
      %2228 = vmatpush.msra.mxu0 %v985
      %2229 = vmatmul.f32.gmra.mxu0 %v2170
      %v2230 = vpop.f32.mrf.mxu0
      %v2231 = vadd.f32 %v2211, %v2230
      %2232 = vdwg.mxu0
      %2233 = vmatpush.msra.mxu0 %v1016
      %2234 = vmatpush.msra.mxu0 %v1015
      %2235 = vmatpush.msra.mxu0 %v1014
      %2236 = vmatpush.msra.mxu0 %v1013
      %2237 = vmatpush.msra.mxu0 %v1012
      %2238 = vmatpush.msra.mxu0 %v1011
      %2239 = vmatpush.msra.mxu0 %v1010
      %2240 = vmatpush.msra.mxu0 %v1009
      %2241 = vmatpush.msra.mxu0 %v1008
      %2242 = vmatpush.msra.mxu0 %v1007
      %2243 = vmatpush.msra.mxu0 %v1006
      %2244 = vmatpush.msra.mxu0 %v1005
      %2245 = vmatpush.msra.mxu0 %v1004
      %2246 = vmatpush.msra.mxu0 %v1003
      %2247 = vmatpush.msra.mxu0 %v1002
      %2248 = vmatpush.msra.mxu0 %v1001
      %2249 = vmatmul.f32.gmra.mxu0 %v2171
      %v2250 = vpop.f32.mrf.mxu0
      %v2251 = vadd.f32 %v2231, %v2250
      %2252 = vdwg.mxu0
      %v2253 = vmul.f32 %v1154, 0.5
      %v2254 = vtanh.pop %v2253
      %v2255 = vadd.f32 %v2254, 1.0
      %v2256 = vmul.f32 %v2255, 0.5
      %v2257 = vmul.f32 %v1154, %v2256
      %v2258 = vmul.f32 %v2251, %v2257
      %v2260 = vsel %vm1166, %v2258, 0
      %2262 = vmatpush.msra.mxu0 0.0
      %2263 = vmatpush.msra.mxu0 0.0
      %2264 = vmatpush.msra.mxu0 0.0
      %2265 = vmatpush.msra.mxu0 0.0
      %2266 = vmatpush.msra.mxu0 0.0
      %2267 = vmatpush.msra.mxu0 0.0
      %2268 = vmatpush.msra.mxu0 0.0
      %2269 = vmatpush.msra.mxu0 0.0
      %2270 = vmatpush.msra.mxu0 0.0
      %2271 = vmatpush.msra.mxu0 0.0
      %2272 = vmatpush.msra.mxu0 0.0
      %2273 = vmatpush.msra.mxu0 0.0
      %2274 = vmatpush.msra.mxu0 %v919
      %2275 = vmatpush.msra.mxu0 %v918
      %2276 = vmatpush.msra.mxu0 %v917
      %2277 = vmatpush.msra.mxu0 %v916
      %2278 = vmatmul.f32.gmra.mxu0 %v2260
      %v2279 = vpop.f32.mrf.mxu0
      %v2280 = vadd.f32 0.0, %v2279
      %2281 = vdwg.mxu0
      %2283 = vrot.lane.b32.xlu0 %v2280, 16
      %v2284 = vpop.permute.xlu0 %2283
      %v2286 = vadd.f32 %v893, %v2284
      %v2287 = vld [vmem:[%s1 + $0x26b] sm:$0x1]
      %v2288 = vld [vmem:[%s1 + $0x26c] sm:$0xff]
      %v2289 = vld [vmem:[%s1 + $0x274] sm:$0xff]
      %v2290 = vld [vmem:[%s1 + $0x27c] sm:$0xff]
      %v2291 = vld [vmem:[%s1 + $0x284] sm:$0xff]
      %v2292 = vld [vmem:[%s1 + $0x28c] sm:$0xf]
      %v2293 = vld [vmem:[%s1 + $0x290] sm:$0x1]
      %v2294 = vld [vmem:[%s1 + $0x291] sm:$0xff]
      %v2295 = vld [vmem:[%s1 + $0x299] sm:$0xff]
      %v2296 = vld [vmem:[%s1 + $0x2a1] sm:$0xff]
      %v2297 = vld [vmem:[%s1 + $0x2a9] sm:$0xff]
      %v2298 = vld [vmem:[%s1 + $0x2b1] sm:$0x1]
      %v2299 = vld [vmem:[%s1 + $0x2b2] sm:$0x1]
      %v2300 = vld [vmem:[%s1 + $0x2b3] sm:$0xff]
      %v2301 = vld [vmem:[%s1 + $0x2bb] sm:$0xff]
      %v2302 = vld [vmem:[%s1 + $0x2c3] sm:$0xff]
      %v2303 = vld [vmem:[%s1 + $0x2cb] sm:$0xff]
      %v2304 = vld [vmem:[%s1 + $0x2d3] sm:$0xff]
      %v2305 = vld [vmem:[%s1 + $0x2db] sm:$0xff]
      %v2306 = vld [vmem:[%s1 + $0x2e3] sm:$0xff]
      %v2307 = vld [vmem:[%s1 + $0x2eb] sm:$0xff]
      %v2308 = vld [vmem:[%s1 + $0x2f3] sm:$0xff]
      %v2309 = vld [vmem:[%s1 + $0x2fb] sm:$0xff]
      %v2310 = vld [vmem:[%s1 + $0x303] sm:$0xff]
      %v2311 = vld [vmem:[%s1 + $0x30b] sm:$0xff]
      %s2312 = scalar_lea.vmem %s2, 1
      %v2313 = vld [vmem:[%s2312] ss:$8 sm:$0xf]
      %v2314 = vmul.f32 %v1719, %v1719
      %v2315 = vsel %vm1018, %v2314, 0.0
      %2316 = vadd.xlane.f32.xlu0 %v2315
      %v2317 = vpop.xlane.xlu0 %2316
      %v2318 = vmul.f32 %v2317, %v1028
      %v2319 = vadd.f32 %v2318, 1e-05
      %v2320 = vrsqrt.pop %v2319
      %v2321 = vmul.f32 %v2320, %v2319
      %v2322 = vmul.f32 %v2321, %v2320
      %v2323 = vmul.f32 0.5, %v2322
      %v2324 = vsub.f32 1.5, %v2323
      %v2325 = vmul.f32 %v2320, %v2324
      %vm2326 = vweird.f32 %v2319
      %vm2327 = vweird.f32 %v2320
      %vm2328 = vmor %vm2326, %vm2327
      %v2329 = vsel %vm2328, %v2320, %v2325
      %v2330 = vmul.f32 %v1719, %v2329
      %v2331 = vmul.f32 %v2330, %v2287
      %v2333 = vsel %vm305, %v2331, 0
      %2335 = vmatpush.msra.mxu0 0.0
      %2336 = vmatpush.msra.mxu0 0.0
      %2337 = vmatpush.msra.mxu0 0.0
      %2338 = vmatpush.msra.mxu0 0.0
      %2339 = vmatpush.msra.mxu0 0.0
      %2340 = vmatpush.msra.mxu0 0.0
      %2341 = vmatpush.msra.mxu0 0.0
      %2342 = vmatpush.msra.mxu0 0.0
      %2343 = vmatpush.msra.mxu0 0.0
      %2344 = vmatpush.msra.mxu0 0.0
      %2345 = vmatpush.msra.mxu0 0.0
      %2346 = vmatpush.msra.mxu0 0.0
      %2347 = vmatpush.msra.mxu0 0.0
      %2348 = vmatpush.msra.mxu0 0.0
      %2349 = vmatpush.msra.mxu0 %v2289
      %2350 = vmatpush.msra.mxu0 %v2288
      %2351 = vmatmul.f32.gmra.mxu0 %v2333
      %v2352 = vpop.f32.mrf.mxu0
      %v2353 = vadd.f32 0.0, %v2352
      %2354 = vdwg.mxu0
      %2355 = vmatpush.msra.mxu0 0.0
      %2356 = vmatpush.msra.mxu0 0.0
      %2357 = vmatpush.msra.mxu0 0.0
      %2358 = vmatpush.msra.mxu0 0.0
      %2359 = vmatpush.msra.mxu0 0.0
      %2360 = vmatpush.msra.mxu0 0.0
      %2361 = vmatpush.msra.mxu0 0.0
      %2362 = vmatpush.msra.mxu0 0.0
      %2363 = vmatpush.msra.mxu0 0.0
      %2364 = vmatpush.msra.mxu0 0.0
      %2365 = vmatpush.msra.mxu0 0.0
      %2366 = vmatpush.msra.mxu0 0.0
      %2367 = vmatpush.msra.mxu0 0.0
      %2368 = vmatpush.msra.mxu0 0.0
      %2369 = vmatpush.msra.mxu0 %v2291
      %2370 = vmatpush.msra.mxu0 %v2290
      %2371 = vmatmul.f32.gmra.mxu0 %v2333
      %v2372 = vpop.f32.mrf.mxu0
      %v2373 = vadd.f32 0.0, %v2372
      %2374 = vdwg.mxu0
      %v2375 = vmul.f32 %v2286, %v2286
      %2377 = vrot.lane.b32.xlu0 %v2375, 112
      %v2378 = vpop.permute.xlu0 %2377
      %v2380 = vsel %vm1018, %v2378, 0.0
      %2381 = vadd.xlane.f32.xlu0 %v2380
      %v2382 = vpop.xlane.xlu0 %2381
      %v2383 = vmul.f32 %v2382, %v1028
      %v2384 = vadd.f32 %v2383, 1e-05
      %v2385 = vrsqrt.pop %v2384
      %v2386 = vmul.f32 %v2385, %v2384
      %v2387 = vmul.f32 %v2386, %v2385
      %v2388 = vmul.f32 0.5, %v2387
      %v2389 = vsub.f32 1.5, %v2388
      %v2390 = vmul.f32 %v2385, %v2389
      %vm2391 = vweird.f32 %v2384
      %vm2392 = vweird.f32 %v2385
      %vm2393 = vmor %vm2391, %vm2392
      %v2394 = vsel %vm2393, %v2385, %v2390
      %v2395 = vmul.f32 %v2286, %v2394
      %2397 = vrot.lane.b32.xlu0 %v2287, 16
      %v2398 = vpop.permute.xlu0 %2397
      %v2400 = vmul.f32 %v2395, %v2398
      %2402 = vrot.lane.b32.xlu0 %v2400, 112
      %v2403 = vpop.permute.xlu0 %2402
      %v2404 = vsel %vm305, %v2403, 0
      %2406 = vmatpush.msra.mxu0 0.0
      %2407 = vmatpush.msra.mxu0 0.0
      %2408 = vmatpush.msra.mxu0 0.0
      %2409 = vmatpush.msra.mxu0 0.0
      %2410 = vmatpush.msra.mxu0 0.0
      %2411 = vmatpush.msra.mxu0 0.0
      %2412 = vmatpush.msra.mxu0 0.0
      %2413 = vmatpush.msra.mxu0 0.0
      %2414 = vmatpush.msra.mxu0 0.0
      %2415 = vmatpush.msra.mxu0 0.0
      %2416 = vmatpush.msra.mxu0 0.0
      %2417 = vmatpush.msra.mxu0 0.0
      %2418 = vmatpush.msra.mxu0 0.0
      %2419 = vmatpush.msra.mxu0 0.0
      %2420 = vmatpush.msra.mxu0 %v2289
      %2421 = vmatpush.msra.mxu0 %v2288
      %2422 = vmatmul.f32.gmra.mxu0 %v2404
      %v2423 = vpop.f32.mrf.mxu0
      %v2424 = vadd.f32 0.0, %v2423
      %2425 = vdwg.mxu0
      %2426 = vmatpush.msra.mxu0 0.0
      %2427 = vmatpush.msra.mxu0 0.0
      %2428 = vmatpush.msra.mxu0 0.0
      %2429 = vmatpush.msra.mxu0 0.0
      %2430 = vmatpush.msra.mxu0 0.0
      %2431 = vmatpush.msra.mxu0 0.0
      %2432 = vmatpush.msra.mxu0 0.0
      %2433 = vmatpush.msra.mxu0 0.0
      %2434 = vmatpush.msra.mxu0 0.0
      %2435 = vmatpush.msra.mxu0 0.0
      %2436 = vmatpush.msra.mxu0 0.0
      %2437 = vmatpush.msra.mxu0 0.0
      %2438 = vmatpush.msra.mxu0 0.0
      %2439 = vmatpush.msra.mxu0 0.0
      %2440 = vmatpush.msra.mxu0 %v2291
      %2441 = vmatpush.msra.mxu0 %v2290
      %2442 = vmatmul.f32.gmra.mxu0 %v2404
      %v2443 = vpop.f32.mrf.mxu0
      %v2444 = vadd.f32 0.0, %v2443
      %2445 = vdwg.mxu0
      %v2447 = vrot.slane %v2292, 3
      %v2449 = vmul.f32 %v2353, %v2447
      %v2450 = vadd.f32 %v2449, %v2293
      %v2451 = vmul.f32 %v2450, 0.5
      %v2452 = vtanh.pop %v2451
      %v2453 = vadd.f32 %v2452, 1.0
      %v2454 = vmul.f32 %v2453, 0.5
      %v2455 = vmul.f32 %v2450, %v2454
      %v2457 = vsel %vm1166, %v2455, 0
      %2459 = vmatpush.msra.mxu0 0.0
      %2460 = vmatpush.msra.mxu0 0.0
      %2461 = vmatpush.msra.mxu0 0.0
      %2462 = vmatpush.msra.mxu0 0.0
      %2463 = vmatpush.msra.mxu0 0.0
      %2464 = vmatpush.msra.mxu0 0.0
      %2465 = vmatpush.msra.mxu0 0.0
      %2466 = vmatpush.msra.mxu0 0.0
      %2467 = vmatpush.msra.mxu0 0.0
      %2468 = vmatpush.msra.mxu0 0.0
      %2469 = vmatpush.msra.mxu0 0.0
      %2470 = vmatpush.msra.mxu0 0.0
      %2471 = vmatpush.msra.mxu0 %v2297
      %2472 = vmatpush.msra.mxu0 %v2296
      %2473 = vmatpush.msra.mxu0 %v2295
      %2474 = vmatpush.msra.mxu0 %v2294
      %2475 = vmatmul.f32.gmra.mxu0 %v2457
      %v2476 = vpop.f32.mrf.mxu0
      %v2477 = vadd.f32 %v2298, %v2476
      %2478 = vdwg.mxu0
      %vm2479 = vcmp.gt.f32.partialorder %v2477, 20.0
      %v2480 = vmin.f32 %v2477, 20.0
      %v2481 = vmul.f32 %v2480, 1.442695
      %v2482 = vpow.pop %v2481
      %v2483 = vadd.f32 %v2482, 1.0
      %v2484 = vlog2.pop %v2483
      %v2485 = vmul.f32 %v2484, 0.6931472
      %v2486 = vsel %vm2479, %v2477, %v2485
      %2487 = vmatpush.msra.mxu0 0.0
      %2488 = vmatpush.msra.mxu0 0.0
      %2489 = vmatpush.msra.mxu0 0.0
      %2490 = vmatpush.msra.mxu0 0.0
      %2491 = vmatpush.msra.mxu0 0.0
      %2492 = vmatpush.msra.mxu0 0.0
      %2493 = vmatpush.msra.mxu0 0.0
      %2494 = vmatpush.msra.mxu0 0.0
      %2495 = vmatpush.msra.mxu0 0.0
      %2496 = vmatpush.msra.mxu0 0.0
      %2497 = vmatpush.msra.mxu0 0.0
      %2498 = vmatpush.msra.mxu0 0.0
      %2499 = vmatpush.msra.mxu0 %v2303
      %2500 = vmatpush.msra.mxu0 %v2302
      %2501 = vmatpush.msra.mxu0 %v2301
      %2502 = vmatpush.msra.mxu0 %v2300
      %2503 = vmatmul.f32.gmra.mxu0 %v2457
      %v2504 = vpop.f32.mrf.mxu0
      %v2505 = vadd.f32 0.0, %v2504
      %2506 = vdwg.mxu0
      %2507 = vmatpush.msra.mxu0 0.0
      %2508 = vmatpush.msra.mxu0 0.0
      %2509 = vmatpush.msra.mxu0 0.0
      %2510 = vmatpush.msra.mxu0 0.0
      %2511 = vmatpush.msra.mxu0 0.0
      %2512 = vmatpush.msra.mxu0 0.0
      %2513 = vmatpush.msra.mxu0 0.0
      %2514 = vmatpush.msra.mxu0 0.0
      %2515 = vmatpush.msra.mxu0 0.0
      %2516 = vmatpush.msra.mxu0 0.0
      %2517 = vmatpush.msra.mxu0 0.0
      %2518 = vmatpush.msra.mxu0 0.0
      %2519 = vmatpush.msra.mxu0 %v2307
      %2520 = vmatpush.msra.mxu0 %v2306
      %2521 = vmatpush.msra.mxu0 %v2305
      %2522 = vmatpush.msra.mxu0 %v2304
      %2523 = vmatmul.f32.gmra.mxu0 %v2457
      %v2524 = vpop.f32.mrf.mxu0
      %v2525 = vadd.f32 0.0, %v2524
      %2526 = vdwg.mxu0
      %v2527 = vmul.f32 %v2486, %v2455
      %v2529 = vsel %vm1166, %v2527, 0
      %2531 = vmatpush.msra.mxu0 0.0
      %2532 = vmatpush.msra.mxu0 0.0
      %2533 = vmatpush.msra.mxu0 0.0
      %2534 = vmatpush.msra.mxu0 0.0
      %2535 = vmatpush.msra.mxu0 0.0
      %2536 = vmatpush.msra.mxu0 0.0
      %2537 = vmatpush.msra.mxu0 0.0
      %2538 = vmatpush.msra.mxu0 0.0
      %2539 = vmatpush.msra.mxu0 0.0
      %2540 = vmatpush.msra.mxu0 0.0
      %2541 = vmatpush.msra.mxu0 0.0
      %2542 = vmatpush.msra.mxu0 0.0
      %2543 = vmatpush.msra.mxu0 %v1289
      %2544 = vmatpush.msra.mxu0 %v1281
      %2545 = vmatpush.msra.mxu0 %v1273
      %2546 = vmatpush.msra.mxu0 %v1262
      %2547 = vmatmul.f32.gmra.mxu0 %v2529
      %v2548 = vpop.f32.mrf.mxu0
      %v2549 = vadd.f32 0.0, %v2548
      %2550 = vdwg.mxu0
      %2551 = vmatpush.msra.mxu0 0.0
      %2552 = vmatpush.msra.mxu0 0.0
      %2553 = vmatpush.msra.mxu0 0.0
      %2554 = vmatpush.msra.mxu0 0.0
      %2555 = vmatpush.msra.mxu0 0.0
      %2556 = vmatpush.msra.mxu0 0.0
      %2557 = vmatpush.msra.mxu0 0.0
      %2558 = vmatpush.msra.mxu0 0.0
      %2559 = vmatpush.msra.mxu0 0.0
      %2560 = vmatpush.msra.mxu0 0.0
      %2561 = vmatpush.msra.mxu0 0.0
      %2562 = vmatpush.msra.mxu0 0.0
      %2563 = vmatpush.msra.mxu0 %v1291
      %2564 = vmatpush.msra.mxu0 %v1283
      %2565 = vmatpush.msra.mxu0 %v1275
      %2566 = vmatpush.msra.mxu0 %v1265
      %2567 = vmatmul.f32.gmra.mxu0 %v2529
      %v2568 = vpop.f32.mrf.mxu0
      %v2569 = vadd.f32 0.0, %v2568
      %2570 = vdwg.mxu0
      %2571 = vmatpush.msra.mxu0 0.0
      %2572 = vmatpush.msra.mxu0 0.0
      %2573 = vmatpush.msra.mxu0 0.0
      %2574 = vmatpush.msra.mxu0 0.0
      %2575 = vmatpush.msra.mxu0 0.0
      %2576 = vmatpush.msra.mxu0 0.0
      %2577 = vmatpush.msra.mxu0 0.0
      %2578 = vmatpush.msra.mxu0 0.0
      %2579 = vmatpush.msra.mxu0 0.0
      %2580 = vmatpush.msra.mxu0 0.0
      %2581 = vmatpush.msra.mxu0 0.0
      %2582 = vmatpush.msra.mxu0 0.0
      %2583 = vmatpush.msra.mxu0 %v1293
      %2584 = vmatpush.msra.mxu0 %v1285
      %2585 = vmatpush.msra.mxu0 %v1277
      %2586 = vmatpush.msra.mxu0 %v1268
      %2587 = vmatmul.f32.gmra.mxu0 %v2529
      %v2588 = vpop.f32.mrf.mxu0
      %v2589 = vadd.f32 0.0, %v2588
      %2590 = vdwg.mxu0
      %2591 = vmatpush.msra.mxu0 0.0
      %2592 = vmatpush.msra.mxu0 0.0
      %2593 = vmatpush.msra.mxu0 0.0
      %2594 = vmatpush.msra.mxu0 0.0
      %2595 = vmatpush.msra.mxu0 0.0
      %2596 = vmatpush.msra.mxu0 0.0
      %2597 = vmatpush.msra.mxu0 0.0
      %2598 = vmatpush.msra.mxu0 0.0
      %2599 = vmatpush.msra.mxu0 0.0
      %2600 = vmatpush.msra.mxu0 0.0
      %2601 = vmatpush.msra.mxu0 0.0
      %2602 = vmatpush.msra.mxu0 0.0
      %2603 = vmatpush.msra.mxu0 %v1295
      %2604 = vmatpush.msra.mxu0 %v1287
      %2605 = vmatpush.msra.mxu0 %v1279
      %2606 = vmatpush.msra.mxu0 %v1271
      %2607 = vmatmul.f32.gmra.mxu0 %v2529
      %v2608 = vpop.f32.mrf.mxu0
      %v2609 = vadd.f32 0.0, %v2608
      %2610 = vdwg.mxu0
      %v2612 = vsel %vm305, %v2505, 0
      %2614 = vmatpush.msra.mxu0 0.0
      %2615 = vmatpush.msra.mxu0 0.0
      %2616 = vmatpush.msra.mxu0 0.0
      %2617 = vmatpush.msra.mxu0 0.0
      %2618 = vmatpush.msra.mxu0 0.0
      %2619 = vmatpush.msra.mxu0 0.0
      %2620 = vmatpush.msra.mxu0 0.0
      %2621 = vmatpush.msra.mxu0 0.0
      %2622 = vmatpush.msra.mxu0 0.0
      %2623 = vmatpush.msra.mxu0 0.0
      %2624 = vmatpush.msra.mxu0 0.0
      %2625 = vmatpush.msra.mxu0 0.0
      %2626 = vmatpush.msra.mxu0 0.0
      %2627 = vmatpush.msra.mxu0 0.0
      %2628 = vmatpush.msra.mxu0 %v1420
      %2629 = vmatpush.msra.mxu0 %v1409
      %2630 = vmatmul.f32.gmra.mxu0 %v2612
      %v2631 = vpop.f32.mrf.mxu0
      %v2632 = vadd.f32 0.0, %v2631
      %2633 = vdwg.mxu0
      %2634 = vmatpush.msra.mxu0 0.0
      %2635 = vmatpush.msra.mxu0 0.0
      %2636 = vmatpush.msra.mxu0 0.0
      %2637 = vmatpush.msra.mxu0 0.0
      %2638 = vmatpush.msra.mxu0 0.0
      %2639 = vmatpush.msra.mxu0 0.0
      %2640 = vmatpush.msra.mxu0 0.0
      %2641 = vmatpush.msra.mxu0 0.0
      %2642 = vmatpush.msra.mxu0 0.0
      %2643 = vmatpush.msra.mxu0 0.0
      %2644 = vmatpush.msra.mxu0 0.0
      %2645 = vmatpush.msra.mxu0 0.0
      %2646 = vmatpush.msra.mxu0 0.0
      %2647 = vmatpush.msra.mxu0 0.0
      %2648 = vmatpush.msra.mxu0 %v1422
      %2649 = vmatpush.msra.mxu0 %v1412
      %2650 = vmatmul.f32.gmra.mxu0 %v2612
      %v2651 = vpop.f32.mrf.mxu0
      %v2652 = vadd.f32 0.0, %v2651
      %2653 = vdwg.mxu0
      %2654 = vmatpush.msra.mxu0 0.0
      %2655 = vmatpush.msra.mxu0 0.0
      %2656 = vmatpush.msra.mxu0 0.0
      %2657 = vmatpush.msra.mxu0 0.0
      %2658 = vmatpush.msra.mxu0 0.0
      %2659 = vmatpush.msra.mxu0 0.0
      %2660 = vmatpush.msra.mxu0 0.0
      %2661 = vmatpush.msra.mxu0 0.0
      %2662 = vmatpush.msra.mxu0 0.0
      %2663 = vmatpush.msra.mxu0 0.0
      %2664 = vmatpush.msra.mxu0 0.0
      %2665 = vmatpush.msra.mxu0 0.0
      %2666 = vmatpush.msra.mxu0 0.0
      %2667 = vmatpush.msra.mxu0 0.0
      %2668 = vmatpush.msra.mxu0 %v1424
      %2669 = vmatpush.msra.mxu0 %v1415
      %2670 = vmatmul.f32.gmra.mxu0 %v2612
      %v2671 = vpop.f32.mrf.mxu0
      %v2672 = vadd.f32 0.0, %v2671
      %2673 = vdwg.mxu0
      %2674 = vmatpush.msra.mxu0 0.0
      %2675 = vmatpush.msra.mxu0 0.0
      %2676 = vmatpush.msra.mxu0 0.0
      %2677 = vmatpush.msra.mxu0 0.0
      %2678 = vmatpush.msra.mxu0 0.0
      %2679 = vmatpush.msra.mxu0 0.0
      %2680 = vmatpush.msra.mxu0 0.0
      %2681 = vmatpush.msra.mxu0 0.0
      %2682 = vmatpush.msra.mxu0 0.0
      %2683 = vmatpush.msra.mxu0 0.0
      %2684 = vmatpush.msra.mxu0 0.0
      %2685 = vmatpush.msra.mxu0 0.0
      %2686 = vmatpush.msra.mxu0 0.0
      %2687 = vmatpush.msra.mxu0 0.0
      %2688 = vmatpush.msra.mxu0 %v1426
      %2689 = vmatpush.msra.mxu0 %v1418
      %2690 = vmatmul.f32.gmra.mxu0 %v2612
      %v2691 = vpop.f32.mrf.mxu0
      %v2692 = vadd.f32 0.0, %v2691
      %2693 = vdwg.mxu0
      %v2694 = vmul.f32 %v2549, %v2632
      %v2695 = vmul.f32 %v2569, %v2652
      %v2696 = vmul.f32 %v2589, %v2672
      %v2697 = vmul.f32 %v2609, %v2692
      %v2699 = vsel %vm305, %v2525, 0
      %2701 = vmatpush.msra.mxu0 0.0
      %2702 = vmatpush.msra.mxu0 0.0
      %2703 = vmatpush.msra.mxu0 0.0
      %2704 = vmatpush.msra.mxu0 0.0
      %2705 = vmatpush.msra.mxu0 0.0
      %2706 = vmatpush.msra.mxu0 0.0
      %2707 = vmatpush.msra.mxu0 0.0
      %2708 = vmatpush.msra.mxu0 0.0
      %2709 = vmatpush.msra.mxu0 0.0
      %2710 = vmatpush.msra.mxu0 0.0
      %2711 = vmatpush.msra.mxu0 0.0
      %2712 = vmatpush.msra.mxu0 0.0
      %2713 = vmatpush.msra.mxu0 0.0
      %2714 = vmatpush.msra.mxu0 0.0
      %2715 = vmatpush.msra.mxu0 %v1420
      %2716 = vmatpush.msra.mxu0 %v1409
      %2717 = vmatmul.f32.gmra.mxu0 %v2699
      %v2718 = vpop.f32.mrf.mxu0
      %v2719 = vadd.f32 0.0, %v2718
      %2720 = vdwg.mxu0
      %2721 = vmatpush.msra.mxu0 0.0
      %2722 = vmatpush.msra.mxu0 0.0
      %2723 = vmatpush.msra.mxu0 0.0
      %2724 = vmatpush.msra.mxu0 0.0
      %2725 = vmatpush.msra.mxu0 0.0
      %2726 = vmatpush.msra.mxu0 0.0
      %2727 = vmatpush.msra.mxu0 0.0
      %2728 = vmatpush.msra.mxu0 0.0
      %2729 = vmatpush.msra.mxu0 0.0
      %2730 = vmatpush.msra.mxu0 0.0
      %2731 = vmatpush.msra.mxu0 0.0
      %2732 = vmatpush.msra.mxu0 0.0
      %2733 = vmatpush.msra.mxu0 0.0
      %2734 = vmatpush.msra.mxu0 0.0
      %2735 = vmatpush.msra.mxu0 %v1422
      %2736 = vmatpush.msra.mxu0 %v1412
      %2737 = vmatmul.f32.gmra.mxu0 %v2699
      %v2738 = vpop.f32.mrf.mxu0
      %v2739 = vadd.f32 0.0, %v2738
      %2740 = vdwg.mxu0
      %2741 = vmatpush.msra.mxu0 0.0
      %2742 = vmatpush.msra.mxu0 0.0
      %2743 = vmatpush.msra.mxu0 0.0
      %2744 = vmatpush.msra.mxu0 0.0
      %2745 = vmatpush.msra.mxu0 0.0
      %2746 = vmatpush.msra.mxu0 0.0
      %2747 = vmatpush.msra.mxu0 0.0
      %2748 = vmatpush.msra.mxu0 0.0
      %2749 = vmatpush.msra.mxu0 0.0
      %2750 = vmatpush.msra.mxu0 0.0
      %2751 = vmatpush.msra.mxu0 0.0
      %2752 = vmatpush.msra.mxu0 0.0
      %2753 = vmatpush.msra.mxu0 0.0
      %2754 = vmatpush.msra.mxu0 0.0
      %2755 = vmatpush.msra.mxu0 %v1424
      %2756 = vmatpush.msra.mxu0 %v1415
      %2757 = vmatmul.f32.gmra.mxu0 %v2699
      %v2758 = vpop.f32.mrf.mxu0
      %v2759 = vadd.f32 0.0, %v2758
      %2760 = vdwg.mxu0
      %2761 = vmatpush.msra.mxu0 0.0
      %2762 = vmatpush.msra.mxu0 0.0
      %2763 = vmatpush.msra.mxu0 0.0
      %2764 = vmatpush.msra.mxu0 0.0
      %2765 = vmatpush.msra.mxu0 0.0
      %2766 = vmatpush.msra.mxu0 0.0
      %2767 = vmatpush.msra.mxu0 0.0
      %2768 = vmatpush.msra.mxu0 0.0
      %2769 = vmatpush.msra.mxu0 0.0
      %2770 = vmatpush.msra.mxu0 0.0
      %2771 = vmatpush.msra.mxu0 0.0
      %2772 = vmatpush.msra.mxu0 0.0
      %2773 = vmatpush.msra.mxu0 0.0
      %2774 = vmatpush.msra.mxu0 0.0
      %2775 = vmatpush.msra.mxu0 %v1426
      %2776 = vmatpush.msra.mxu0 %v1418
      %2777 = vmatmul.f32.gmra.mxu0 %v2699
      %v2778 = vpop.f32.mrf.mxu0
      %v2779 = vadd.f32 0.0, %v2778
      %2780 = vdwg.mxu0
      %v2781 = vmul.f32 %v2694, %v2719
      %v2782 = vmul.f32 %v2695, %v2739
      %v2783 = vmul.f32 %v2696, %v2759
      %v2784 = vmul.f32 %v2697, %v2779
      %v2785 = vmul.f32 %v2299, %v2455
      %2786 = vmatpush.msra.mxu0 %v968
      %2787 = vmatpush.msra.mxu0 %v967
      %2788 = vmatpush.msra.mxu0 %v966
      %2789 = vmatpush.msra.mxu0 %v965
      %2790 = vmatpush.msra.mxu0 %v964
      %2791 = vmatpush.msra.mxu0 %v963
      %2792 = vmatpush.msra.mxu0 %v962
      %2793 = vmatpush.msra.mxu0 %v961
      %2794 = vmatpush.msra.mxu0 %v960
      %2795 = vmatpush.msra.mxu0 %v959
      %2796 = vmatpush.msra.mxu0 %v958
      %2797 = vmatpush.msra.mxu0 %v957
      %2798 = vmatpush.msra.mxu0 %v956
      %2799 = vmatpush.msra.mxu0 %v955
      %2800 = vmatpush.msra.mxu0 %v954
      %2801 = vmatpush.msra.mxu0 %v953
      %2802 = vmatmul.f32.gmra.mxu0 %v2781
      %v2803 = vpop.f32.mrf.mxu0
      %v2804 = vadd.f32 %v2785, %v2803
      %2805 = vdwg.mxu0
      %2806 = vmatpush.msra.mxu0 %v984
      %2807 = vmatpush.msra.mxu0 %v983
      %2808 = vmatpush.msra.mxu0 %v982
      %2809 = vmatpush.msra.mxu0 %v981
      %2810 = vmatpush.msra.mxu0 %v980
      %2811 = vmatpush.msra.mxu0 %v979
      %2812 = vmatpush.msra.mxu0 %v978
      %2813 = vmatpush.msra.mxu0 %v977
      %2814 = vmatpush.msra.mxu0 %v976
      %2815 = vmatpush.msra.mxu0 %v975
      %2816 = vmatpush.msra.mxu0 %v974
      %2817 = vmatpush.msra.mxu0 %v973
      %2818 = vmatpush.msra.mxu0 %v972
      %2819 = vmatpush.msra.mxu0 %v971
      %2820 = vmatpush.msra.mxu0 %v970
      %2821 = vmatpush.msra.mxu0 %v969
      %2822 = vmatmul.f32.gmra.mxu0 %v2782
      %v2823 = vpop.f32.mrf.mxu0
      %v2824 = vadd.f32 %v2804, %v2823
      %2825 = vdwg.mxu0
      %2826 = vmatpush.msra.mxu0 %v1000
      %2827 = vmatpush.msra.mxu0 %v999
      %2828 = vmatpush.msra.mxu0 %v998
      %2829 = vmatpush.msra.mxu0 %v997
      %2830 = vmatpush.msra.mxu0 %v996
      %2831 = vmatpush.msra.mxu0 %v995
      %2832 = vmatpush.msra.mxu0 %v994
      %2833 = vmatpush.msra.mxu0 %v993
      %2834 = vmatpush.msra.mxu0 %v992
      %2835 = vmatpush.msra.mxu0 %v991
      %2836 = vmatpush.msra.mxu0 %v990
      %2837 = vmatpush.msra.mxu0 %v989
      %2838 = vmatpush.msra.mxu0 %v988
      %2839 = vmatpush.msra.mxu0 %v987
      %2840 = vmatpush.msra.mxu0 %v986
      %2841 = vmatpush.msra.mxu0 %v985
      %2842 = vmatmul.f32.gmra.mxu0 %v2783
      %v2843 = vpop.f32.mrf.mxu0
      %v2844 = vadd.f32 %v2824, %v2843
      %2845 = vdwg.mxu0
      %2846 = vmatpush.msra.mxu0 %v1016
      %2847 = vmatpush.msra.mxu0 %v1015
      %2848 = vmatpush.msra.mxu0 %v1014
      %2849 = vmatpush.msra.mxu0 %v1013
      %2850 = vmatpush.msra.mxu0 %v1012
      %2851 = vmatpush.msra.mxu0 %v1011
      %2852 = vmatpush.msra.mxu0 %v1010
      %2853 = vmatpush.msra.mxu0 %v1009
      %2854 = vmatpush.msra.mxu0 %v1008
      %2855 = vmatpush.msra.mxu0 %v1007
      %2856 = vmatpush.msra.mxu0 %v1006
      %2857 = vmatpush.msra.mxu0 %v1005
      %2858 = vmatpush.msra.mxu0 %v1004
      %2859 = vmatpush.msra.mxu0 %v1003
      %2860 = vmatpush.msra.mxu0 %v1002
      %2861 = vmatpush.msra.mxu0 %v1001
      %2862 = vmatmul.f32.gmra.mxu0 %v2784
      %v2863 = vpop.f32.mrf.mxu0
      %v2864 = vadd.f32 %v2844, %v2863
      %2865 = vdwg.mxu0
      %v2866 = vmul.f32 %v2373, 0.5
      %v2867 = vtanh.pop %v2866
      %v2868 = vadd.f32 %v2867, 1.0
      %v2869 = vmul.f32 %v2868, 0.5
      %v2870 = vmul.f32 %v2373, %v2869
      %v2871 = vmul.f32 %v2864, %v2870
      %v2873 = vsel %vm1166, %v2871, 0
      %2875 = vmatpush.msra.mxu0 0.0
      %2876 = vmatpush.msra.mxu0 0.0
      %2877 = vmatpush.msra.mxu0 0.0
      %2878 = vmatpush.msra.mxu0 0.0
      %2879 = vmatpush.msra.mxu0 0.0
      %2880 = vmatpush.msra.mxu0 0.0
      %2881 = vmatpush.msra.mxu0 0.0
      %2882 = vmatpush.msra.mxu0 0.0
      %2883 = vmatpush.msra.mxu0 0.0
      %2884 = vmatpush.msra.mxu0 0.0
      %2885 = vmatpush.msra.mxu0 0.0
      %2886 = vmatpush.msra.mxu0 0.0
      %2887 = vmatpush.msra.mxu0 %v2311
      %2888 = vmatpush.msra.mxu0 %v2310
      %2889 = vmatpush.msra.mxu0 %v2309
      %2890 = vmatpush.msra.mxu0 %v2308
      %2891 = vmatmul.f32.gmra.mxu0 %v2873
      %v2892 = vpop.f32.mrf.mxu0
      %v2893 = vadd.f32 0.0, %v2892
      %2894 = vdwg.mxu0
      %v2895 = vadd.f32 %v1719, %v2893
      %v2896 = vmul.f32 %v2424, %v2447
      %v2897 = vadd.f32 %v2896, %v2293
      %v2898 = vrot.slane %v2292, 2
      %v2900 = vmul.f32 %v2353, %v2898
      %v2901 = vadd.f32 %v2897, %v2900
      %v2902 = vmul.f32 %v2901, 0.5
      %v2903 = vtanh.pop %v2902
      %v2904 = vadd.f32 %v2903, 1.0
      %v2905 = vmul.f32 %v2904, 0.5
      %v2906 = vmul.f32 %v2901, %v2905
      %v2908 = vsel %vm1166, %v2906, 0
      %2910 = vmatpush.msra.mxu0 0.0
      %2911 = vmatpush.msra.mxu0 0.0
      %2912 = vmatpush.msra.mxu0 0.0
      %2913 = vmatpush.msra.mxu0 0.0
      %2914 = vmatpush.msra.mxu0 0.0
      %2915 = vmatpush.msra.mxu0 0.0
      %2916 = vmatpush.msra.mxu0 0.0
      %2917 = vmatpush.msra.mxu0 0.0
      %2918 = vmatpush.msra.mxu0 0.0
      %2919 = vmatpush.msra.mxu0 0.0
      %2920 = vmatpush.msra.mxu0 0.0
      %2921 = vmatpush.msra.mxu0 0.0
      %2922 = vmatpush.msra.mxu0 %v2297
      %2923 = vmatpush.msra.mxu0 %v2296
      %2924 = vmatpush.msra.mxu0 %v2295
      %2925 = vmatpush.msra.mxu0 %v2294
      %2926 = vmatmul.f32.gmra.mxu0 %v2908
      %v2927 = vpop.f32.mrf.mxu0
      %v2928 = vadd.f32 %v2298, %v2927
      %2929 = vdwg.mxu0
      %vm2930 = vcmp.gt.f32.partialorder %v2928, 20.0
      %v2931 = vmin.f32 %v2928, 20.0
      %v2932 = vmul.f32 %v2931, 1.442695
      %v2933 = vpow.pop %v2932
      %v2934 = vadd.f32 %v2933, 1.0
      %v2935 = vlog2.pop %v2934
      %v2936 = vmul.f32 %v2935, 0.6931472
      %v2937 = vsel %vm2930, %v2928, %v2936
      %2938 = vmatpush.msra.mxu0 0.0
      %2939 = vmatpush.msra.mxu0 0.0
      %2940 = vmatpush.msra.mxu0 0.0
      %2941 = vmatpush.msra.mxu0 0.0
      %2942 = vmatpush.msra.mxu0 0.0
      %2943 = vmatpush.msra.mxu0 0.0
      %2944 = vmatpush.msra.mxu0 0.0
      %2945 = vmatpush.msra.mxu0 0.0
      %2946 = vmatpush.msra.mxu0 0.0
      %2947 = vmatpush.msra.mxu0 0.0
      %2948 = vmatpush.msra.mxu0 0.0
      %2949 = vmatpush.msra.mxu0 0.0
      %2950 = vmatpush.msra.mxu0 %v2303
      %2951 = vmatpush.msra.mxu0 %v2302
      %2952 = vmatpush.msra.mxu0 %v2301
      %2953 = vmatpush.msra.mxu0 %v2300
      %2954 = vmatmul.f32.gmra.mxu0 %v2908
      %v2955 = vpop.f32.mrf.mxu0
      %v2956 = vadd.f32 0.0, %v2955
      %2957 = vdwg.mxu0
      %2958 = vmatpush.msra.mxu0 0.0
      %2959 = vmatpush.msra.mxu0 0.0
      %2960 = vmatpush.msra.mxu0 0.0
      %2961 = vmatpush.msra.mxu0 0.0
      %2962 = vmatpush.msra.mxu0 0.0
      %2963 = vmatpush.msra.mxu0 0.0
      %2964 = vmatpush.msra.mxu0 0.0
      %2965 = vmatpush.msra.mxu0 0.0
      %2966 = vmatpush.msra.mxu0 0.0
      %2967 = vmatpush.msra.mxu0 0.0
      %2968 = vmatpush.msra.mxu0 0.0
      %2969 = vmatpush.msra.mxu0 0.0
      %2970 = vmatpush.msra.mxu0 %v2307
      %2971 = vmatpush.msra.mxu0 %v2306
      %2972 = vmatpush.msra.mxu0 %v2305
      %2973 = vmatpush.msra.mxu0 %v2304
      %2974 = vmatmul.f32.gmra.mxu0 %v2908
      %v2975 = vpop.f32.mrf.mxu0
      %v2976 = vadd.f32 0.0, %v2975
      %2977 = vdwg.mxu0
      %v2978 = vmul.f32 %v2937, %v2906
      %v2980 = vsel %vm1166, %v2978, 0
      %2982 = vmatpush.msra.mxu0 0.0
      %2983 = vmatpush.msra.mxu0 0.0
      %2984 = vmatpush.msra.mxu0 0.0
      %2985 = vmatpush.msra.mxu0 0.0
      %2986 = vmatpush.msra.mxu0 0.0
      %2987 = vmatpush.msra.mxu0 0.0
      %2988 = vmatpush.msra.mxu0 0.0
      %2989 = vmatpush.msra.mxu0 0.0
      %2990 = vmatpush.msra.mxu0 0.0
      %2991 = vmatpush.msra.mxu0 0.0
      %2992 = vmatpush.msra.mxu0 0.0
      %2993 = vmatpush.msra.mxu0 0.0
      %2994 = vmatpush.msra.mxu0 %v1289
      %2995 = vmatpush.msra.mxu0 %v1281
      %2996 = vmatpush.msra.mxu0 %v1273
      %2997 = vmatpush.msra.mxu0 %v1262
      %2998 = vmatmul.f32.gmra.mxu0 %v2980
      %v2999 = vpop.f32.mrf.mxu0
      %v3000 = vadd.f32 0.0, %v2999
      %3001 = vdwg.mxu0
      %3002 = vmatpush.msra.mxu0 0.0
      %3003 = vmatpush.msra.mxu0 0.0
      %3004 = vmatpush.msra.mxu0 0.0
      %3005 = vmatpush.msra.mxu0 0.0
      %3006 = vmatpush.msra.mxu0 0.0
      %3007 = vmatpush.msra.mxu0 0.0
      %3008 = vmatpush.msra.mxu0 0.0
      %3009 = vmatpush.msra.mxu0 0.0
      %3010 = vmatpush.msra.mxu0 0.0
      %3011 = vmatpush.msra.mxu0 0.0
      %3012 = vmatpush.msra.mxu0 0.0
      %3013 = vmatpush.msra.mxu0 0.0
      %3014 = vmatpush.msra.mxu0 %v1291
      %3015 = vmatpush.msra.mxu0 %v1283
      %3016 = vmatpush.msra.mxu0 %v1275
      %3017 = vmatpush.msra.mxu0 %v1265
      %3018 = vmatmul.f32.gmra.mxu0 %v2980
      %v3019 = vpop.f32.mrf.mxu0
      %v3020 = vadd.f32 0.0, %v3019
      %3021 = vdwg.mxu0
      %3022 = vmatpush.msra.mxu0 0.0
      %3023 = vmatpush.msra.mxu0 0.0
      %3024 = vmatpush.msra.mxu0 0.0
      %3025 = vmatpush.msra.mxu0 0.0
      %3026 = vmatpush.msra.mxu0 0.0
      %3027 = vmatpush.msra.mxu0 0.0
      %3028 = vmatpush.msra.mxu0 0.0
      %3029 = vmatpush.msra.mxu0 0.0
      %3030 = vmatpush.msra.mxu0 0.0
      %3031 = vmatpush.msra.mxu0 0.0
      %3032 = vmatpush.msra.mxu0 0.0
      %3033 = vmatpush.msra.mxu0 0.0
      %3034 = vmatpush.msra.mxu0 %v1293
      %3035 = vmatpush.msra.mxu0 %v1285
      %3036 = vmatpush.msra.mxu0 %v1277
      %3037 = vmatpush.msra.mxu0 %v1268
      %3038 = vmatmul.f32.gmra.mxu0 %v2980
      %v3039 = vpop.f32.mrf.mxu0
      %v3040 = vadd.f32 0.0, %v3039
      %3041 = vdwg.mxu0
      %3042 = vmatpush.msra.mxu0 0.0
      %3043 = vmatpush.msra.mxu0 0.0
      %3044 = vmatpush.msra.mxu0 0.0
      %3045 = vmatpush.msra.mxu0 0.0
      %3046 = vmatpush.msra.mxu0 0.0
      %3047 = vmatpush.msra.mxu0 0.0
      %3048 = vmatpush.msra.mxu0 0.0
      %3049 = vmatpush.msra.mxu0 0.0
      %3050 = vmatpush.msra.mxu0 0.0
      %3051 = vmatpush.msra.mxu0 0.0
      %3052 = vmatpush.msra.mxu0 0.0
      %3053 = vmatpush.msra.mxu0 0.0
      %3054 = vmatpush.msra.mxu0 %v1295
      %3055 = vmatpush.msra.mxu0 %v1287
      %3056 = vmatpush.msra.mxu0 %v1279
      %3057 = vmatpush.msra.mxu0 %v1271
      %3058 = vmatmul.f32.gmra.mxu0 %v2980
      %v3059 = vpop.f32.mrf.mxu0
      %v3060 = vadd.f32 0.0, %v3059
      %3061 = vdwg.mxu0
      %v3063 = vsel %vm305, %v2956, 0
      %3065 = vmatpush.msra.mxu0 0.0
      %3066 = vmatpush.msra.mxu0 0.0
      %3067 = vmatpush.msra.mxu0 0.0
      %3068 = vmatpush.msra.mxu0 0.0
      %3069 = vmatpush.msra.mxu0 0.0
      %3070 = vmatpush.msra.mxu0 0.0
      %3071 = vmatpush.msra.mxu0 0.0
      %3072 = vmatpush.msra.mxu0 0.0
      %3073 = vmatpush.msra.mxu0 0.0
      %3074 = vmatpush.msra.mxu0 0.0
      %3075 = vmatpush.msra.mxu0 0.0
      %3076 = vmatpush.msra.mxu0 0.0
      %3077 = vmatpush.msra.mxu0 0.0
      %3078 = vmatpush.msra.mxu0 0.0
      %3079 = vmatpush.msra.mxu0 %v1420
      %3080 = vmatpush.msra.mxu0 %v1409
      %3081 = vmatmul.f32.gmra.mxu0 %v3063
      %v3082 = vpop.f32.mrf.mxu0
      %v3083 = vadd.f32 0.0, %v3082
      %3084 = vdwg.mxu0
      %3085 = vmatpush.msra.mxu0 0.0
      %3086 = vmatpush.msra.mxu0 0.0
      %3087 = vmatpush.msra.mxu0 0.0
      %3088 = vmatpush.msra.mxu0 0.0
      %3089 = vmatpush.msra.mxu0 0.0
      %3090 = vmatpush.msra.mxu0 0.0
      %3091 = vmatpush.msra.mxu0 0.0
      %3092 = vmatpush.msra.mxu0 0.0
      %3093 = vmatpush.msra.mxu0 0.0
      %3094 = vmatpush.msra.mxu0 0.0
      %3095 = vmatpush.msra.mxu0 0.0
      %3096 = vmatpush.msra.mxu0 0.0
      %3097 = vmatpush.msra.mxu0 0.0
      %3098 = vmatpush.msra.mxu0 0.0
      %3099 = vmatpush.msra.mxu0 %v1422
      %3100 = vmatpush.msra.mxu0 %v1412
      %3101 = vmatmul.f32.gmra.mxu0 %v3063
      %v3102 = vpop.f32.mrf.mxu0
      %v3103 = vadd.f32 0.0, %v3102
      %3104 = vdwg.mxu0
      %3105 = vmatpush.msra.mxu0 0.0
      %3106 = vmatpush.msra.mxu0 0.0
      %3107 = vmatpush.msra.mxu0 0.0
      %3108 = vmatpush.msra.mxu0 0.0
      %3109 = vmatpush.msra.mxu0 0.0
      %3110 = vmatpush.msra.mxu0 0.0
      %3111 = vmatpush.msra.mxu0 0.0
      %3112 = vmatpush.msra.mxu0 0.0
      %3113 = vmatpush.msra.mxu0 0.0
      %3114 = vmatpush.msra.mxu0 0.0
      %3115 = vmatpush.msra.mxu0 0.0
      %3116 = vmatpush.msra.mxu0 0.0
      %3117 = vmatpush.msra.mxu0 0.0
      %3118 = vmatpush.msra.mxu0 0.0
      %3119 = vmatpush.msra.mxu0 %v1424
      %3120 = vmatpush.msra.mxu0 %v1415
      %3121 = vmatmul.f32.gmra.mxu0 %v3063
      %v3122 = vpop.f32.mrf.mxu0
      %v3123 = vadd.f32 0.0, %v3122
      %3124 = vdwg.mxu0
      %3125 = vmatpush.msra.mxu0 0.0
      %3126 = vmatpush.msra.mxu0 0.0
      %3127 = vmatpush.msra.mxu0 0.0
      %3128 = vmatpush.msra.mxu0 0.0
      %3129 = vmatpush.msra.mxu0 0.0
      %3130 = vmatpush.msra.mxu0 0.0
      %3131 = vmatpush.msra.mxu0 0.0
      %3132 = vmatpush.msra.mxu0 0.0
      %3133 = vmatpush.msra.mxu0 0.0
      %3134 = vmatpush.msra.mxu0 0.0
      %3135 = vmatpush.msra.mxu0 0.0
      %3136 = vmatpush.msra.mxu0 0.0
      %3137 = vmatpush.msra.mxu0 0.0
      %3138 = vmatpush.msra.mxu0 0.0
      %3139 = vmatpush.msra.mxu0 %v1426
      %3140 = vmatpush.msra.mxu0 %v1418
      %3141 = vmatmul.f32.gmra.mxu0 %v3063
      %v3142 = vpop.f32.mrf.mxu0
      %v3143 = vadd.f32 0.0, %v3142
      %3144 = vdwg.mxu0
      %v3145 = vmul.f32 %v3000, %v3083
      %v3146 = vmul.f32 %v3020, %v3103
      %v3147 = vmul.f32 %v3040, %v3123
      %v3148 = vmul.f32 %v3060, %v3143
      %v3150 = vsel %vm1166, %v2937, 0
      %3152 = vmatpush.msra.mxu0 0.0
      %3153 = vmatpush.msra.mxu0 0.0
      %3154 = vmatpush.msra.mxu0 0.0
      %3155 = vmatpush.msra.mxu0 0.0
      %3156 = vmatpush.msra.mxu0 0.0
      %3157 = vmatpush.msra.mxu0 0.0
      %3158 = vmatpush.msra.mxu0 0.0
      %3159 = vmatpush.msra.mxu0 0.0
      %3160 = vmatpush.msra.mxu0 0.0
      %3161 = vmatpush.msra.mxu0 0.0
      %3162 = vmatpush.msra.mxu0 0.0
      %3163 = vmatpush.msra.mxu0 0.0
      %3164 = vmatpush.msra.mxu0 %v1289
      %3165 = vmatpush.msra.mxu0 %v1281
      %3166 = vmatpush.msra.mxu0 %v1273
      %3167 = vmatpush.msra.mxu0 %v1262
      %3168 = vmatmul.f32.gmra.mxu0 %v3150
      %v3169 = vpop.f32.mrf.mxu0
      %v3170 = vadd.f32 0.0, %v3169
      %3171 = vdwg.mxu0
      %3172 = vmatpush.msra.mxu0 0.0
      %3173 = vmatpush.msra.mxu0 0.0
      %3174 = vmatpush.msra.mxu0 0.0
      %3175 = vmatpush.msra.mxu0 0.0
      %3176 = vmatpush.msra.mxu0 0.0
      %3177 = vmatpush.msra.mxu0 0.0
      %3178 = vmatpush.msra.mxu0 0.0
      %3179 = vmatpush.msra.mxu0 0.0
      %3180 = vmatpush.msra.mxu0 0.0
      %3181 = vmatpush.msra.mxu0 0.0
      %3182 = vmatpush.msra.mxu0 0.0
      %3183 = vmatpush.msra.mxu0 0.0
      %3184 = vmatpush.msra.mxu0 %v1291
      %3185 = vmatpush.msra.mxu0 %v1283
      %3186 = vmatpush.msra.mxu0 %v1275
      %3187 = vmatpush.msra.mxu0 %v1265
      %3188 = vmatmul.f32.gmra.mxu0 %v3150
      %v3189 = vpop.f32.mrf.mxu0
      %v3190 = vadd.f32 0.0, %v3189
      %3191 = vdwg.mxu0
      %3192 = vmatpush.msra.mxu0 0.0
      %3193 = vmatpush.msra.mxu0 0.0
      %3194 = vmatpush.msra.mxu0 0.0
      %3195 = vmatpush.msra.mxu0 0.0
      %3196 = vmatpush.msra.mxu0 0.0
      %3197 = vmatpush.msra.mxu0 0.0
      %3198 = vmatpush.msra.mxu0 0.0
      %3199 = vmatpush.msra.mxu0 0.0
      %3200 = vmatpush.msra.mxu0 0.0
      %3201 = vmatpush.msra.mxu0 0.0
      %3202 = vmatpush.msra.mxu0 0.0
      %3203 = vmatpush.msra.mxu0 0.0
      %3204 = vmatpush.msra.mxu0 %v1293
      %3205 = vmatpush.msra.mxu0 %v1285
      %3206 = vmatpush.msra.mxu0 %v1277
      %3207 = vmatpush.msra.mxu0 %v1268
      %3208 = vmatmul.f32.gmra.mxu0 %v3150
      %v3209 = vpop.f32.mrf.mxu0
      %v3210 = vadd.f32 0.0, %v3209
      %3211 = vdwg.mxu0
      %3212 = vmatpush.msra.mxu0 0.0
      %3213 = vmatpush.msra.mxu0 0.0
      %3214 = vmatpush.msra.mxu0 0.0
      %3215 = vmatpush.msra.mxu0 0.0
      %3216 = vmatpush.msra.mxu0 0.0
      %3217 = vmatpush.msra.mxu0 0.0
      %3218 = vmatpush.msra.mxu0 0.0
      %3219 = vmatpush.msra.mxu0 0.0
      %3220 = vmatpush.msra.mxu0 0.0
      %3221 = vmatpush.msra.mxu0 0.0
      %3222 = vmatpush.msra.mxu0 0.0
      %3223 = vmatpush.msra.mxu0 0.0
      %3224 = vmatpush.msra.mxu0 %v1295
      %3225 = vmatpush.msra.mxu0 %v1287
      %3226 = vmatpush.msra.mxu0 %v1279
      %3227 = vmatpush.msra.mxu0 %v1271
      %3228 = vmatmul.f32.gmra.mxu0 %v3150
      %v3229 = vpop.f32.mrf.mxu0
      %v3230 = vadd.f32 0.0, %v3229
      %3231 = vdwg.mxu0
      %v3233 = vperm.slane %v2313, 0
      %v3234 = vperm.slane %v2313, 1
      %v3235 = vperm.slane %v2313, 2
      %v3236 = vperm.slane %v2313, 3
      %v3241 = vmul.f32 %v3170, %v3233
      %v3242 = vmul.f32 %v3190, %v3234
      %v3243 = vmul.f32 %v3210, %v3235
      %v3244 = vmul.f32 %v3230, %v3236
      %v3245 = vmul.f32 %v3241, 1.442695
      %v3246 = vpow.pop %v3245
      %v3247 = vmul.f32 %v3242, 1.442695
      %v3248 = vpow.pop %v3247
      %v3249 = vmul.f32 %v3243, 1.442695
      %v3250 = vpow.pop %v3249
      %v3251 = vmul.f32 %v3244, 1.442695
      %v3252 = vpow.pop %v3251
      %v3253 = vmul.f32 %v3246, %v2694
      %v3254 = vmul.f32 %v3248, %v2695
      %v3255 = vmul.f32 %v3250, %v2696
      %v3256 = vmul.f32 %v3252, %v2697
      %v3257 = vadd.f32 %v3253, %v3145
      %v3258 = vadd.f32 %v3254, %v3146
      %v3259 = vadd.f32 %v3255, %v3147
      %v3260 = vadd.f32 %v3256, %v3148
      %v3262 = vsel %vm305, %v2976, 0
      %3264 = vmatpush.msra.mxu0 0.0
      %3265 = vmatpush.msra.mxu0 0.0
      %3266 = vmatpush.msra.mxu0 0.0
      %3267 = vmatpush.msra.mxu0 0.0
      %3268 = vmatpush.msra.mxu0 0.0
      %3269 = vmatpush.msra.mxu0 0.0
      %3270 = vmatpush.msra.mxu0 0.0
      %3271 = vmatpush.msra.mxu0 0.0
      %3272 = vmatpush.msra.mxu0 0.0
      %3273 = vmatpush.msra.mxu0 0.0
      %3274 = vmatpush.msra.mxu0 0.0
      %3275 = vmatpush.msra.mxu0 0.0
      %3276 = vmatpush.msra.mxu0 0.0
      %3277 = vmatpush.msra.mxu0 0.0
      %3278 = vmatpush.msra.mxu0 %v1420
      %3279 = vmatpush.msra.mxu0 %v1409
      %3280 = vmatmul.f32.gmra.mxu0 %v3262
      %v3281 = vpop.f32.mrf.mxu0
      %v3282 = vadd.f32 0.0, %v3281
      %3283 = vdwg.mxu0
      %3284 = vmatpush.msra.mxu0 0.0
      %3285 = vmatpush.msra.mxu0 0.0
      %3286 = vmatpush.msra.mxu0 0.0
      %3287 = vmatpush.msra.mxu0 0.0
      %3288 = vmatpush.msra.mxu0 0.0
      %3289 = vmatpush.msra.mxu0 0.0
      %3290 = vmatpush.msra.mxu0 0.0
      %3291 = vmatpush.msra.mxu0 0.0
      %3292 = vmatpush.msra.mxu0 0.0
      %3293 = vmatpush.msra.mxu0 0.0
      %3294 = vmatpush.msra.mxu0 0.0
      %3295 = vmatpush.msra.mxu0 0.0
      %3296 = vmatpush.msra.mxu0 0.0
      %3297 = vmatpush.msra.mxu0 0.0
      %3298 = vmatpush.msra.mxu0 %v1422
      %3299 = vmatpush.msra.mxu0 %v1412
      %3300 = vmatmul.f32.gmra.mxu0 %v3262
      %v3301 = vpop.f32.mrf.mxu0
      %v3302 = vadd.f32 0.0, %v3301
      %3303 = vdwg.mxu0
      %3304 = vmatpush.msra.mxu0 0.0
      %3305 = vmatpush.msra.mxu0 0.0
      %3306 = vmatpush.msra.mxu0 0.0
      %3307 = vmatpush.msra.mxu0 0.0
      %3308 = vmatpush.msra.mxu0 0.0
      %3309 = vmatpush.msra.mxu0 0.0
      %3310 = vmatpush.msra.mxu0 0.0
      %3311 = vmatpush.msra.mxu0 0.0
      %3312 = vmatpush.msra.mxu0 0.0
      %3313 = vmatpush.msra.mxu0 0.0
      %3314 = vmatpush.msra.mxu0 0.0
      %3315 = vmatpush.msra.mxu0 0.0
      %3316 = vmatpush.msra.mxu0 0.0
      %3317 = vmatpush.msra.mxu0 0.0
      %3318 = vmatpush.msra.mxu0 %v1424
      %3319 = vmatpush.msra.mxu0 %v1415
      %3320 = vmatmul.f32.gmra.mxu0 %v3262
      %v3321 = vpop.f32.mrf.mxu0
      %v3322 = vadd.f32 0.0, %v3321
      %3323 = vdwg.mxu0
      %3324 = vmatpush.msra.mxu0 0.0
      %3325 = vmatpush.msra.mxu0 0.0
      %3326 = vmatpush.msra.mxu0 0.0
      %3327 = vmatpush.msra.mxu0 0.0
      %3328 = vmatpush.msra.mxu0 0.0
      %3329 = vmatpush.msra.mxu0 0.0
      %3330 = vmatpush.msra.mxu0 0.0
      %3331 = vmatpush.msra.mxu0 0.0
      %3332 = vmatpush.msra.mxu0 0.0
      %3333 = vmatpush.msra.mxu0 0.0
      %3334 = vmatpush.msra.mxu0 0.0
      %3335 = vmatpush.msra.mxu0 0.0
      %3336 = vmatpush.msra.mxu0 0.0
      %3337 = vmatpush.msra.mxu0 0.0
      %3338 = vmatpush.msra.mxu0 %v1426
      %3339 = vmatpush.msra.mxu0 %v1418
      %3340 = vmatmul.f32.gmra.mxu0 %v3262
      %v3341 = vpop.f32.mrf.mxu0
      %v3342 = vadd.f32 0.0, %v3341
      %3343 = vdwg.mxu0
      %v3344 = vmul.f32 %v3257, %v3282
      %v3345 = vmul.f32 %v3258, %v3302
      %v3346 = vmul.f32 %v3259, %v3322
      %v3347 = vmul.f32 %v3260, %v3342
      %v3348 = vmul.f32 %v2299, %v2906
      %3349 = vmatpush.msra.mxu0 %v968
      %3350 = vmatpush.msra.mxu0 %v967
      %3351 = vmatpush.msra.mxu0 %v966
      %3352 = vmatpush.msra.mxu0 %v965
      %3353 = vmatpush.msra.mxu0 %v964
      %3354 = vmatpush.msra.mxu0 %v963
      %3355 = vmatpush.msra.mxu0 %v962
      %3356 = vmatpush.msra.mxu0 %v961
      %3357 = vmatpush.msra.mxu0 %v960
      %3358 = vmatpush.msra.mxu0 %v959
      %3359 = vmatpush.msra.mxu0 %v958
      %3360 = vmatpush.msra.mxu0 %v957
      %3361 = vmatpush.msra.mxu0 %v956
      %3362 = vmatpush.msra.mxu0 %v955
      %3363 = vmatpush.msra.mxu0 %v954
      %3364 = vmatpush.msra.mxu0 %v953
      %3365 = vmatmul.f32.gmra.mxu0 %v3344
      %v3366 = vpop.f32.mrf.mxu0
      %v3367 = vadd.f32 %v3348, %v3366
      %3368 = vdwg.mxu0
      %3369 = vmatpush.msra.mxu0 %v984
      %3370 = vmatpush.msra.mxu0 %v983
      %3371 = vmatpush.msra.mxu0 %v982
      %3372 = vmatpush.msra.mxu0 %v981
      %3373 = vmatpush.msra.mxu0 %v980
      %3374 = vmatpush.msra.mxu0 %v979
      %3375 = vmatpush.msra.mxu0 %v978
      %3376 = vmatpush.msra.mxu0 %v977
      %3377 = vmatpush.msra.mxu0 %v976
      %3378 = vmatpush.msra.mxu0 %v975
      %3379 = vmatpush.msra.mxu0 %v974
      %3380 = vmatpush.msra.mxu0 %v973
      %3381 = vmatpush.msra.mxu0 %v972
      %3382 = vmatpush.msra.mxu0 %v971
      %3383 = vmatpush.msra.mxu0 %v970
      %3384 = vmatpush.msra.mxu0 %v969
      %3385 = vmatmul.f32.gmra.mxu0 %v3345
      %v3386 = vpop.f32.mrf.mxu0
      %v3387 = vadd.f32 %v3367, %v3386
      %3388 = vdwg.mxu0
      %3389 = vmatpush.msra.mxu0 %v1000
      %3390 = vmatpush.msra.mxu0 %v999
      %3391 = vmatpush.msra.mxu0 %v998
      %3392 = vmatpush.msra.mxu0 %v997
      %3393 = vmatpush.msra.mxu0 %v996
      %3394 = vmatpush.msra.mxu0 %v995
      %3395 = vmatpush.msra.mxu0 %v994
      %3396 = vmatpush.msra.mxu0 %v993
      %3397 = vmatpush.msra.mxu0 %v992
      %3398 = vmatpush.msra.mxu0 %v991
      %3399 = vmatpush.msra.mxu0 %v990
      %3400 = vmatpush.msra.mxu0 %v989
      %3401 = vmatpush.msra.mxu0 %v988
      %3402 = vmatpush.msra.mxu0 %v987
      %3403 = vmatpush.msra.mxu0 %v986
      %3404 = vmatpush.msra.mxu0 %v985
      %3405 = vmatmul.f32.gmra.mxu0 %v3346
      %v3406 = vpop.f32.mrf.mxu0
      %v3407 = vadd.f32 %v3387, %v3406
      %3408 = vdwg.mxu0
      %3409 = vmatpush.msra.mxu0 %v1016
      %3410 = vmatpush.msra.mxu0 %v1015
      %3411 = vmatpush.msra.mxu0 %v1014
      %3412 = vmatpush.msra.mxu0 %v1013
      %3413 = vmatpush.msra.mxu0 %v1012
      %3414 = vmatpush.msra.mxu0 %v1011
      %3415 = vmatpush.msra.mxu0 %v1010
      %3416 = vmatpush.msra.mxu0 %v1009
      %3417 = vmatpush.msra.mxu0 %v1008
      %3418 = vmatpush.msra.mxu0 %v1007
      %3419 = vmatpush.msra.mxu0 %v1006
      %3420 = vmatpush.msra.mxu0 %v1005
      %3421 = vmatpush.msra.mxu0 %v1004
      %3422 = vmatpush.msra.mxu0 %v1003
      %3423 = vmatpush.msra.mxu0 %v1002
      %3424 = vmatpush.msra.mxu0 %v1001
      %3425 = vmatmul.f32.gmra.mxu0 %v3347
      %v3426 = vpop.f32.mrf.mxu0
      %v3427 = vadd.f32 %v3407, %v3426
      %3428 = vdwg.mxu0
      %v3429 = vmul.f32 %v2444, 0.5
      %v3430 = vtanh.pop %v3429
      %v3431 = vadd.f32 %v3430, 1.0
      %v3432 = vmul.f32 %v3431, 0.5
      %v3433 = vmul.f32 %v2444, %v3432
      %v3434 = vmul.f32 %v3427, %v3433
      %v3436 = vsel %vm1166, %v3434, 0
      %3438 = vmatpush.msra.mxu0 0.0
      %3439 = vmatpush.msra.mxu0 0.0
      %3440 = vmatpush.msra.mxu0 0.0
      %3441 = vmatpush.msra.mxu0 0.0
      %3442 = vmatpush.msra.mxu0 0.0
      %3443 = vmatpush.msra.mxu0 0.0
      %3444 = vmatpush.msra.mxu0 0.0
      %3445 = vmatpush.msra.mxu0 0.0
      %3446 = vmatpush.msra.mxu0 0.0
      %3447 = vmatpush.msra.mxu0 0.0
      %3448 = vmatpush.msra.mxu0 0.0
      %3449 = vmatpush.msra.mxu0 0.0
      %3450 = vmatpush.msra.mxu0 %v2311
      %3451 = vmatpush.msra.mxu0 %v2310
      %3452 = vmatpush.msra.mxu0 %v2309
      %3453 = vmatpush.msra.mxu0 %v2308
      %3454 = vmatmul.f32.gmra.mxu0 %v3436
      %v3455 = vpop.f32.mrf.mxu0
      %v3456 = vadd.f32 0.0, %v3455
      %3457 = vdwg.mxu0
      %3459 = vrot.lane.b32.xlu0 %v3456, 16
      %v3460 = vpop.permute.xlu0 %3459
      %v3462 = vadd.f32 %v2286, %v3460
      %v3463 = vld [vmem:[%s2 + $0xc0] sm:$0xfc]
      %v3464 = vld [vmem:[%s2 + $0xc8] sm:$0xfc]
      %v3465 = vld [vmem:[%s2 + $0xd0] sm:$0xfc]
      %v3466 = vld [vmem:[%s2 + $0xe0] sm:$0xff]
      %v3467 = vld [vmem:[%s2 + $0xe8] sm:$0xff]
      %v3468 = vld [vmem:[%s2 + $0xf0] sm:$0xff]
      %v3469 = vld [vmem:[%s2 + $0x100] sm:$0xff]
      %v3470 = vld [vmem:[%s2 + $0x108] sm:$0xff]
      %v3471 = vld [vmem:[%s2 + $0x110] sm:$0xff]
      %v3472 = vld [vmem:[%s2 + $0x120] sm:$0xff]
      %v3473 = vld [vmem:[%s2 + $0x128] sm:$0xff]
      %v3474 = vld [vmem:[%s2 + $0x130] sm:$0xff]
      %v3475 = vld [vmem:[%s2 + $0x140] sm:$0x3]
      %v3476 = vld [vmem:[%s2 + $0x148] sm:$0x3]
      %v3477 = vld [vmem:[%s2 + $0x150] sm:$0x3]
      %3479 = vrot.lane.b32.xlu0 %v3462, 112
      %v3480 = vpop.permute.xlu0 %3479
      %v3490 = vrot.slane %v3469, 2
      %v3491 = vrot.slane %v3472, 2
      %v3492 = vsel %vm1259, %v3490, %v3491
      %v3493 = vrot.slane %v3470, 2
      %v3494 = vrot.slane %v3473, 2
      %v3495 = vsel %vm1259, %v3493, %v3494
      %v3496 = vrot.slane %v3471, 2
      %v3497 = vrot.slane %v3474, 2
      %v3498 = vsel %vm1259, %v3496, %v3497
      %v3499 = vrot.slane %v3475, 2
      %v3500 = vsel %vm1259, %v3491, %v3499
      %v3501 = vrot.slane %v3476, 2
      %v3502 = vsel %vm1259, %v3494, %v3501
      %v3503 = vrot.slane %v3477, 2
      %v3504 = vsel %vm1259, %v3497, %v3503
      %v3511 = vsel %vm305, %v3480, 0
      %3513 = vmatpush.msra.mxu0 0.0
      %3514 = vmatpush.msra.mxu0 0.0
      %3515 = vmatpush.msra.mxu0 0.0
      %3516 = vmatpush.msra.mxu0 0.0
      %3517 = vmatpush.msra.mxu0 0.0
      %3518 = vmatpush.msra.mxu0 0.0
      %3519 = vmatpush.msra.mxu0 0.0
      %3520 = vmatpush.msra.mxu0 0.0
      %3521 = vmatpush.msra.mxu0 0.0
      %3522 = vmatpush.msra.mxu0 0.0
      %3523 = vmatpush.msra.mxu0 0.0
      %3524 = vmatpush.msra.mxu0 0.0
      %3525 = vmatpush.msra.mxu0 0.0
      %3526 = vmatpush.msra.mxu0 0.0
      %3527 = vmatpush.msra.mxu0 %v3500
      %3528 = vmatpush.msra.mxu0 %v3492
      %3529 = vmatmul.f32.gmra.mxu0 %v3511
      %v3530 = vpop.f32.mrf.mxu0
      %v3531 = vadd.f32 0.0, %v3530
      %3532 = vdwg.mxu0
      %3533 = vmatpush.msra.mxu0 0.0
      %3534 = vmatpush.msra.mxu0 0.0
      %3535 = vmatpush.msra.mxu0 0.0
      %3536 = vmatpush.msra.mxu0 0.0
      %3537 = vmatpush.msra.mxu0 0.0
      %3538 = vmatpush.msra.mxu0 0.0
      %3539 = vmatpush.msra.mxu0 0.0
      %3540 = vmatpush.msra.mxu0 0.0
      %3541 = vmatpush.msra.mxu0 0.0
      %3542 = vmatpush.msra.mxu0 0.0
      %3543 = vmatpush.msra.mxu0 0.0
      %3544 = vmatpush.msra.mxu0 0.0
      %3545 = vmatpush.msra.mxu0 0.0
      %3546 = vmatpush.msra.mxu0 0.0
      %3547 = vmatpush.msra.mxu0 %v3502
      %3548 = vmatpush.msra.mxu0 %v3495
      %3549 = vmatmul.f32.gmra.mxu0 %v3511
      %v3550 = vpop.f32.mrf.mxu0
      %v3551 = vadd.f32 0.0, %v3550
      %3552 = vdwg.mxu0
      %3553 = vmatpush.msra.mxu0 0.0
      %3554 = vmatpush.msra.mxu0 0.0
      %3555 = vmatpush.msra.mxu0 0.0
      %3556 = vmatpush.msra.mxu0 0.0
      %3557 = vmatpush.msra.mxu0 0.0
      %3558 = vmatpush.msra.mxu0 0.0
      %3559 = vmatpush.msra.mxu0 0.0
      %3560 = vmatpush.msra.mxu0 0.0
      %3561 = vmatpush.msra.mxu0 0.0
      %3562 = vmatpush.msra.mxu0 0.0
      %3563 = vmatpush.msra.mxu0 0.0
      %3564 = vmatpush.msra.mxu0 0.0
      %3565 = vmatpush.msra.mxu0 0.0
      %3566 = vmatpush.msra.mxu0 0.0
      %3567 = vmatpush.msra.mxu0 %v3504
      %3568 = vmatpush.msra.mxu0 %v3498
      %3569 = vmatmul.f32.gmra.mxu0 %v3511
      %v3570 = vpop.f32.mrf.mxu0
      %v3571 = vadd.f32 0.0, %v3570
      %3572 = vdwg.mxu0
      %v3579 = vrot.slane %v3463, 2
      %v3580 = vrot.slane %v3466, 2
      %v3581 = vsel %vm1259, %v3579, %v3580
      %v3582 = vrot.slane %v3464, 2
      %v3583 = vrot.slane %v3467, 2
      %v3584 = vsel %vm1259, %v3582, %v3583
      %v3585 = vrot.slane %v3465, 2
      %v3586 = vrot.slane %v3468, 2
      %v3587 = vsel %vm1259, %v3585, %v3586
      %v3588 = vsel %vm1259, %v3580, %v3490
      %v3589 = vsel %vm1259, %v3583, %v3493
      %v3590 = vsel %vm1259, %v3586, %v3496
      %v3598 = vsel %vm305, %v2895, 0
      %3600 = vmatpush.msra.mxu0 0.0
      %3601 = vmatpush.msra.mxu0 0.0
      %3602 = vmatpush.msra.mxu0 0.0
      %3603 = vmatpush.msra.mxu0 0.0
      %3604 = vmatpush.msra.mxu0 0.0
      %3605 = vmatpush.msra.mxu0 0.0
      %3606 = vmatpush.msra.mxu0 0.0
      %3607 = vmatpush.msra.mxu0 0.0
      %3608 = vmatpush.msra.mxu0 0.0
      %3609 = vmatpush.msra.mxu0 0.0
      %3610 = vmatpush.msra.mxu0 0.0
      %3611 = vmatpush.msra.mxu0 0.0
      %3612 = vmatpush.msra.mxu0 0.0
      %3613 = vmatpush.msra.mxu0 0.0
      %3614 = vmatpush.msra.mxu0 %v3588
      %3615 = vmatpush.msra.mxu0 %v3581
      %3616 = vmatmul.f32.gmra.mxu0 %v3598
      %v3617 = vpop.f32.mrf.mxu0
      %v3618 = vadd.f32 %v3531, %v3617
      %3619 = vdwg.mxu0
      %3620 = vmatpush.msra.mxu0 0.0
      %3621 = vmatpush.msra.mxu0 0.0
      %3622 = vmatpush.msra.mxu0 0.0
      %3623 = vmatpush.msra.mxu0 0.0
      %3624 = vmatpush.msra.mxu0 0.0
      %3625 = vmatpush.msra.mxu0 0.0
      %3626 = vmatpush.msra.mxu0 0.0
      %3627 = vmatpush.msra.mxu0 0.0
      %3628 = vmatpush.msra.mxu0 0.0
      %3629 = vmatpush.msra.mxu0 0.0
      %3630 = vmatpush.msra.mxu0 0.0
      %3631 = vmatpush.msra.mxu0 0.0
      %3632 = vmatpush.msra.mxu0 0.0
      %3633 = vmatpush.msra.mxu0 0.0
      %3634 = vmatpush.msra.mxu0 %v3589
      %3635 = vmatpush.msra.mxu0 %v3584
      %3636 = vmatmul.f32.gmra.mxu0 %v3598
      %v3637 = vpop.f32.mrf.mxu0
      %v3638 = vadd.f32 %v3551, %v3637
      %3639 = vdwg.mxu0
      %3640 = vmatpush.msra.mxu0 0.0
      %3641 = vmatpush.msra.mxu0 0.0
      %3642 = vmatpush.msra.mxu0 0.0
      %3643 = vmatpush.msra.mxu0 0.0
      %3644 = vmatpush.msra.mxu0 0.0
      %3645 = vmatpush.msra.mxu0 0.0
      %3646 = vmatpush.msra.mxu0 0.0
      %3647 = vmatpush.msra.mxu0 0.0
      %3648 = vmatpush.msra.mxu0 0.0
      %3649 = vmatpush.msra.mxu0 0.0
      %3650 = vmatpush.msra.mxu0 0.0
      %3651 = vmatpush.msra.mxu0 0.0
      %3652 = vmatpush.msra.mxu0 0.0
      %3653 = vmatpush.msra.mxu0 0.0
      %3654 = vmatpush.msra.mxu0 %v3590
      %3655 = vmatpush.msra.mxu0 %v3587
      %3656 = vmatmul.f32.gmra.mxu0 %v3598
      %v3657 = vpop.f32.mrf.mxu0
      %v3658 = vadd.f32 %v3571, %v3657
      %3659 = vdwg.mxu0
      %s3660 = scalar_lea.vmem %s2, 322
      %v3661 = vld [vmem:[%s3660] ss:$8 sm:$0xf]
      %v3663 = vperm.slane %v3661, 0
      %v3664 = vperm.slane %v3661, 1
      %v3665 = vperm.slane %v3661, 2
      %v3669 = vadd.f32 %v3618, %v3663
      %v3670 = vadd.f32 %v3638, %v3664
      %v3671 = vadd.f32 %v3658, %v3665
      %v3672 = vld [vmem:[%s1 + $0x55c] sm:$0xff]
      %v3673 = vld [vmem:[%s1 + $0x564] sm:$0xff]
      %vm3674 = vcmask 7168
      %v3676 = vsel %vm3674, %v3672, 0
      %v3679 = vsel %vm3674, %v3673, 0
      %vm3681 = vcmask 1040384
      %v3683 = vsel %vm3681, %v3669, 0
      %v3686 = vsel %vm3681, %v3670, 0
      %v3689 = vsel %vm3681, %v3671, 0
      %3691 = vmatpush.msra.mxu0 0.0
      %3692 = vmatpush.msra.mxu0 0.0
      %3693 = vmatpush.msra.mxu0 0.0
      %3694 = vmatpush.msra.mxu0 0.0
      %3695 = vmatpush.msra.mxu0 0.0
      %3696 = vmatpush.msra.mxu0 0.0
      %3697 = vmatpush.msra.mxu0 0.0
      %3698 = vmatpush.msra.mxu0 0.0
      %3699 = vmatpush.msra.mxu0 0.0
      %3700 = vmatpush.msra.mxu0 0.0
      %3701 = vmatpush.msra.mxu0 0.0
      %3702 = vmatpush.msra.mxu0 0.0
      %3703 = vmatpush.msra.mxu0 0.0
      %3704 = vmatpush.msra.mxu0 0.0
      %3705 = vmatpush.msra.mxu0 0.0
      %3706 = vmatpush.msra.mxu0 %v3683
      %3707 = vmatmul.f32.gmra.mxu0 %v3676
      %v3708 = vpop.f32.mrf.mxu0
      %v3709 = vadd.f32 0.0, %v3708
      %3710 = vmatmul.f32.gmra.mxu0 %v3679
      %v3711 = vpop.f32.mrf.mxu0
      %v3712 = vadd.f32 0.0, %v3711
      %3713 = vdwg.mxu0
      %3714 = vmatpush.msra.mxu0 0.0
      %3715 = vmatpush.msra.mxu0 0.0
      %3716 = vmatpush.msra.mxu0 0.0
      %3717 = vmatpush.msra.mxu0 0.0
      %3718 = vmatpush.msra.mxu0 0.0
      %3719 = vmatpush.msra.mxu0 0.0
      %3720 = vmatpush.msra.mxu0 0.0
      %3721 = vmatpush.msra.mxu0 0.0
      %3722 = vmatpush.msra.mxu0 0.0
      %3723 = vmatpush.msra.mxu0 0.0
      %3724 = vmatpush.msra.mxu0 0.0
      %3725 = vmatpush.msra.mxu0 0.0
      %3726 = vmatpush.msra.mxu0 0.0
      %3727 = vmatpush.msra.mxu0 0.0
      %3728 = vmatpush.msra.mxu0 0.0
      %3729 = vmatpush.msra.mxu0 %v3686
      %3730 = vmatmul.f32.gmra.mxu0 %v3676
      %v3731 = vpop.f32.mrf.mxu0
      %v3732 = vadd.f32 0.0, %v3731
      %3733 = vmatmul.f32.gmra.mxu0 %v3679
      %v3734 = vpop.f32.mrf.mxu0
      %v3735 = vadd.f32 0.0, %v3734
      %3736 = vdwg.mxu0
      %3737 = vmatpush.msra.mxu0 0.0
      %3738 = vmatpush.msra.mxu0 0.0
      %3739 = vmatpush.msra.mxu0 0.0
      %3740 = vmatpush.msra.mxu0 0.0
      %3741 = vmatpush.msra.mxu0 0.0
      %3742 = vmatpush.msra.mxu0 0.0
      %3743 = vmatpush.msra.mxu0 0.0
      %3744 = vmatpush.msra.mxu0 0.0
      %3745 = vmatpush.msra.mxu0 0.0
      %3746 = vmatpush.msra.mxu0 0.0
      %3747 = vmatpush.msra.mxu0 0.0
      %3748 = vmatpush.msra.mxu0 0.0
      %3749 = vmatpush.msra.mxu0 0.0
      %3750 = vmatpush.msra.mxu0 0.0
      %3751 = vmatpush.msra.mxu0 0.0
      %3752 = vmatpush.msra.mxu0 %v3689
      %3753 = vmatmul.f32.gmra.mxu0 %v3676
      %v3754 = vpop.f32.mrf.mxu0
      %v3755 = vadd.f32 0.0, %v3754
      %3756 = vmatmul.f32.gmra.mxu0 %v3679
      %v3757 = vpop.f32.mrf.mxu0
      %v3758 = vadd.f32 0.0, %v3757
      %3759 = vdwg.mxu0
      %v3769 = vrot.slane %v538, 4
      %v3770 = vrot.slane %v541, 4
      %v3771 = vsel %vm348, %v3769, %v3770
      %v3772 = vrot.slane %v539, 4
      %v3773 = vrot.slane %v542, 4
      %v3774 = vsel %vm348, %v3772, %v3773
      %v3775 = vrot.slane %v540, 4
      %v3776 = vrot.slane %v543, 4
      %v3777 = vsel %vm348, %v3775, %v3776
      %v3778 = vrot.slane %v544, 4
      %v3779 = vsel %vm348, %v3770, %v3778
      %v3780 = vrot.slane %v545, 4
      %v3781 = vsel %vm348, %v3773, %v3780
      %v3782 = vrot.slane %v546, 4
      %v3783 = vsel %vm348, %v3776, %v3782
      %v3790 = vmul.f32 %v3709, %v3771
      %v3791 = vmul.f32 %v3732, %v3774
      %v3792 = vmul.f32 %v3755, %v3777
      %v3793 = vmul.f32 %v3712, %v3779
      %v3794 = vmul.f32 %v3735, %v3781
      %v3795 = vmul.f32 %v3758, %v3783
      %v3796 = vld [vmem:[%s1 + $0x56d] sm:$0xff]
      %v3797 = vld [vmem:[%s1 + $0x575] sm:$0xff]
      %v3798 = vld [vmem:[%s1 + $0x57d] sm:$0xff]
      %v3799 = vld [vmem:[%s1 + $0x585] sm:$0xff]
      %v3800 = vld [vmem:[%s1 + $0x58d] sm:$0xff]
      %v3801 = vld [vmem:[%s1 + $0x595] sm:$0xff]
      %v3802 = vld [vmem:[%s1 + $0x59d] sm:$0xff]
      %v3803 = vld [vmem:[%s1 + $0x5a5] sm:$0xff]
      %v3804 = vld [vmem:[%s1 + $0x5ad] sm:$0xff]
      %v3805 = vld [vmem:[%s1 + $0x5b5] sm:$0xff]
      %v3806 = vld [vmem:[%s1 + $0x5bd] sm:$0xff]
      %v3807 = vld [vmem:[%s1 + $0x5c5] sm:$0xff]
      %v3808 = vld [vmem:[%s1 + $0x5cd] sm:$0xff]
      %v3809 = vld [vmem:[%s1 + $0x5d5] sm:$0xff]
      %v3810 = vld [vmem:[%s1 + $0x5dd] sm:$0xff]
      %v3811 = vld [vmem:[%s1 + $0x5e5] sm:$0xff]
      %v3812 = vld [vmem:[%s1 + $0x5ed] sm:$0xff]
      %v3813 = vld [vmem:[%s1 + $0x5f5] sm:$0xff]
      %v3814 = vld [vmem:[%s1 + $0x5fd] sm:$0xff]
      %v3815 = vld [vmem:[%s1 + $0x605] sm:$0xff]
      %v3816 = vld [vmem:[%s1 + $0x60d] sm:$0xff]
      %v3817 = vld [vmem:[%s1 + $0x615] sm:$0xff]
      %v3818 = vld [vmem:[%s1 + $0x61d] sm:$0xff]
      %v3819 = vld [vmem:[%s1 + $0x625] sm:$0xff]
      %v3820 = vld [vmem:[%s1 + $0x62d] sm:$0xff]
      %v3821 = vld [vmem:[%s1 + $0x635] sm:$0xff]
      %v3822 = vld [vmem:[%s1 + $0x63d] sm:$0xff]
      %v3823 = vld [vmem:[%s1 + $0x645] sm:$0xff]
      %v3824 = vld [vmem:[%s1 + $0x64d] sm:$0xff]
      %v3825 = vld [vmem:[%s1 + $0x655] sm:$0xff]
      %v3826 = vld [vmem:[%s1 + $0x65d] sm:$0xff]
      %v3827 = vld [vmem:[%s1 + $0x665] sm:$0xff]
      %v3828 = vld [vmem:[%s1 + $0x66d] sm:$0xf]
      %v3830 = vsel %vm828, %v3792, 0
      %v3833 = vsel %vm828, %v3795, 0
      %v3836 = vsel %vm348, %v3828, 0
      %3838 = vmatpush.msra.mxu0 %v3811
      %3839 = vmatpush.msra.mxu0 %v3810
      %3840 = vmatpush.msra.mxu0 %v3809
      %3841 = vmatpush.msra.mxu0 %v3808
      %3842 = vmatpush.msra.mxu0 %v3807
      %3843 = vmatpush.msra.mxu0 %v3806
      %3844 = vmatpush.msra.mxu0 %v3805
      %3845 = vmatpush.msra.mxu0 %v3804
      %3846 = vmatpush.msra.mxu0 %v3803
      %3847 = vmatpush.msra.mxu0 %v3802
      %3848 = vmatpush.msra.mxu0 %v3801
      %3849 = vmatpush.msra.mxu0 %v3800
      %3850 = vmatpush.msra.mxu0 %v3799
      %3851 = vmatpush.msra.mxu0 %v3798
      %3852 = vmatpush.msra.mxu0 %v3797
      %3853 = vmatpush.msra.mxu0 %v3796
      %3854 = vmatmul.f32.gmra.mxu0 %v3790
      %v3855 = vpop.f32.mrf.mxu0
      %v3856 = vadd.f32 0.0, %v3855
      %3857 = vmatmul.f32.gmra.mxu0 %v3793
      %v3858 = vpop.f32.mrf.mxu0
      %v3859 = vadd.f32 0.0, %v3858
      %3860 = vdwg.mxu0
      %3861 = vmatpush.msra.mxu0 %v3827
      %3862 = vmatpush.msra.mxu0 %v3826
      %3863 = vmatpush.msra.mxu0 %v3825
      %3864 = vmatpush.msra.mxu0 %v3824
      %3865 = vmatpush.msra.mxu0 %v3823
      %3866 = vmatpush.msra.mxu0 %v3822
      %3867 = vmatpush.msra.mxu0 %v3821
      %3868 = vmatpush.msra.mxu0 %v3820
      %3869 = vmatpush.msra.mxu0 %v3819
      %3870 = vmatpush.msra.mxu0 %v3818
      %3871 = vmatpush.msra.mxu0 %v3817
      %3872 = vmatpush.msra.mxu0 %v3816
      %3873 = vmatpush.msra.mxu0 %v3815
      %3874 = vmatpush.msra.mxu0 %v3814
      %3875 = vmatpush.msra.mxu0 %v3813
      %3876 = vmatpush.msra.mxu0 %v3812
      %3877 = vmatmul.f32.gmra.mxu0 %v3791
      %v3878 = vpop.f32.mrf.mxu0
      %v3879 = vadd.f32 %v3856, %v3878
      %3880 = vmatmul.f32.gmra.mxu0 %v3794
      %v3881 = vpop.f32.mrf.mxu0
      %v3882 = vadd.f32 %v3859, %v3881
      %3883 = vdwg.mxu0
      %3884 = vmatpush.msra.mxu0 0.0
      %3885 = vmatpush.msra.mxu0 0.0
      %3886 = vmatpush.msra.mxu0 0.0
      %3887 = vmatpush.msra.mxu0 0.0
      %3888 = vmatpush.msra.mxu0 0.0
      %3889 = vmatpush.msra.mxu0 0.0
      %3890 = vmatpush.msra.mxu0 0.0
      %3891 = vmatpush.msra.mxu0 0.0
      %3892 = vmatpush.msra.mxu0 0.0
      %3893 = vmatpush.msra.mxu0 0.0
      %3894 = vmatpush.msra.mxu0 0.0
      %3895 = vmatpush.msra.mxu0 0.0
      %3896 = vmatpush.msra.mxu0 0.0
      %3897 = vmatpush.msra.mxu0 0.0
      %3898 = vmatpush.msra.mxu0 0.0
      %3899 = vmatpush.msra.mxu0 %v3836
      %3900 = vmatmul.f32.gmra.mxu0 %v3830
      %v3901 = vpop.f32.mrf.mxu0
      %v3902 = vadd.f32 %v3879, %v3901
      %3903 = vmatmul.f32.gmra.mxu0 %v3833
      %v3904 = vpop.f32.mrf.mxu0
      %v3905 = vadd.f32 %v3882, %v3904
      %3906 = vdwg.mxu0
      %v3907 = vld [vmem:[%s1 + $0x54c] sm:$0xff]
      %v3908 = vld [vmem:[%s1 + $0x554] sm:$0xff]
      %v3910 = vsel %vm305, %v3907, 0
      %v3913 = vsel %vm305, %v3908, 0
      %3915 = vmatpush.msra.mxu0 0.0
      %3916 = vmatpush.msra.mxu0 0.0
      %3917 = vmatpush.msra.mxu0 0.0
      %3918 = vmatpush.msra.mxu0 0.0
      %3919 = vmatpush.msra.mxu0 0.0
      %3920 = vmatpush.msra.mxu0 0.0
      %3921 = vmatpush.msra.mxu0 0.0
      %3922 = vmatpush.msra.mxu0 0.0
      %3923 = vmatpush.msra.mxu0 0.0
      %3924 = vmatpush.msra.mxu0 0.0
      %3925 = vmatpush.msra.mxu0 0.0
      %3926 = vmatpush.msra.mxu0 0.0
      %3927 = vmatpush.msra.mxu0 0.0
      %3928 = vmatpush.msra.mxu0 0.0
      %3929 = vmatpush.msra.mxu0 %v3905
      %3930 = vmatpush.msra.mxu0 %v3902
      %3931 = vmatmul.f32.gmra.mxu0 %v3910
      %v3932 = vpop.f32.mrf.mxu0
      %v3933 = vadd.f32 0.0, %v3932
      %3934 = vmatmul.f32.gmra.mxu0 %v3913
      %v3935 = vpop.f32.mrf.mxu0
      %v3936 = vadd.f32 0.0, %v3935
      %3937 = vdwg.mxu0
      %v3938 = vld [vmem:[%s1 + $0x513] sm:$0xff]
      %v3939 = vld [vmem:[%s1 + $0x51b] sm:$0xff]
      %v3940 = vld [vmem:[%s1 + $0x523] sm:$0xf]
      %v3941 = vld [vmem:[%s1 + $0x527] sm:$0xff]
      %v3942 = vld [vmem:[%s1 + $0x52f] sm:$0xff]
      %v3943 = vld [vmem:[%s1 + $0x537] sm:$0xf]
      %v3945 = vsel %vm341, %v3933, 0
      %v3948 = vsel %vm341, %v3936, 0
      %v3951 = vsel %vm348, %v3943, 0
      %3953 = vmatpush.msra.mxu0 0.0
      %3954 = vmatpush.msra.mxu0 0.0
      %3955 = vmatpush.msra.mxu0 0.0
      %3956 = vmatpush.msra.mxu0 0.0
      %3957 = vmatpush.msra.mxu0 0.0
      %3958 = vmatpush.msra.mxu0 0.0
      %3959 = vmatpush.msra.mxu0 0.0
      %3960 = vmatpush.msra.mxu0 0.0
      %3961 = vmatpush.msra.mxu0 0.0
      %3962 = vmatpush.msra.mxu0 0.0
      %3963 = vmatpush.msra.mxu0 0.0
      %3964 = vmatpush.msra.mxu0 0.0
      %3965 = vmatpush.msra.mxu0 0.0
      %3966 = vmatpush.msra.mxu0 %v3951
      %3967 = vmatpush.msra.mxu0 %v3942
      %3968 = vmatpush.msra.mxu0 %v3941
      %3969 = vmatmul.f32.gmra.mxu0 %v3945
      %v3970 = vpop.f32.mrf.mxu0
      %v3971 = vadd.f32 0.0, %v3970
      %3972 = vmatmul.f32.gmra.mxu0 %v3948
      %v3973 = vpop.f32.mrf.mxu0
      %v3974 = vadd.f32 0.0, %v3973
      %3975 = vdwg.mxu0
      %v3977 = vsel %vm341, %v3902, 0
      %v3980 = vsel %vm341, %v3905, 0
      %v3983 = vsel %vm348, %v3940, 0
      %3985 = vmatpush.msra.mxu0 0.0
      %3986 = vmatpush.msra.mxu0 0.0
      %3987 = vmatpush.msra.mxu0 0.0
      %3988 = vmatpush.msra.mxu0 0.0
      %3989 = vmatpush.msra.mxu0 0.0
      %3990 = vmatpush.msra.mxu0 0.0
      %3991 = vmatpush.msra.mxu0 0.0
      %3992 = vmatpush.msra.mxu0 0.0
      %3993 = vmatpush.msra.mxu0 0.0
      %3994 = vmatpush.msra.mxu0 0.0
      %3995 = vmatpush.msra.mxu0 0.0
      %3996 = vmatpush.msra.mxu0 0.0
      %3997 = vmatpush.msra.mxu0 0.0
      %3998 = vmatpush.msra.mxu0 %v3983
      %3999 = vmatpush.msra.mxu0 %v3939
      %4000 = vmatpush.msra.mxu0 %v3938
      %4001 = vmatmul.f32.gmra.mxu0 %v3977
      %v4002 = vpop.f32.mrf.mxu0
      %v4003 = vadd.f32 %v3971, %v4002
      %4004 = vmatmul.f32.gmra.mxu0 %v3980
      %v4005 = vpop.f32.mrf.mxu0
      %v4006 = vadd.f32 %v3974, %v4005
      %4007 = vdwg.mxu0
      %v4008 = vld [vmem:[%s1 + $0x53b] sm:$0x1]
      %v4009 = vperm.slane %v4008, 0
      %v4010 = vadd.f32 %v4003, %v4009
      %v4011 = vadd.f32 %v4006, %v4009
      %v4012 = vmax.f32 %v4010, 0.0
      %v4013 = vmax.f32 %v4011, 0.0
      %4014 = vmatpush.msra.mxu0 0.0
      %4015 = vmatpush.msra.mxu0 0.0
      %4016 = vmatpush.msra.mxu0 0.0
      %4017 = vmatpush.msra.mxu0 0.0
      %4018 = vmatpush.msra.mxu0 0.0
      %4019 = vmatpush.msra.mxu0 0.0
      %4020 = vmatpush.msra.mxu0 0.0
      %4021 = vmatpush.msra.mxu0 0.0
      %4022 = vmatpush.msra.mxu0 0.0
      %4023 = vmatpush.msra.mxu0 0.0
      %4024 = vmatpush.msra.mxu0 0.0
      %4025 = vmatpush.msra.mxu0 0.0
      %4026 = vmatpush.msra.mxu0 0.0
      %4027 = vmatpush.msra.mxu0 0.0
      %4028 = vmatpush.msra.mxu0 %v4013
      %4029 = vmatpush.msra.mxu0 %v4012
      %4030 = vmatmul.f32.gmra.mxu0 %v3910
      %v4031 = vpop.f32.mrf.mxu0
      %v4032 = vadd.f32 0.0, %v4031
      %4033 = vmatmul.f32.gmra.mxu0 %v3913
      %v4034 = vpop.f32.mrf.mxu0
      %v4035 = vadd.f32 0.0, %v4034
      %4036 = vdwg.mxu0
      %v4037 = vld [vmem:[%s2 + $0x140] sm:$0xf8]
      %v4038 = vld [vmem:[%s2 + $0x148] sm:$0xf8]
      %v4039 = vld [vmem:[%s2 + $0x150] sm:$0xf8]
      %v4040 = vld [vmem:[%s2 + $0x160] sm:$0xff]
      %v4041 = vld [vmem:[%s2 + $0x168] sm:$0xff]
      %v4042 = vld [vmem:[%s2 + $0x170] sm:$0xff]
      %v4043 = vld [vmem:[%s2 + $0x180] sm:$0xff]
      %v4044 = vld [vmem:[%s2 + $0x188] sm:$0xff]
      %v4045 = vld [vmem:[%s2 + $0x190] sm:$0xff]
      %v4046 = vld [vmem:[%s2 + $0x1a0] sm:$0xff]
      %v4047 = vld [vmem:[%s2 + $0x1a8] sm:$0xff]
      %v4048 = vld [vmem:[%s2 + $0x1b0] sm:$0xff]
      %v4049 = vld [vmem:[%s2 + $0x1c0] sm:$0xff]
      %v4050 = vld [vmem:[%s2 + $0x1c8] sm:$0xff]
      %v4051 = vld [vmem:[%s2 + $0x1d0] sm:$0xff]
      %v4052 = vld [vmem:[%s2 + $0x1e0] sm:$0x7]
      %v4053 = vld [vmem:[%s2 + $0x1e8] sm:$0x7]
      %v4054 = vld [vmem:[%s2 + $0x1f0] sm:$0x7]
      %v4055 = vld [vmem:[%s2 + $0x1e0] sm:$0xf8]
      %v4056 = vld [vmem:[%s2 + $0x1e8] sm:$0xf8]
      %v4057 = vld [vmem:[%s2 + $0x1f0] sm:$0xf8]
      %v4058 = vld [vmem:[%s2 + $0x200] sm:$0xff]
      %v4059 = vld [vmem:[%s2 + $0x208] sm:$0xff]
      %v4060 = vld [vmem:[%s2 + $0x210] sm:$0xff]
      %v4061 = vld [vmem:[%s2 + $0x220] sm:$0xff]
      %v4062 = vld [vmem:[%s2 + $0x228] sm:$0xff]
      %v4063 = vld [vmem:[%s2 + $0x230] sm:$0xff]
      %v4064 = vld [vmem:[%s2 + $0x240] sm:$0xff]
      %v4065 = vld [vmem:[%s2 + $0x248] sm:$0xff]
      %v4066 = vld [vmem:[%s2 + $0x250] sm:$0xff]
      %v4067 = vld [vmem:[%s2 + $0x260] sm:$0xff]
      %v4068 = vld [vmem:[%s2 + $0x268] sm:$0xff]
      %v4069 = vld [vmem:[%s2 + $0x270] sm:$0xff]
      %v4070 = vld [vmem:[%s2 + $0x280] sm:$0x7]
      %v4071 = vld [vmem:[%s2 + $0x288] sm:$0x7]
      %v4072 = vld [vmem:[%s2 + $0x290] sm:$0x7]
      %vm4091 = vcmask 1044480
      %v4092 = vrot.slane %v4055, 3
      %v4093 = vrot.slane %v4058, 3
      %v4094 = vsel %vm4091, %v4092, %v4093
      %v4095 = vrot.slane %v4056, 3
      %v4096 = vrot.slane %v4059, 3
      %v4097 = vsel %vm4091, %v4095, %v4096
      %v4098 = vrot.slane %v4057, 3
      %v4099 = vrot.slane %v4060, 3
      %v4100 = vsel %vm4091, %v4098, %v4099
      %v4101 = vrot.slane %v4061, 3
      %v4102 = vsel %vm4091, %v4093, %v4101
      %v4103 = vrot.slane %v4062, 3
      %v4104 = vsel %vm4091, %v4096, %v4103
      %v4105 = vrot.slane %v4063, 3
      %v4106 = vsel %vm4091, %v4099, %v4105
      %v4107 = vrot.slane %v4064, 3
      %v4108 = vsel %vm4091, %v4101, %v4107
      %v4109 = vrot.slane %v4065, 3
      %v4110 = vsel %vm4091, %v4103, %v4109
      %v4111 = vrot.slane %v4066, 3
      %v4112 = vsel %vm4091, %v4105, %v4111
      %v4113 = vrot.slane %v4067, 3
      %v4114 = vsel %vm4091, %v4107, %v4113
      %v4115 = vrot.slane %v4068, 3
      %v4116 = vsel %vm4091, %v4109, %v4115
      %v4117 = vrot.slane %v4069, 3
      %v4118 = vsel %vm4091, %v4111, %v4117
      %v4119 = vrot.slane %v4070, 3
      %v4120 = vsel %vm4091, %v4113, %v4119
      %v4121 = vrot.slane %v4071, 3
      %v4122 = vsel %vm4091, %v4115, %v4121
      %v4123 = vrot.slane %v4072, 3
      %v4124 = vsel %vm4091, %v4117, %v4123
      %vm4140 = vcmask 326656
      %v4142 = vsel %vm4140, %v4032, 0
      %v4145 = vsel %vm4140, %v4035, 0
      %4147 = vmatpush.msra.mxu0 0.0
      %4148 = vmatpush.msra.mxu0 0.0
      %4149 = vmatpush.msra.mxu0 0.0
      %4150 = vmatpush.msra.mxu0 0.0
      %4151 = vmatpush.msra.mxu0 0.0
      %4152 = vmatpush.msra.mxu0 0.0
      %4153 = vmatpush.msra.mxu0 0.0
      %4154 = vmatpush.msra.mxu0 0.0
      %4155 = vmatpush.msra.mxu0 0.0
      %4156 = vmatpush.msra.mxu0 0.0
      %4157 = vmatpush.msra.mxu0 0.0
      %4158 = vmatpush.msra.mxu0 %v4120
      %4159 = vmatpush.msra.mxu0 %v4114
      %4160 = vmatpush.msra.mxu0 %v4108
      %4161 = vmatpush.msra.mxu0 %v4102
      %4162 = vmatpush.msra.mxu0 %v4094
      %4163 = vmatmul.f32.gmra.mxu0 %v4142
      %v4164 = vpop.f32.mrf.mxu0
      %v4165 = vadd.f32 0.0, %v4164
      %4166 = vmatmul.f32.gmra.mxu0 %v4145
      %v4167 = vpop.f32.mrf.mxu0
      %v4168 = vadd.f32 0.0, %v4167
      %4169 = vdwg.mxu0
      %4170 = vmatpush.msra.mxu0 0.0
      %4171 = vmatpush.msra.mxu0 0.0
      %4172 = vmatpush.msra.mxu0 0.0
      %4173 = vmatpush.msra.mxu0 0.0
      %4174 = vmatpush.msra.mxu0 0.0
      %4175 = vmatpush.msra.mxu0 0.0
      %4176 = vmatpush.msra.mxu0 0.0
      %4177 = vmatpush.msra.mxu0 0.0
      %4178 = vmatpush.msra.mxu0 0.0
      %4179 = vmatpush.msra.mxu0 0.0
      %4180 = vmatpush.msra.mxu0 0.0
      %4181 = vmatpush.msra.mxu0 %v4122
      %4182 = vmatpush.msra.mxu0 %v4116
      %4183 = vmatpush.msra.mxu0 %v4110
      %4184 = vmatpush.msra.mxu0 %v4104
      %4185 = vmatpush.msra.mxu0 %v4097
      %4186 = vmatmul.f32.gmra.mxu0 %v4142
      %v4187 = vpop.f32.mrf.mxu0
      %v4188 = vadd.f32 0.0, %v4187
      %4189 = vmatmul.f32.gmra.mxu0 %v4145
      %v4190 = vpop.f32.mrf.mxu0
      %v4191 = vadd.f32 0.0, %v4190
      %4192 = vdwg.mxu0
      %4193 = vmatpush.msra.mxu0 0.0
      %4194 = vmatpush.msra.mxu0 0.0
      %4195 = vmatpush.msra.mxu0 0.0
      %4196 = vmatpush.msra.mxu0 0.0
      %4197 = vmatpush.msra.mxu0 0.0
      %4198 = vmatpush.msra.mxu0 0.0
      %4199 = vmatpush.msra.mxu0 0.0
      %4200 = vmatpush.msra.mxu0 0.0
      %4201 = vmatpush.msra.mxu0 0.0
      %4202 = vmatpush.msra.mxu0 0.0
      %4203 = vmatpush.msra.mxu0 0.0
      %4204 = vmatpush.msra.mxu0 %v4124
      %4205 = vmatpush.msra.mxu0 %v4118
      %4206 = vmatpush.msra.mxu0 %v4112
      %4207 = vmatpush.msra.mxu0 %v4106
      %4208 = vmatpush.msra.mxu0 %v4100
      %4209 = vmatmul.f32.gmra.mxu0 %v4142
      %v4210 = vpop.f32.mrf.mxu0
      %v4211 = vadd.f32 0.0, %v4210
      %4212 = vmatmul.f32.gmra.mxu0 %v4145
      %v4213 = vpop.f32.mrf.mxu0
      %v4214 = vadd.f32 0.0, %v4213
      %4215 = vdwg.mxu0
      %v4234 = vrot.slane %v4037, 3
      %v4235 = vrot.slane %v4040, 3
      %v4236 = vsel %vm4091, %v4234, %v4235
      %v4237 = vrot.slane %v4038, 3
      %v4238 = vrot.slane %v4041, 3
      %v4239 = vsel %vm4091, %v4237, %v4238
      %v4240 = vrot.slane %v4039, 3
      %v4241 = vrot.slane %v4042, 3
      %v4242 = vsel %vm4091, %v4240, %v4241
      %v4243 = vrot.slane %v4043, 3
      %v4244 = vsel %vm4091, %v4235, %v4243
      %v4245 = vrot.slane %v4044, 3
      %v4246 = vsel %vm4091, %v4238, %v4245
      %v4247 = vrot.slane %v4045, 3
      %v4248 = vsel %vm4091, %v4241, %v4247
      %v4249 = vrot.slane %v4046, 3
      %v4250 = vsel %vm4091, %v4243, %v4249
      %v4251 = vrot.slane %v4047, 3
      %v4252 = vsel %vm4091, %v4245, %v4251
      %v4253 = vrot.slane %v4048, 3
      %v4254 = vsel %vm4091, %v4247, %v4253
      %v4255 = vrot.slane %v4049, 3
      %v4256 = vsel %vm4091, %v4249, %v4255
      %v4257 = vrot.slane %v4050, 3
      %v4258 = vsel %vm4091, %v4251, %v4257
      %v4259 = vrot.slane %v4051, 3
      %v4260 = vsel %vm4091, %v4253, %v4259
      %v4261 = vrot.slane %v4052, 3
      %v4262 = vsel %vm4091, %v4255, %v4261
      %v4263 = vrot.slane %v4053, 3
      %v4264 = vsel %vm4091, %v4257, %v4263
      %v4265 = vrot.slane %v4054, 3
      %v4266 = vsel %vm4091, %v4259, %v4265
      %v4283 = vsel %vm4140, %v4012, 0
      %v4286 = vsel %vm4140, %v4013, 0
      %4288 = vmatpush.msra.mxu0 0.0
      %4289 = vmatpush.msra.mxu0 0.0
      %4290 = vmatpush.msra.mxu0 0.0
      %4291 = vmatpush.msra.mxu0 0.0
      %4292 = vmatpush.msra.mxu0 0.0
      %4293 = vmatpush.msra.mxu0 0.0
      %4294 = vmatpush.msra.mxu0 0.0
      %4295 = vmatpush.msra.mxu0 0.0
      %4296 = vmatpush.msra.mxu0 0.0
      %4297 = vmatpush.msra.mxu0 0.0
      %4298 = vmatpush.msra.mxu0 0.0
      %4299 = vmatpush.msra.mxu0 %v4262
      %4300 = vmatpush.msra.mxu0 %v4256
      %4301 = vmatpush.msra.mxu0 %v4250
      %4302 = vmatpush.msra.mxu0 %v4244
      %4303 = vmatpush.msra.mxu0 %v4236
      %4304 = vmatmul.f32.gmra.mxu0 %v4283
      %v4305 = vpop.f32.mrf.mxu0
      %v4306 = vadd.f32 %v4165, %v4305
      %4307 = vmatmul.f32.gmra.mxu0 %v4286
      %v4308 = vpop.f32.mrf.mxu0
      %v4309 = vadd.f32 %v4168, %v4308
      %4310 = vdwg.mxu0
      %4311 = vmatpush.msra.mxu0 0.0
      %4312 = vmatpush.msra.mxu0 0.0
      %4313 = vmatpush.msra.mxu0 0.0
      %4314 = vmatpush.msra.mxu0 0.0
      %4315 = vmatpush.msra.mxu0 0.0
      %4316 = vmatpush.msra.mxu0 0.0
      %4317 = vmatpush.msra.mxu0 0.0
      %4318 = vmatpush.msra.mxu0 0.0
      %4319 = vmatpush.msra.mxu0 0.0
      %4320 = vmatpush.msra.mxu0 0.0
      %4321 = vmatpush.msra.mxu0 0.0
      %4322 = vmatpush.msra.mxu0 %v4264
      %4323 = vmatpush.msra.mxu0 %v4258
      %4324 = vmatpush.msra.mxu0 %v4252
      %4325 = vmatpush.msra.mxu0 %v4246
      %4326 = vmatpush.msra.mxu0 %v4239
      %4327 = vmatmul.f32.gmra.mxu0 %v4283
      %v4328 = vpop.f32.mrf.mxu0
      %v4329 = vadd.f32 %v4188, %v4328
      %4330 = vmatmul.f32.gmra.mxu0 %v4286
      %v4331 = vpop.f32.mrf.mxu0
      %v4332 = vadd.f32 %v4191, %v4331
      %4333 = vdwg.mxu0
      %4334 = vmatpush.msra.mxu0 0.0
      %4335 = vmatpush.msra.mxu0 0.0
      %4336 = vmatpush.msra.mxu0 0.0
      %4337 = vmatpush.msra.mxu0 0.0
      %4338 = vmatpush.msra.mxu0 0.0
      %4339 = vmatpush.msra.mxu0 0.0
      %4340 = vmatpush.msra.mxu0 0.0
      %4341 = vmatpush.msra.mxu0 0.0
      %4342 = vmatpush.msra.mxu0 0.0
      %4343 = vmatpush.msra.mxu0 0.0
      %4344 = vmatpush.msra.mxu0 0.0
      %4345 = vmatpush.msra.mxu0 %v4266
      %4346 = vmatpush.msra.mxu0 %v4260
      %4347 = vmatpush.msra.mxu0 %v4254
      %4348 = vmatpush.msra.mxu0 %v4248
      %4349 = vmatpush.msra.mxu0 %v4242
      %4350 = vmatmul.f32.gmra.mxu0 %v4283
      %v4351 = vpop.f32.mrf.mxu0
      %v4352 = vadd.f32 %v4211, %v4351
      %4353 = vmatmul.f32.gmra.mxu0 %v4286
      %v4354 = vpop.f32.mrf.mxu0
      %v4355 = vadd.f32 %v4214, %v4354
      %4356 = vdwg.mxu0
      %s4357 = scalar_lea.vmem %s2, 643
      %v4358 = vld [vmem:[%s4357] ss:$8 sm:$0xf]
      %v4360 = vperm.slane %v4358, 0
      %v4361 = vperm.slane %v4358, 1
      %v4362 = vperm.slane %v4358, 2
      %v4366 = vadd.f32 %v4306, %v4360
      %v4367 = vadd.f32 %v4329, %v4361
      %v4368 = vadd.f32 %v4352, %v4362
      %v4369 = vadd.f32 %v4309, %v4360
      %v4370 = vadd.f32 %v4332, %v4361
      %v4371 = vadd.f32 %v4355, %v4362
      %v4372 = vmax.f32 %v4366, 0.0
      %v4373 = vmax.f32 %v4367, 0.0
      %v4374 = vmax.f32 %v4368, 0.0
      %v4375 = vmax.f32 %v4369, 0.0
      %v4376 = vmax.f32 %v4370, 0.0
      %v4377 = vmax.f32 %v4371, 0.0
      %4378 = vst [vmem:[%s174] sm:$0xff] %v4372
      %4379 = vst [vmem:[%s174 + $0x8] sm:$0xff] %v4373
      %4380 = vst [vmem:[%s174 + $0x10] sm:$0xff] %v4374
      %4381 = vst [vmem:[%s174 + $0x18] sm:$0xff] %v4375
      %4382 = vst [vmem:[%s174 + $0x20] sm:$0xff] %v4376
      %4383 = vst [vmem:[%s174 + $0x28] sm:$0xff] %v4377
      %s4384 = smul.u32 2, %s14
      %p4385 = scmp.lt.s32.totalorder %s4384, 3
      %s4386 = scalar_select %p4385, %s4384, 3
      %s4387 = smul.addr %s4386, 3
      %s4388 = smul.addr %s4387, 8
      %s4389 = scalar_lea.vmem %s3, %s4388
      // Predicated region
      $region33: #{mamba_forward.1} parent=31 // pred_check
        %p4390 = pneg %p100
      $region34: #{mamba_forward.1} parent=31 // pred_check_branch
        %4392 = sbr.rel (%p4390) target = $region36
      $region35: #{mamba_forward.1} parent=31 // pred_region
        %s4393 = smul.u32 2, %s14
      $region36: #{mamba_forward.1} parent=31 // pred_fallthru
        _
    $region32: #{mamba_forward.1} parent=5 // pred_fallthru
      _
    %p4394 = scmp.le.s32.totalorder 2, %s9
    // Predicated region
    $region37: #{mamba_forward.1} parent=5 // pred_check
      %p4395 = pneg %p4394
    $region38: #{mamba_forward.1} parent=5 // pred_check_branch
      %4397 = sbr.rel (%p4395) target = $region40
    $region39: #{mamba_forward.1} parent=5 // pred_region
      %s4398 = ssub.s32 %s9, 2
      // Predicated region
      $region41: #{mamba_forward.1} parent=39 // pred_check
        %p4399 = pneg %p106
      $region42: #{mamba_forward.1} parent=39 // pred_check_branch
        %4401 = sbr.rel (%p4399) target = $region44
      $region43: #{mamba_forward.1} parent=39 // pred_region
        %s4402 = smul.u32 2, %s15
        %p4403 = scmp.lt.s32.totalorder %s4402, 3
        %s4404 = scalar_select %p4403, %s4402, 3
        %s4405 = smul.addr %s4404, 3
        %s4406 = smul.addr %s4405, 8
        %s4407 = scalar_lea.vmem %s3, %s4406
      $region44: #{mamba_forward.1} parent=39 // pred_fallthru
        _
    $region40: #{mamba_forward.1} parent=5 // pred_fallthru
      _
  $region6: #{mamba_forward.1} parent=0 // loop_footer
    %s13 = sadd.s32 1, %s9
  $region7: #{mamba_forward.1} parent=0 // loop_footer_branch
    %8 = sbr.rel target = $region3
  $region8: #{mamba_forward.1} parent=0 // loop_exit
    _

</llo_original>
